<compile_context>
chip_gen: v5e
topology: v5e:2x2
jax: 0.10.0
libtpu: 0.0.40
codegen_flags: <defaults>
</compile_context>

<pallas_src>
import functools

import jax
import jax.numpy as jnp
import numpy as np
from jax import lax
from jax.experimental import pallas as pl
from jax.experimental.pallas import tpu as pltpu


def mha_kernel(x_ref, wqkv_ref, wp_ref, bp_ref, o_ref, *, num_heads, head_size):
    """One grid step: full multi-head causal attention for a (bb, T, C) slab.

    x_ref:    (bb, T, C)    f32
    wqkv_ref: (C, 3*C)      bf16   fused, pre-transposed QKV weight (scale folded into Wq)
    wp_ref:   (C, C)        bf16   pre-transposed projection weight (rows grouped by head)
    bp_ref:   (1, C)        f32    projection bias
    o_ref:    (bb, T, C)    f32
    """
    bb, T, C = x_ref.shape

    # Fused QKV matmul over the whole (bb*T, C) slab (bf16 operands, f32 accumulation).
    x = x_ref[...].reshape(bb * T, C).astype(jnp.bfloat16)
    qkv = jnp.dot(x, wqkv_ref[...],
                  preferred_element_type=jnp.float32).astype(jnp.bfloat16)   # (bb*T, 3C)

    # Causal mask built once (hoisted out of all loops).
    row = lax.broadcasted_iota(jnp.int32, (T, T), 0)
    col = lax.broadcasted_iota(jnp.int32, (T, T), 1)
    causal = col <= row
    bias = bp_ref[...]                                                        # (1, C) f32

    for b in range(bb):                                    # static unroll, bb small
        rows = slice(b * T, (b + 1) * T)
        q_b = qkv[rows, 0:C]                               # (T, C) bf16, 128-aligned slices
        k_b = qkv[rows, C:2 * C]
        v_b = qkv[rows, 2 * C:3 * C]

        acc = jnp.zeros((T, C), jnp.float32)               # per-head projection accumulator
        for h in range(num_heads):                         # static unroll, H=6
            cols = slice(h * head_size, (h + 1) * head_size)   # 64-lane-offset slice (tiny)
            q_h = q_b[:, cols]                              # (T, hs) — Wq already carries scale
            k_h = k_b[:, cols]
            v_h = v_b[:, cols]

            # scores: contract over head dim; K-transpose fused into the MXU dot.
            s = lax.dot_general(q_h, k_h, (((1,), (1,)), ((), ())),
                                preferred_element_type=jnp.float32)           # (T, T) f32
            s = jnp.where(causal, s, -jnp.inf)
            # softmax in f32 (diagonal always unmasked -> row max finite, no NaN)
            s = s - jnp.max(s, axis=-1, keepdims=True)
            p = jnp.exp(s)
            p = p * pl.reciprocal(jnp.sum(p, axis=-1, keepdims=True), approx=True)

            out_h = jnp.dot(p.astype(jnp.bfloat16), v_h,
                            preferred_element_type=jnp.float32)               # (T, hs)
            # Per-head slice of the projection: accumulate instead of concat+one-big-matmul.
            acc = acc + jnp.dot(out_h.astype(jnp.bfloat16),
                                wp_ref[h * head_size:(h + 1) * head_size, :],
                                preferred_element_type=jnp.float32)           # (T, C)

        o_ref[b] = (acc + bias).astype(o_ref.dtype)        # lane-dense store (C = 384)


def multi_head_attention(x, wq, wk, wv, wp, bp, *, batch_block=None):
    """x: (B, T, C); wq/wk/wv: (H, hs, C) (nn.Linear layout: (out, in)); wp: (C, C); bp: (C,).

    batch_block: batch rows per grid step.  Default = B (single grid step; best on
    single-TC v5e/v6e).  On dual-TC v7x, pass B // 2 to keep both TensorCores busy.
    """
    B, T, C = x.shape
    H, hs, _ = wq.shape
    assert H * hs == C
    if batch_block is None:
        batch_block = B
    assert B % batch_block == 0

    scale = float(C) ** (-0.5)           # module scales by embedding dim, not head_size

    def _pack(w):                        # (H, hs, C) -> (C, H*hs), pre-transposed, NO padding
        return jnp.transpose(w, (2, 0, 1)).reshape(C, H * hs)

    # Fold the softmax scale into Wq; fuse Q/K/V into a single (C, 3*C) bf16 weight.
    wqkv = jnp.concatenate([_pack(wq * scale), _pack(wk), _pack(wv)],
                           axis=1).astype(jnp.bfloat16)                       # (C, 3C)
    wp_t = wp.T.astype(jnp.bfloat16)     # (C_in = H*hs, C_out); rows grouped by head
    bp2 = bp.reshape(1, C).astype(jnp.float32)

    kernel = functools.partial(mha_kernel, num_heads=H, head_size=hs)

    grid = (B // batch_block,)
    return pl.pallas_call(
        kernel,
        out_shape=jax.ShapeDtypeStruct((B, T, C), jnp.float32),
        grid=grid,
        in_specs=[
            pl.BlockSpec((batch_block, T, C), lambda i: (i, 0, 0)),   # x
            pl.BlockSpec((C, 3 * C), lambda i: (0, 0)),               # fused QKV weight
            pl.BlockSpec((C, C), lambda i: (0, 0)),                   # projection weight
            pl.BlockSpec((1, C), lambda i: (0, 0)),                   # projection bias
        ],
        out_specs=pl.BlockSpec((batch_block, T, C), lambda i: (i, 0, 0)),
        compiler_params=pltpu.CompilerParams(
            dimension_semantics=("parallel",),
            vmem_limit_bytes=32 * 1024 * 1024,
        ),
    )(x, wqkv, wp_t, bp2)


def reference_mha(x, wq, wk, wv, wp, bp):
    """Pure-JAX f32 reference mirroring the PyTorch module (eval mode)."""
    B, T, C = x.shape
    H, hs, _ = wq.shape
    scale = C ** (-0.5)
    tril = jnp.tril(jnp.ones((T, T)))
    outs = []
    for h in range(H):
        q = x @ wq[h].T
        k = x @ wk[h].T
        v = x @ wv[h].T
        wei = (q @ jnp.swapaxes(k, -2, -1)) * scale
        wei = jnp.where(tril == 0, -jnp.inf, wei)
        wei = jax.nn.softmax(wei, axis=-1)
        outs.append(wei @ v)
    cat = jnp.concatenate(outs, axis=-1)
    return cat @ wp.T + bp


if __name__ == "__main__":
    # Small batch/sequence, but the module's real head/embedding geometry:
    # 6 heads, head_size=64, C = 384 (= number_of_embeddings).
    B, T, H, hs = 2, 32, 6, 64
    C = H * hs  # 384

    key = jax.random.PRNGKey(0)
    kx, kq, kk, kv, kp, kb = jax.random.split(key, 6)
    x = jax.random.normal(kx, (B, T, C), dtype=jnp.float32)
    wq = jax.random.normal(kq, (H, hs, C), dtype=jnp.float32) * 0.05
    wk = jax.random.normal(kk, (H, hs, C), dtype=jnp.float32) * 0.05
    wv = jax.random.normal(kv, (H, hs, C), dtype=jnp.float32) * 0.05
    wp = jax.random.normal(kp, (C, C), dtype=jnp.float32) * 0.05
    bp = jax.random.normal(kb, (C,), dtype=jnp.float32) * 0.05

    out = jax.block_until_ready(multi_head_attention(x, wq, wk, wv, wp, bp))
    ref = jax.block_until_ready(reference_mha(x, wq, wk, wv, wp, bp))

    # Kernel uses bf16 MXU operands (f32 accumulation); compare against the f32 reference
    # with a tolerance sized for bf16 rounding.
    np.testing.assert_allclose(np.asarray(out), np.asarray(ref), rtol=2e-2, atol=4e-2)

    print("KERNEL_OK")
</pallas_src>

<mosaic_0001>
module attributes {stable_mosaic.version = 11 : i64} {
  func.func @mha_kernel(%arg0: i32, %arg1: memref<2x32x384xf32, #tpu.memory_space<vmem>>, %arg2: memref<384x1152xbf16, #tpu.memory_space<vmem>>, %arg3: memref<384x384xbf16, #tpu.memory_space<vmem>>, %arg4: memref<1x384xf32, #tpu.memory_space<vmem>>, %arg5: memref<2x32x384xf32, #tpu.memory_space<vmem>>) attributes {dimension_semantics = [#tpu.dimension_semantics<parallel>], iteration_bounds = array<i64: 1>, scalar_prefetch = 0 : i64, scratch_operands = 0 : i64, tpu.core_type = #tpu.core_type<tc>, window_params = [{transform_indices = @transform_0, window_bounds = array<i64: 2, 32, 384>}, {pipeline_mode = #tpu.pipeline_mode<synchronous>, transform_indices = @transform_1, window_bounds = array<i64: 384, 1152>}, {pipeline_mode = #tpu.pipeline_mode<synchronous>, transform_indices = @transform_2, window_bounds = array<i64: 384, 384>}, {pipeline_mode = #tpu.pipeline_mode<synchronous>, transform_indices = @transform_3, window_bounds = array<i64: 1, 384>}, {transform_indices = @transform_4, window_bounds = array<i64: 2, 32, 384>}]} {
    %c0 = arith.constant 0 : index
    %c0_0 = arith.constant 0 : index
    %c0_1 = arith.constant 0 : index
    %0 = vector.load %arg1[%c0, %c0_0, %c0_1] : memref<2x32x384xf32, #tpu.memory_space<vmem>>, vector<2x32x384xf32>
    %1 = vector.shape_cast %0 : vector<2x32x384xf32> to vector<64x384xf32>
    %2 = arith.truncf %1 : vector<64x384xf32> to vector<64x384xbf16>
    %c0_2 = arith.constant 0 : index
    %c0_3 = arith.constant 0 : index
    %3 = vector.load %arg2[%c0_2, %c0_3] : memref<384x1152xbf16, #tpu.memory_space<vmem>>, vector<384x1152xbf16>
    %cst = arith.constant dense<0.000000e+00> : vector<64x1152xf32>
    %4 = tpu.matmul %2, %3, %cst {dimension_numbers = #tpu.dot_dimension_numbers<[1], [0], [0], [1], [0, 0, 1, 1], [], []>} : vector<64x384xbf16>, vector<384x1152xbf16>, vector<64x1152xf32> -> vector<64x1152xf32>
    %5 = arith.truncf %4 : vector<64x1152xf32> to vector<64x1152xbf16>
    %6 = tpu.iota {dimensions = array<i32: 0>} : vector<32x32xi32>
    %7 = tpu.iota {dimensions = array<i32: 1>} : vector<32x32xi32>
    %8 = arith.cmpi sle, %7, %6 : vector<32x32xi32>
    %c0_4 = arith.constant 0 : index
    %c0_5 = arith.constant 0 : index
    %9 = vector.load %arg4[%c0_4, %c0_5] : memref<1x384xf32, #tpu.memory_space<vmem>>, vector<1x384xf32>
    %10 = vector.extract_strided_slice %5 {offsets = [0, 0], sizes = [32, 384], strides = [1, 1]} : vector<64x1152xbf16> to vector<32x384xbf16>
    %11 = vector.extract_strided_slice %5 {offsets = [0, 384], sizes = [32, 384], strides = [1, 1]} : vector<64x1152xbf16> to vector<32x384xbf16>
    %12 = vector.extract_strided_slice %5 {offsets = [0, 768], sizes = [32, 384], strides = [1, 1]} : vector<64x1152xbf16> to vector<32x384xbf16>
    %cst_6 = arith.constant 0.000000e+00 : f32
    %13 = vector.broadcast %cst_6 : f32 to vector<32x384xf32>
    %14 = vector.extract_strided_slice %10 {offsets = [0, 0], sizes = [32, 64], strides = [1, 1]} : vector<32x384xbf16> to vector<32x64xbf16>
    %15 = vector.extract_strided_slice %11 {offsets = [0, 0], sizes = [32, 64], strides = [1, 1]} : vector<32x384xbf16> to vector<32x64xbf16>
    %16 = vector.extract_strided_slice %12 {offsets = [0, 0], sizes = [32, 64], strides = [1, 1]} : vector<32x384xbf16> to vector<32x64xbf16>
    %cst_7 = arith.constant dense<0.000000e+00> : vector<32x32xf32>
    %17 = tpu.matmul %14, %15, %cst_7 {dimension_numbers = #tpu.dot_dimension_numbers<[1], [1], [0], [0], [0, 0, 1, 0], [], []>} : vector<32x64xbf16>, vector<32x64xbf16>, vector<32x32xf32> -> vector<32x32xf32>
    %cst_8 = arith.constant 0xFF800000 : f32
    %18 = vector.broadcast %cst_8 : f32 to vector<32x32xf32>
    %19 = arith.select %8, %17, %18 : vector<32x32xi1>, vector<32x32xf32>
    %cst_9 = arith.constant dense<0xFF800000> : vector<32xf32>
    %20 = vector.multi_reduction <maximumf>, %19, %cst_9 [1] : vector<32x32xf32> to vector<32xf32>
    %21 = vector.shape_cast %20 : vector<32xf32> to vector<32x1xf32>
    %22 = vector.broadcast %21 : vector<32x1xf32> to vector<32x32xf32>
    %23 = arith.subf %19, %22 : vector<32x32xf32>
    %24 = math.exp %23 : vector<32x32xf32>
    %cst_10 = arith.constant dense<0.000000e+00> : vector<32xf32>
    %25 = vector.multi_reduction <add>, %24, %cst_10 [1] : vector<32x32xf32> to vector<32xf32>
    %26 = vector.shape_cast %25 : vector<32xf32> to vector<32x1xf32>
    %27 = tpu.reciprocal %26 {approx = true} : vector<32x1xf32> -> vector<32x1xf32>
    %28 = vector.broadcast %27 : vector<32x1xf32> to vector<32x32xf32>
    %29 = arith.mulf %24, %28 : vector<32x32xf32>
    %30 = arith.truncf %29 : vector<32x32xf32> to vector<32x32xbf16>
    %cst_11 = arith.constant dense<0.000000e+00> : vector<32x64xf32>
    %31 = tpu.matmul %30, %16, %cst_11 {dimension_numbers = #tpu.dot_dimension_numbers<[1], [0], [0], [1], [0, 0, 1, 1], [], []>} : vector<32x32xbf16>, vector<32x64xbf16>, vector<32x64xf32> -> vector<32x64xf32>
    %32 = arith.truncf %31 : vector<32x64xf32> to vector<32x64xbf16>
    %c0_12 = arith.constant 0 : index
    %c0_13 = arith.constant 0 : index
    %33 = vector.load %arg3[%c0_12, %c0_13] : memref<384x384xbf16, #tpu.memory_space<vmem>>, vector<64x384xbf16>
    %cst_14 = arith.constant dense<0.000000e+00> : vector<32x384xf32>
    %34 = tpu.matmul %32, %33, %cst_14 {dimension_numbers = #tpu.dot_dimension_numbers<[1], [0], [0], [1], [0, 0, 1, 1], [], []>} : vector<32x64xbf16>, vector<64x384xbf16>, vector<32x384xf32> -> vector<32x384xf32>
    %35 = arith.addf %13, %34 : vector<32x384xf32>
    %36 = vector.extract_strided_slice %10 {offsets = [0, 64], sizes = [32, 64], strides = [1, 1]} : vector<32x384xbf16> to vector<32x64xbf16>
    %37 = vector.extract_strided_slice %11 {offsets = [0, 64], sizes = [32, 64], strides = [1, 1]} : vector<32x384xbf16> to vector<32x64xbf16>
    %38 = vector.extract_strided_slice %12 {offsets = [0, 64], sizes = [32, 64], strides = [1, 1]} : vector<32x384xbf16> to vector<32x64xbf16>
    %cst_15 = arith.constant dense<0.000000e+00> : vector<32x32xf32>
    %39 = tpu.matmul %36, %37, %cst_15 {dimension_numbers = #tpu.dot_dimension_numbers<[1], [1], [0], [0], [0, 0, 1, 0], [], []>} : vector<32x64xbf16>, vector<32x64xbf16>, vector<32x32xf32> -> vector<32x32xf32>
    %cst_16 = arith.constant 0xFF800000 : f32
    %40 = vector.broadcast %cst_16 : f32 to vector<32x32xf32>
    %41 = arith.select %8, %39, %40 : vector<32x32xi1>, vector<32x32xf32>
    %cst_17 = arith.constant dense<0xFF800000> : vector<32xf32>
    %42 = vector.multi_reduction <maximumf>, %41, %cst_17 [1] : vector<32x32xf32> to vector<32xf32>
    %43 = vector.shape_cast %42 : vector<32xf32> to vector<32x1xf32>
    %44 = vector.broadcast %43 : vector<32x1xf32> to vector<32x32xf32>
    %45 = arith.subf %41, %44 : vector<32x32xf32>
    %46 = math.exp %45 : vector<32x32xf32>
    %cst_18 = arith.constant dense<0.000000e+00> : vector<32xf32>
    %47 = vector.multi_reduction <add>, %46, %cst_18 [1] : vector<32x32xf32> to vector<32xf32>
    %48 = vector.shape_cast %47 : vector<32xf32> to vector<32x1xf32>
    %49 = tpu.reciprocal %48 {approx = true} : vector<32x1xf32> -> vector<32x1xf32>
    %50 = vector.broadcast %49 : vector<32x1xf32> to vector<32x32xf32>
    %51 = arith.mulf %46, %50 : vector<32x32xf32>
    %52 = arith.truncf %51 : vector<32x32xf32> to vector<32x32xbf16>
    %cst_19 = arith.constant dense<0.000000e+00> : vector<32x64xf32>
    %53 = tpu.matmul %52, %38, %cst_19 {dimension_numbers = #tpu.dot_dimension_numbers<[1], [0], [0], [1], [0, 0, 1, 1], [], []>} : vector<32x32xbf16>, vector<32x64xbf16>, vector<32x64xf32> -> vector<32x64xf32>
    %54 = arith.truncf %53 : vector<32x64xf32> to vector<32x64xbf16>
    %c64 = arith.constant 64 : index
    %c0_20 = arith.constant 0 : index
    %55 = vector.load %arg3[%c64, %c0_20] : memref<384x384xbf16, #tpu.memory_space<vmem>>, vector<64x384xbf16>
    %cst_21 = arith.constant dense<0.000000e+00> : vector<32x384xf32>
    %56 = tpu.matmul %54, %55, %cst_21 {dimension_numbers = #tpu.dot_dimension_numbers<[1], [0], [0], [1], [0, 0, 1, 1], [], []>} : vector<32x64xbf16>, vector<64x384xbf16>, vector<32x384xf32> -> vector<32x384xf32>
    %57 = arith.addf %35, %56 : vector<32x384xf32>
    %58 = vector.extract_strided_slice %10 {offsets = [0, 128], sizes = [32, 64], strides = [1, 1]} : vector<32x384xbf16> to vector<32x64xbf16>
    %59 = vector.extract_strided_slice %11 {offsets = [0, 128], sizes = [32, 64], strides = [1, 1]} : vector<32x384xbf16> to vector<32x64xbf16>
    %60 = vector.extract_strided_slice %12 {offsets = [0, 128], sizes = [32, 64], strides = [1, 1]} : vector<32x384xbf16> to vector<32x64xbf16>
    %cst_22 = arith.constant dense<0.000000e+00> : vector<32x32xf32>
    %61 = tpu.matmul %58, %59, %cst_22 {dimension_numbers = #tpu.dot_dimension_numbers<[1], [1], [0], [0], [0, 0, 1, 0], [], []>} : vector<32x64xbf16>, vector<32x64xbf16>, vector<32x32xf32> -> vector<32x32xf32>
    %cst_23 = arith.constant 0xFF800000 : f32
    %62 = vector.broadcast %cst_23 : f32 to vector<32x32xf32>
    %63 = arith.select %8, %61, %62 : vector<32x32xi1>, vector<32x32xf32>
    %cst_24 = arith.constant dense<0xFF800000> : vector<32xf32>
    %64 = vector.multi_reduction <maximumf>, %63, %cst_24 [1] : vector<32x32xf32> to vector<32xf32>
    %65 = vector.shape_cast %64 : vector<32xf32> to vector<32x1xf32>
    %66 = vector.broadcast %65 : vector<32x1xf32> to vector<32x32xf32>
    %67 = arith.subf %63, %66 : vector<32x32xf32>
    %68 = math.exp %67 : vector<32x32xf32>
    %cst_25 = arith.constant dense<0.000000e+00> : vector<32xf32>
    %69 = vector.multi_reduction <add>, %68, %cst_25 [1] : vector<32x32xf32> to vector<32xf32>
    %70 = vector.shape_cast %69 : vector<32xf32> to vector<32x1xf32>
    %71 = tpu.reciprocal %70 {approx = true} : vector<32x1xf32> -> vector<32x1xf32>
    %72 = vector.broadcast %71 : vector<32x1xf32> to vector<32x32xf32>
    %73 = arith.mulf %68, %72 : vector<32x32xf32>
    %74 = arith.truncf %73 : vector<32x32xf32> to vector<32x32xbf16>
    %cst_26 = arith.constant dense<0.000000e+00> : vector<32x64xf32>
    %75 = tpu.matmul %74, %60, %cst_26 {dimension_numbers = #tpu.dot_dimension_numbers<[1], [0], [0], [1], [0, 0, 1, 1], [], []>} : vector<32x32xbf16>, vector<32x64xbf16>, vector<32x64xf32> -> vector<32x64xf32>
    %76 = arith.truncf %75 : vector<32x64xf32> to vector<32x64xbf16>
    %c128 = arith.constant 128 : index
    %c0_27 = arith.constant 0 : index
    %77 = vector.load %arg3[%c128, %c0_27] : memref<384x384xbf16, #tpu.memory_space<vmem>>, vector<64x384xbf16>
    %cst_28 = arith.constant dense<0.000000e+00> : vector<32x384xf32>
    %78 = tpu.matmul %76, %77, %cst_28 {dimension_numbers = #tpu.dot_dimension_numbers<[1], [0], [0], [1], [0, 0, 1, 1], [], []>} : vector<32x64xbf16>, vector<64x384xbf16>, vector<32x384xf32> -> vector<32x384xf32>
    %79 = arith.addf %57, %78 : vector<32x384xf32>
    %80 = vector.extract_strided_slice %10 {offsets = [0, 192], sizes = [32, 64], strides = [1, 1]} : vector<32x384xbf16> to vector<32x64xbf16>
    %81 = vector.extract_strided_slice %11 {offsets = [0, 192], sizes = [32, 64], strides = [1, 1]} : vector<32x384xbf16> to vector<32x64xbf16>
    %82 = vector.extract_strided_slice %12 {offsets = [0, 192], sizes = [32, 64], strides = [1, 1]} : vector<32x384xbf16> to vector<32x64xbf16>
    %cst_29 = arith.constant dense<0.000000e+00> : vector<32x32xf32>
    %83 = tpu.matmul %80, %81, %cst_29 {dimension_numbers = #tpu.dot_dimension_numbers<[1], [1], [0], [0], [0, 0, 1, 0], [], []>} : vector<32x64xbf16>, vector<32x64xbf16>, vector<32x32xf32> -> vector<32x32xf32>
    %cst_30 = arith.constant 0xFF800000 : f32
    %84 = vector.broadcast %cst_30 : f32 to vector<32x32xf32>
    %85 = arith.select %8, %83, %84 : vector<32x32xi1>, vector<32x32xf32>
    %cst_31 = arith.constant dense<0xFF800000> : vector<32xf32>
    %86 = vector.multi_reduction <maximumf>, %85, %cst_31 [1] : vector<32x32xf32> to vector<32xf32>
    %87 = vector.shape_cast %86 : vector<32xf32> to vector<32x1xf32>
    %88 = vector.broadcast %87 : vector<32x1xf32> to vector<32x32xf32>
    %89 = arith.subf %85, %88 : vector<32x32xf32>
    %90 = math.exp %89 : vector<32x32xf32>
    %cst_32 = arith.constant dense<0.000000e+00> : vector<32xf32>
    %91 = vector.multi_reduction <add>, %90, %cst_32 [1] : vector<32x32xf32> to vector<32xf32>
    %92 = vector.shape_cast %91 : vector<32xf32> to vector<32x1xf32>
    %93 = tpu.reciprocal %92 {approx = true} : vector<32x1xf32> -> vector<32x1xf32>
    %94 = vector.broadcast %93 : vector<32x1xf32> to vector<32x32xf32>
    %95 = arith.mulf %90, %94 : vector<32x32xf32>
    %96 = arith.truncf %95 : vector<32x32xf32> to vector<32x32xbf16>
    %cst_33 = arith.constant dense<0.000000e+00> : vector<32x64xf32>
    %97 = tpu.matmul %96, %82, %cst_33 {dimension_numbers = #tpu.dot_dimension_numbers<[1], [0], [0], [1], [0, 0, 1, 1], [], []>} : vector<32x32xbf16>, vector<32x64xbf16>, vector<32x64xf32> -> vector<32x64xf32>
    %98 = arith.truncf %97 : vector<32x64xf32> to vector<32x64xbf16>
    %c192 = arith.constant 192 : index
    %c0_34 = arith.constant 0 : index
    %99 = vector.load %arg3[%c192, %c0_34] : memref<384x384xbf16, #tpu.memory_space<vmem>>, vector<64x384xbf16>
    %cst_35 = arith.constant dense<0.000000e+00> : vector<32x384xf32>
    %100 = tpu.matmul %98, %99, %cst_35 {dimension_numbers = #tpu.dot_dimension_numbers<[1], [0], [0], [1], [0, 0, 1, 1], [], []>} : vector<32x64xbf16>, vector<64x384xbf16>, vector<32x384xf32> -> vector<32x384xf32>
    %101 = arith.addf %79, %100 : vector<32x384xf32>
    %102 = vector.extract_strided_slice %10 {offsets = [0, 256], sizes = [32, 64], strides = [1, 1]} : vector<32x384xbf16> to vector<32x64xbf16>
    %103 = vector.extract_strided_slice %11 {offsets = [0, 256], sizes = [32, 64], strides = [1, 1]} : vector<32x384xbf16> to vector<32x64xbf16>
    %104 = vector.extract_strided_slice %12 {offsets = [0, 256], sizes = [32, 64], strides = [1, 1]} : vector<32x384xbf16> to vector<32x64xbf16>
    %cst_36 = arith.constant dense<0.000000e+00> : vector<32x32xf32>
    %105 = tpu.matmul %102, %103, %cst_36 {dimension_numbers = #tpu.dot_dimension_numbers<[1], [1], [0], [0], [0, 0, 1, 0], [], []>} : vector<32x64xbf16>, vector<32x64xbf16>, vector<32x32xf32> -> vector<32x32xf32>
    %cst_37 = arith.constant 0xFF800000 : f32
    %106 = vector.broadcast %cst_37 : f32 to vector<32x32xf32>
    %107 = arith.select %8, %105, %106 : vector<32x32xi1>, vector<32x32xf32>
    %cst_38 = arith.constant dense<0xFF800000> : vector<32xf32>
    %108 = vector.multi_reduction <maximumf>, %107, %cst_38 [1] : vector<32x32xf32> to vector<32xf32>
    %109 = vector.shape_cast %108 : vector<32xf32> to vector<32x1xf32>
    %110 = vector.broadcast %109 : vector<32x1xf32> to vector<32x32xf32>
    %111 = arith.subf %107, %110 : vector<32x32xf32>
    %112 = math.exp %111 : vector<32x32xf32>
    %cst_39 = arith.constant dense<0.000000e+00> : vector<32xf32>
    %113 = vector.multi_reduction <add>, %112, %cst_39 [1] : vector<32x32xf32> to vector<32xf32>
    %114 = vector.shape_cast %113 : vector<32xf32> to vector<32x1xf32>
    %115 = tpu.reciprocal %114 {approx = true} : vector<32x1xf32> -> vector<32x1xf32>
    %116 = vector.broadcast %115 : vector<32x1xf32> to vector<32x32xf32>
    %117 = arith.mulf %112, %116 : vector<32x32xf32>
    %118 = arith.truncf %117 : vector<32x32xf32> to vector<32x32xbf16>
    %cst_40 = arith.constant dense<0.000000e+00> : vector<32x64xf32>
    %119 = tpu.matmul %118, %104, %cst_40 {dimension_numbers = #tpu.dot_dimension_numbers<[1], [0], [0], [1], [0, 0, 1, 1], [], []>} : vector<32x32xbf16>, vector<32x64xbf16>, vector<32x64xf32> -> vector<32x64xf32>
    %120 = arith.truncf %119 : vector<32x64xf32> to vector<32x64xbf16>
    %c256 = arith.constant 256 : index
    %c0_41 = arith.constant 0 : index
    %121 = vector.load %arg3[%c256, %c0_41] : memref<384x384xbf16, #tpu.memory_space<vmem>>, vector<64x384xbf16>
    %cst_42 = arith.constant dense<0.000000e+00> : vector<32x384xf32>
    %122 = tpu.matmul %120, %121, %cst_42 {dimension_numbers = #tpu.dot_dimension_numbers<[1], [0], [0], [1], [0, 0, 1, 1], [], []>} : vector<32x64xbf16>, vector<64x384xbf16>, vector<32x384xf32> -> vector<32x384xf32>
    %123 = arith.addf %101, %122 : vector<32x384xf32>
    %124 = vector.extract_strided_slice %10 {offsets = [0, 320], sizes = [32, 64], strides = [1, 1]} : vector<32x384xbf16> to vector<32x64xbf16>
    %125 = vector.extract_strided_slice %11 {offsets = [0, 320], sizes = [32, 64], strides = [1, 1]} : vector<32x384xbf16> to vector<32x64xbf16>
    %126 = vector.extract_strided_slice %12 {offsets = [0, 320], sizes = [32, 64], strides = [1, 1]} : vector<32x384xbf16> to vector<32x64xbf16>
    %cst_43 = arith.constant dense<0.000000e+00> : vector<32x32xf32>
    %127 = tpu.matmul %124, %125, %cst_43 {dimension_numbers = #tpu.dot_dimension_numbers<[1], [1], [0], [0], [0, 0, 1, 0], [], []>} : vector<32x64xbf16>, vector<32x64xbf16>, vector<32x32xf32> -> vector<32x32xf32>
    %cst_44 = arith.constant 0xFF800000 : f32
    %128 = vector.broadcast %cst_44 : f32 to vector<32x32xf32>
    %129 = arith.select %8, %127, %128 : vector<32x32xi1>, vector<32x32xf32>
    %cst_45 = arith.constant dense<0xFF800000> : vector<32xf32>
    %130 = vector.multi_reduction <maximumf>, %129, %cst_45 [1] : vector<32x32xf32> to vector<32xf32>
    %131 = vector.shape_cast %130 : vector<32xf32> to vector<32x1xf32>
    %132 = vector.broadcast %131 : vector<32x1xf32> to vector<32x32xf32>
    %133 = arith.subf %129, %132 : vector<32x32xf32>
    %134 = math.exp %133 : vector<32x32xf32>
    %cst_46 = arith.constant dense<0.000000e+00> : vector<32xf32>
    %135 = vector.multi_reduction <add>, %134, %cst_46 [1] : vector<32x32xf32> to vector<32xf32>
    %136 = vector.shape_cast %135 : vector<32xf32> to vector<32x1xf32>
    %137 = tpu.reciprocal %136 {approx = true} : vector<32x1xf32> -> vector<32x1xf32>
    %138 = vector.broadcast %137 : vector<32x1xf32> to vector<32x32xf32>
    %139 = arith.mulf %134, %138 : vector<32x32xf32>
    %140 = arith.truncf %139 : vector<32x32xf32> to vector<32x32xbf16>
    %cst_47 = arith.constant dense<0.000000e+00> : vector<32x64xf32>
    %141 = tpu.matmul %140, %126, %cst_47 {dimension_numbers = #tpu.dot_dimension_numbers<[1], [0], [0], [1], [0, 0, 1, 1], [], []>} : vector<32x32xbf16>, vector<32x64xbf16>, vector<32x64xf32> -> vector<32x64xf32>
    %142 = arith.truncf %141 : vector<32x64xf32> to vector<32x64xbf16>
    %c320 = arith.constant 320 : index
    %c0_48 = arith.constant 0 : index
    %143 = vector.load %arg3[%c320, %c0_48] : memref<384x384xbf16, #tpu.memory_space<vmem>>, vector<64x384xbf16>
    %cst_49 = arith.constant dense<0.000000e+00> : vector<32x384xf32>
    %144 = tpu.matmul %142, %143, %cst_49 {dimension_numbers = #tpu.dot_dimension_numbers<[1], [0], [0], [1], [0, 0, 1, 1], [], []>} : vector<32x64xbf16>, vector<64x384xbf16>, vector<32x384xf32> -> vector<32x384xf32>
    %145 = arith.addf %123, %144 : vector<32x384xf32>
    %146 = vector.broadcast %9 : vector<1x384xf32> to vector<32x384xf32>
    %147 = arith.addf %145, %146 : vector<32x384xf32>
    %c0_50 = arith.constant 0 : index
    %c0_51 = arith.constant 0 : index
    %c0_52 = arith.constant 0 : index
    %148 = vector.load %arg5[%c0_50, %c0_51, %c0_52] : memref<2x32x384xf32, #tpu.memory_space<vmem>>, vector<1x32x384xf32>
    %149 = vector.shape_cast %148 : vector<1x32x384xf32> to vector<32x384xf32>
    %150 = vector.shape_cast %147 : vector<32x384xf32> to vector<1x32x384xf32>
    tpu.vector_store %arg5[%c0_50, %c0_51, %c0_52], %150 {strides = array<i32>} : memref<2x32x384xf32, #tpu.memory_space<vmem>>, vector<1x32x384xf32>,
    %151 = vector.extract_strided_slice %5 {offsets = [32, 0], sizes = [32, 384], strides = [1, 1]} : vector<64x1152xbf16> to vector<32x384xbf16>
    %152 = vector.extract_strided_slice %5 {offsets = [32, 384], sizes = [32, 384], strides = [1, 1]} : vector<64x1152xbf16> to vector<32x384xbf16>
    %153 = vector.extract_strided_slice %5 {offsets = [32, 768], sizes = [32, 384], strides = [1, 1]} : vector<64x1152xbf16> to vector<32x384xbf16>
    %cst_53 = arith.constant 0.000000e+00 : f32
    %154 = vector.broadcast %cst_53 : f32 to vector<32x384xf32>
    %155 = vector.extract_strided_slice %151 {offsets = [0, 0], sizes = [32, 64], strides = [1, 1]} : vector<32x384xbf16> to vector<32x64xbf16>
    %156 = vector.extract_strided_slice %152 {offsets = [0, 0], sizes = [32, 64], strides = [1, 1]} : vector<32x384xbf16> to vector<32x64xbf16>
    %157 = vector.extract_strided_slice %153 {offsets = [0, 0], sizes = [32, 64], strides = [1, 1]} : vector<32x384xbf16> to vector<32x64xbf16>
    %cst_54 = arith.constant dense<0.000000e+00> : vector<32x32xf32>
    %158 = tpu.matmul %155, %156, %cst_54 {dimension_numbers = #tpu.dot_dimension_numbers<[1], [1], [0], [0], [0, 0, 1, 0], [], []>} : vector<32x64xbf16>, vector<32x64xbf16>, vector<32x32xf32> -> vector<32x32xf32>
    %cst_55 = arith.constant 0xFF800000 : f32
    %159 = vector.broadcast %cst_55 : f32 to vector<32x32xf32>
    %160 = arith.select %8, %158, %159 : vector<32x32xi1>, vector<32x32xf32>
    %cst_56 = arith.constant dense<0xFF800000> : vector<32xf32>
    %161 = vector.multi_reduction <maximumf>, %160, %cst_56 [1] : vector<32x32xf32> to vector<32xf32>
    %162 = vector.shape_cast %161 : vector<32xf32> to vector<32x1xf32>
    %163 = vector.broadcast %162 : vector<32x1xf32> to vector<32x32xf32>
    %164 = arith.subf %160, %163 : vector<32x32xf32>
    %165 = math.exp %164 : vector<32x32xf32>
    %cst_57 = arith.constant dense<0.000000e+00> : vector<32xf32>
    %166 = vector.multi_reduction <add>, %165, %cst_57 [1] : vector<32x32xf32> to vector<32xf32>
    %167 = vector.shape_cast %166 : vector<32xf32> to vector<32x1xf32>
    %168 = tpu.reciprocal %167 {approx = true} : vector<32x1xf32> -> vector<32x1xf32>
    %169 = vector.broadcast %168 : vector<32x1xf32> to vector<32x32xf32>
    %170 = arith.mulf %165, %169 : vector<32x32xf32>
    %171 = arith.truncf %170 : vector<32x32xf32> to vector<32x32xbf16>
    %cst_58 = arith.constant dense<0.000000e+00> : vector<32x64xf32>
    %172 = tpu.matmul %171, %157, %cst_58 {dimension_numbers = #tpu.dot_dimension_numbers<[1], [0], [0], [1], [0, 0, 1, 1], [], []>} : vector<32x32xbf16>, vector<32x64xbf16>, vector<32x64xf32> -> vector<32x64xf32>
    %173 = arith.truncf %172 : vector<32x64xf32> to vector<32x64xbf16>
    %c0_59 = arith.constant 0 : index
    %c0_60 = arith.constant 0 : index
    %174 = vector.load %arg3[%c0_59, %c0_60] : memref<384x384xbf16, #tpu.memory_space<vmem>>, vector<64x384xbf16>
    %cst_61 = arith.constant dense<0.000000e+00> : vector<32x384xf32>
    %175 = tpu.matmul %173, %174, %cst_61 {dimension_numbers = #tpu.dot_dimension_numbers<[1], [0], [0], [1], [0, 0, 1, 1], [], []>} : vector<32x64xbf16>, vector<64x384xbf16>, vector<32x384xf32> -> vector<32x384xf32>
    %176 = arith.addf %154, %175 : vector<32x384xf32>
    %177 = vector.extract_strided_slice %151 {offsets = [0, 64], sizes = [32, 64], strides = [1, 1]} : vector<32x384xbf16> to vector<32x64xbf16>
    %178 = vector.extract_strided_slice %152 {offsets = [0, 64], sizes = [32, 64], strides = [1, 1]} : vector<32x384xbf16> to vector<32x64xbf16>
    %179 = vector.extract_strided_slice %153 {offsets = [0, 64], sizes = [32, 64], strides = [1, 1]} : vector<32x384xbf16> to vector<32x64xbf16>
    %cst_62 = arith.constant dense<0.000000e+00> : vector<32x32xf32>
    %180 = tpu.matmul %177, %178, %cst_62 {dimension_numbers = #tpu.dot_dimension_numbers<[1], [1], [0], [0], [0, 0, 1, 0], [], []>} : vector<32x64xbf16>, vector<32x64xbf16>, vector<32x32xf32> -> vector<32x32xf32>
    %cst_63 = arith.constant 0xFF800000 : f32
    %181 = vector.broadcast %cst_63 : f32 to vector<32x32xf32>
    %182 = arith.select %8, %180, %181 : vector<32x32xi1>, vector<32x32xf32>
    %cst_64 = arith.constant dense<0xFF800000> : vector<32xf32>
    %183 = vector.multi_reduction <maximumf>, %182, %cst_64 [1] : vector<32x32xf32> to vector<32xf32>
    %184 = vector.shape_cast %183 : vector<32xf32> to vector<32x1xf32>
    %185 = vector.broadcast %184 : vector<32x1xf32> to vector<32x32xf32>
    %186 = arith.subf %182, %185 : vector<32x32xf32>
    %187 = math.exp %186 : vector<32x32xf32>
    %cst_65 = arith.constant dense<0.000000e+00> : vector<32xf32>
    %188 = vector.multi_reduction <add>, %187, %cst_65 [1] : vector<32x32xf32> to vector<32xf32>
    %189 = vector.shape_cast %188 : vector<32xf32> to vector<32x1xf32>
    %190 = tpu.reciprocal %189 {approx = true} : vector<32x1xf32> -> vector<32x1xf32>
    %191 = vector.broadcast %190 : vector<32x1xf32> to vector<32x32xf32>
    %192 = arith.mulf %187, %191 : vector<32x32xf32>
    %193 = arith.truncf %192 : vector<32x32xf32> to vector<32x32xbf16>
    %cst_66 = arith.constant dense<0.000000e+00> : vector<32x64xf32>
    %194 = tpu.matmul %193, %179, %cst_66 {dimension_numbers = #tpu.dot_dimension_numbers<[1], [0], [0], [1], [0, 0, 1, 1], [], []>} : vector<32x32xbf16>, vector<32x64xbf16>, vector<32x64xf32> -> vector<32x64xf32>
    %195 = arith.truncf %194 : vector<32x64xf32> to vector<32x64xbf16>
    %c64_67 = arith.constant 64 : index
    %c0_68 = arith.constant 0 : index
    %196 = vector.load %arg3[%c64_67, %c0_68] : memref<384x384xbf16, #tpu.memory_space<vmem>>, vector<64x384xbf16>
    %cst_69 = arith.constant dense<0.000000e+00> : vector<32x384xf32>
    %197 = tpu.matmul %195, %196, %cst_69 {dimension_numbers = #tpu.dot_dimension_numbers<[1], [0], [0], [1], [0, 0, 1, 1], [], []>} : vector<32x64xbf16>, vector<64x384xbf16>, vector<32x384xf32> -> vector<32x384xf32>
    %198 = arith.addf %176, %197 : vector<32x384xf32>
    %199 = vector.extract_strided_slice %151 {offsets = [0, 128], sizes = [32, 64], strides = [1, 1]} : vector<32x384xbf16> to vector<32x64xbf16>
    %200 = vector.extract_strided_slice %152 {offsets = [0, 128], sizes = [32, 64], strides = [1, 1]} : vector<32x384xbf16> to vector<32x64xbf16>
    %201 = vector.extract_strided_slice %153 {offsets = [0, 128], sizes = [32, 64], strides = [1, 1]} : vector<32x384xbf16> to vector<32x64xbf16>
    %cst_70 = arith.constant dense<0.000000e+00> : vector<32x32xf32>
    %202 = tpu.matmul %199, %200, %cst_70 {dimension_numbers = #tpu.dot_dimension_numbers<[1], [1], [0], [0], [0, 0, 1, 0], [], []>} : vector<32x64xbf16>, vector<32x64xbf16>, vector<32x32xf32> -> vector<32x32xf32>
    %cst_71 = arith.constant 0xFF800000 : f32
    %203 = vector.broadcast %cst_71 : f32 to vector<32x32xf32>
    %204 = arith.select %8, %202, %203 : vector<32x32xi1>, vector<32x32xf32>
    %cst_72 = arith.constant dense<0xFF800000> : vector<32xf32>
    %205 = vector.multi_reduction <maximumf>, %204, %cst_72 [1] : vector<32x32xf32> to vector<32xf32>
    %206 = vector.shape_cast %205 : vector<32xf32> to vector<32x1xf32>
    %207 = vector.broadcast %206 : vector<32x1xf32> to vector<32x32xf32>
    %208 = arith.subf %204, %207 : vector<32x32xf32>
    %209 = math.exp %208 : vector<32x32xf32>
    %cst_73 = arith.constant dense<0.000000e+00> : vector<32xf32>
    %210 = vector.multi_reduction <add>, %209, %cst_73 [1] : vector<32x32xf32> to vector<32xf32>
    %211 = vector.shape_cast %210 : vector<32xf32> to vector<32x1xf32>
    %212 = tpu.reciprocal %211 {approx = true} : vector<32x1xf32> -> vector<32x1xf32>
    %213 = vector.broadcast %212 : vector<32x1xf32> to vector<32x32xf32>
    %214 = arith.mulf %209, %213 : vector<32x32xf32>
    %215 = arith.truncf %214 : vector<32x32xf32> to vector<32x32xbf16>
    %cst_74 = arith.constant dense<0.000000e+00> : vector<32x64xf32>
    %216 = tpu.matmul %215, %201, %cst_74 {dimension_numbers = #tpu.dot_dimension_numbers<[1], [0], [0], [1], [0, 0, 1, 1], [], []>} : vector<32x32xbf16>, vector<32x64xbf16>, vector<32x64xf32> -> vector<32x64xf32>
    %217 = arith.truncf %216 : vector<32x64xf32> to vector<32x64xbf16>
    %c128_75 = arith.constant 128 : index
    %c0_76 = arith.constant 0 : index
    %218 = vector.load %arg3[%c128_75, %c0_76] : memref<384x384xbf16, #tpu.memory_space<vmem>>, vector<64x384xbf16>
    %cst_77 = arith.constant dense<0.000000e+00> : vector<32x384xf32>
    %219 = tpu.matmul %217, %218, %cst_77 {dimension_numbers = #tpu.dot_dimension_numbers<[1], [0], [0], [1], [0, 0, 1, 1], [], []>} : vector<32x64xbf16>, vector<64x384xbf16>, vector<32x384xf32> -> vector<32x384xf32>
    %220 = arith.addf %198, %219 : vector<32x384xf32>
    %221 = vector.extract_strided_slice %151 {offsets = [0, 192], sizes = [32, 64], strides = [1, 1]} : vector<32x384xbf16> to vector<32x64xbf16>
    %222 = vector.extract_strided_slice %152 {offsets = [0, 192], sizes = [32, 64], strides = [1, 1]} : vector<32x384xbf16> to vector<32x64xbf16>
    %223 = vector.extract_strided_slice %153 {offsets = [0, 192], sizes = [32, 64], strides = [1, 1]} : vector<32x384xbf16> to vector<32x64xbf16>
    %cst_78 = arith.constant dense<0.000000e+00> : vector<32x32xf32>
    %224 = tpu.matmul %221, %222, %cst_78 {dimension_numbers = #tpu.dot_dimension_numbers<[1], [1], [0], [0], [0, 0, 1, 0], [], []>} : vector<32x64xbf16>, vector<32x64xbf16>, vector<32x32xf32> -> vector<32x32xf32>
    %cst_79 = arith.constant 0xFF800000 : f32
    %225 = vector.broadcast %cst_79 : f32 to vector<32x32xf32>
    %226 = arith.select %8, %224, %225 : vector<32x32xi1>, vector<32x32xf32>
    %cst_80 = arith.constant dense<0xFF800000> : vector<32xf32>
    %227 = vector.multi_reduction <maximumf>, %226, %cst_80 [1] : vector<32x32xf32> to vector<32xf32>
    %228 = vector.shape_cast %227 : vector<32xf32> to vector<32x1xf32>
    %229 = vector.broadcast %228 : vector<32x1xf32> to vector<32x32xf32>
    %230 = arith.subf %226, %229 : vector<32x32xf32>
    %231 = math.exp %230 : vector<32x32xf32>
    %cst_81 = arith.constant dense<0.000000e+00> : vector<32xf32>
    %232 = vector.multi_reduction <add>, %231, %cst_81 [1] : vector<32x32xf32> to vector<32xf32>
    %233 = vector.shape_cast %232 : vector<32xf32> to vector<32x1xf32>
    %234 = tpu.reciprocal %233 {approx = true} : vector<32x1xf32> -> vector<32x1xf32>
    %235 = vector.broadcast %234 : vector<32x1xf32> to vector<32x32xf32>
    %236 = arith.mulf %231, %235 : vector<32x32xf32>
    %237 = arith.truncf %236 : vector<32x32xf32> to vector<32x32xbf16>
    %cst_82 = arith.constant dense<0.000000e+00> : vector<32x64xf32>
    %238 = tpu.matmul %237, %223, %cst_82 {dimension_numbers = #tpu.dot_dimension_numbers<[1], [0], [0], [1], [0, 0, 1, 1], [], []>} : vector<32x32xbf16>, vector<32x64xbf16>, vector<32x64xf32> -> vector<32x64xf32>
    %239 = arith.truncf %238 : vector<32x64xf32> to vector<32x64xbf16>
    %c192_83 = arith.constant 192 : index
    %c0_84 = arith.constant 0 : index
    %240 = vector.load %arg3[%c192_83, %c0_84] : memref<384x384xbf16, #tpu.memory_space<vmem>>, vector<64x384xbf16>
    %cst_85 = arith.constant dense<0.000000e+00> : vector<32x384xf32>
    %241 = tpu.matmul %239, %240, %cst_85 {dimension_numbers = #tpu.dot_dimension_numbers<[1], [0], [0], [1], [0, 0, 1, 1], [], []>} : vector<32x64xbf16>, vector<64x384xbf16>, vector<32x384xf32> -> vector<32x384xf32>
    %242 = arith.addf %220, %241 : vector<32x384xf32>
    %243 = vector.extract_strided_slice %151 {offsets = [0, 256], sizes = [32, 64], strides = [1, 1]} : vector<32x384xbf16> to vector<32x64xbf16>
    %244 = vector.extract_strided_slice %152 {offsets = [0, 256], sizes = [32, 64], strides = [1, 1]} : vector<32x384xbf16> to vector<32x64xbf16>
    %245 = vector.extract_strided_slice %153 {offsets = [0, 256], sizes = [32, 64], strides = [1, 1]} : vector<32x384xbf16> to vector<32x64xbf16>
    %cst_86 = arith.constant dense<0.000000e+00> : vector<32x32xf32>
    %246 = tpu.matmul %243, %244, %cst_86 {dimension_numbers = #tpu.dot_dimension_numbers<[1], [1], [0], [0], [0, 0, 1, 0], [], []>} : vector<32x64xbf16>, vector<32x64xbf16>, vector<32x32xf32> -> vector<32x32xf32>
    %cst_87 = arith.constant 0xFF800000 : f32
    %247 = vector.broadcast %cst_87 : f32 to vector<32x32xf32>
    %248 = arith.select %8, %246, %247 : vector<32x32xi1>, vector<32x32xf32>
    %cst_88 = arith.constant dense<0xFF800000> : vector<32xf32>
    %249 = vector.multi_reduction <maximumf>, %248, %cst_88 [1] : vector<32x32xf32> to vector<32xf32>
    %250 = vector.shape_cast %249 : vector<32xf32> to vector<32x1xf32>
    %251 = vector.broadcast %250 : vector<32x1xf32> to vector<32x32xf32>
    %252 = arith.subf %248, %251 : vector<32x32xf32>
    %253 = math.exp %252 : vector<32x32xf32>
    %cst_89 = arith.constant dense<0.000000e+00> : vector<32xf32>
    %254 = vector.multi_reduction <add>, %253, %cst_89 [1] : vector<32x32xf32> to vector<32xf32>
    %255 = vector.shape_cast %254 : vector<32xf32> to vector<32x1xf32>
    %256 = tpu.reciprocal %255 {approx = true} : vector<32x1xf32> -> vector<32x1xf32>
    %257 = vector.broadcast %256 : vector<32x1xf32> to vector<32x32xf32>
    %258 = arith.mulf %253, %257 : vector<32x32xf32>
    %259 = arith.truncf %258 : vector<32x32xf32> to vector<32x32xbf16>
    %cst_90 = arith.constant dense<0.000000e+00> : vector<32x64xf32>
    %260 = tpu.matmul %259, %245, %cst_90 {dimension_numbers = #tpu.dot_dimension_numbers<[1], [0], [0], [1], [0, 0, 1, 1], [], []>} : vector<32x32xbf16>, vector<32x64xbf16>, vector<32x64xf32> -> vector<32x64xf32>
    %261 = arith.truncf %260 : vector<32x64xf32> to vector<32x64xbf16>
    %c256_91 = arith.constant 256 : index
    %c0_92 = arith.constant 0 : index
    %262 = vector.load %arg3[%c256_91, %c0_92] : memref<384x384xbf16, #tpu.memory_space<vmem>>, vector<64x384xbf16>
    %cst_93 = arith.constant dense<0.000000e+00> : vector<32x384xf32>
    %263 = tpu.matmul %261, %262, %cst_93 {dimension_numbers = #tpu.dot_dimension_numbers<[1], [0], [0], [1], [0, 0, 1, 1], [], []>} : vector<32x64xbf16>, vector<64x384xbf16>, vector<32x384xf32> -> vector<32x384xf32>
    %264 = arith.addf %242, %263 : vector<32x384xf32>
    %265 = vector.extract_strided_slice %151 {offsets = [0, 320], sizes = [32, 64], strides = [1, 1]} : vector<32x384xbf16> to vector<32x64xbf16>
    %266 = vector.extract_strided_slice %152 {offsets = [0, 320], sizes = [32, 64], strides = [1, 1]} : vector<32x384xbf16> to vector<32x64xbf16>
    %267 = vector.extract_strided_slice %153 {offsets = [0, 320], sizes = [32, 64], strides = [1, 1]} : vector<32x384xbf16> to vector<32x64xbf16>
    %cst_94 = arith.constant dense<0.000000e+00> : vector<32x32xf32>
    %268 = tpu.matmul %265, %266, %cst_94 {dimension_numbers = #tpu.dot_dimension_numbers<[1], [1], [0], [0], [0, 0, 1, 0], [], []>} : vector<32x64xbf16>, vector<32x64xbf16>, vector<32x32xf32> -> vector<32x32xf32>
    %cst_95 = arith.constant 0xFF800000 : f32
    %269 = vector.broadcast %cst_95 : f32 to vector<32x32xf32>
    %270 = arith.select %8, %268, %269 : vector<32x32xi1>, vector<32x32xf32>
    %cst_96 = arith.constant dense<0xFF800000> : vector<32xf32>
    %271 = vector.multi_reduction <maximumf>, %270, %cst_96 [1] : vector<32x32xf32> to vector<32xf32>
    %272 = vector.shape_cast %271 : vector<32xf32> to vector<32x1xf32>
    %273 = vector.broadcast %272 : vector<32x1xf32> to vector<32x32xf32>
    %274 = arith.subf %270, %273 : vector<32x32xf32>
    %275 = math.exp %274 : vector<32x32xf32>
    %cst_97 = arith.constant dense<0.000000e+00> : vector<32xf32>
    %276 = vector.multi_reduction <add>, %275, %cst_97 [1] : vector<32x32xf32> to vector<32xf32>
    %277 = vector.shape_cast %276 : vector<32xf32> to vector<32x1xf32>
    %278 = tpu.reciprocal %277 {approx = true} : vector<32x1xf32> -> vector<32x1xf32>
    %279 = vector.broadcast %278 : vector<32x1xf32> to vector<32x32xf32>
    %280 = arith.mulf %275, %279 : vector<32x32xf32>
    %281 = arith.truncf %280 : vector<32x32xf32> to vector<32x32xbf16>
    %cst_98 = arith.constant dense<0.000000e+00> : vector<32x64xf32>
    %282 = tpu.matmul %281, %267, %cst_98 {dimension_numbers = #tpu.dot_dimension_numbers<[1], [0], [0], [1], [0, 0, 1, 1], [], []>} : vector<32x32xbf16>, vector<32x64xbf16>, vector<32x64xf32> -> vector<32x64xf32>
    %283 = arith.truncf %282 : vector<32x64xf32> to vector<32x64xbf16>
    %c320_99 = arith.constant 320 : index
    %c0_100 = arith.constant 0 : index
    %284 = vector.load %arg3[%c320_99, %c0_100] : memref<384x384xbf16, #tpu.memory_space<vmem>>, vector<64x384xbf16>
    %cst_101 = arith.constant dense<0.000000e+00> : vector<32x384xf32>
    %285 = tpu.matmul %283, %284, %cst_101 {dimension_numbers = #tpu.dot_dimension_numbers<[1], [0], [0], [1], [0, 0, 1, 1], [], []>} : vector<32x64xbf16>, vector<64x384xbf16>, vector<32x384xf32> -> vector<32x384xf32>
    %286 = arith.addf %264, %285 : vector<32x384xf32>
    %287 = vector.broadcast %9 : vector<1x384xf32> to vector<32x384xf32>
    %288 = arith.addf %286, %287 : vector<32x384xf32>
    %c1 = arith.constant 1 : index
    %c0_102 = arith.constant 0 : index
    %c0_103 = arith.constant 0 : index
    %289 = vector.load %arg5[%c1, %c0_102, %c0_103] : memref<2x32x384xf32, #tpu.memory_space<vmem>>, vector<1x32x384xf32>
    %290 = vector.shape_cast %289 : vector<1x32x384xf32> to vector<32x384xf32>
    %291 = vector.shape_cast %288 : vector<32x384xf32> to vector<1x32x384xf32>
    tpu.vector_store %arg5[%c1, %c0_102, %c0_103], %291 {strides = array<i32>} : memref<2x32x384xf32, #tpu.memory_space<vmem>>, vector<1x32x384xf32>,
    return
  }
  func.func @transform_0(%arg0: i32) -> (i32, i32, i32) {
    %c0_i32 = arith.constant 0 : i32
    %c0_i32_0 = arith.constant 0 : i32
    %c0_i32_1 = arith.constant 0 : i32
    return %arg0, %c0_i32, %c0_i32_0 : i32, i32, i32
  }
  func.func @transform_1(%arg0: i32) -> (i32, i32) {
    %c0_i32 = arith.constant 0 : i32
    %c0_i32_0 = arith.constant 0 : i32
    %c0_i32_1 = arith.constant 0 : i32
    return %c0_i32, %c0_i32_0 : i32, i32
  }
  func.func @transform_2(%arg0: i32) -> (i32, i32) {
    %c0_i32 = arith.constant 0 : i32
    %c0_i32_0 = arith.constant 0 : i32
    %c0_i32_1 = arith.constant 0 : i32
    return %c0_i32, %c0_i32_0 : i32, i32
  }
  func.func @transform_3(%arg0: i32) -> (i32, i32) {
    %c0_i32 = arith.constant 0 : i32
    %c0_i32_0 = arith.constant 0 : i32
    %c0_i32_1 = arith.constant 0 : i32
    return %c0_i32, %c0_i32_0 : i32, i32
  }
  func.func @transform_4(%arg0: i32) -> (i32, i32, i32) {
    %c0_i32 = arith.constant 0 : i32
    %c0_i32_0 = arith.constant 0 : i32
    %c0_i32_1 = arith.constant 0 : i32
    return %arg0, %c0_i32, %c0_i32_0 : i32, i32, i32
  }
}

</mosaic_0001>

<llo_original>
// kernel: tpu_custom_call.1
$region0: #{tpu_custom_call.1}
  #allocation0 [shape = 'u32[]', space=smem, size = 0x4, offset = 0x4, fixed_abs, tag = 'smem constant byte address 0x4 - core index']
  #allocation1 [shape = 'u32[72,128]{1,0:T(1,128)}', space=vmem, size = 0x9000, scoped, tag = 'internal scratch']
  %s0 = inlined_call_operand.hbm [shape: f32[2,32,384], index: 0, kind: input, shape index: {}]
  %s1 = inlined_call_operand.hbm [shape: bf16[384,1152], index: 1, kind: input, shape index: {}]
  %s2 = inlined_call_operand.hbm [shape: bf16[384,384], index: 2, kind: input, shape index: {}]
  %s3 = inlined_call_operand.hbm [shape: f32[1,384], index: 3, kind: input, shape index: {}]
  %s4 = inlined_call_operand.hbm [shape: f32[2,32,384], index: 4, kind: output, shape index: {}]
  %s5 = sld [smem:[#allocation0]]
  $region42: #{tpu_custom_call.1} parent=0
    _
  %s7 = ssub.s32 1, %s5
  %s8 = scalar_select 0, %s7, %s5
  $region1: #{tpu_custom_call.1} parent=0
    #allocation2 [shape = 'u8[98304]{0}', space=vmem, size = 0x18000, scoped, tag = 'input window, operand 0, single buffered']
    #allocation3 [shape = 's32[1]{0}', space=sflag, size = 0x4, scoped, tag = 'scoped memory for tpu_custom_call.1']
    #allocation4 [shape = 's32[1]{0}', space=sflag, size = 0x4, scoped, tag = 'scoped memory for tpu_custom_call.1']
    #allocation5 [shape = 'u8[884736]{0}', space=vmem, size = 0xd8000, scoped, tag = 'input window, operand 1, single buffered']
    #allocation6 [shape = 's32[1]{0}', space=sflag, size = 0x4, scoped, tag = 'scoped memory for tpu_custom_call.1']
    #allocation7 [shape = 'u8[294912]{0}', space=vmem, size = 0x48000, scoped, tag = 'input window, operand 2, single buffered']
    #allocation8 [shape = 'u8[1536]{0}', space=vmem, size = 0x800, scoped, tag = 'input window, operand 3, single buffered']
    #allocation9 [shape = 's32[1]{0}', space=sflag, size = 0x4, scoped, tag = 'scoped memory for tpu_custom_call.1']
    #allocation10 [shape = 'u8[98304]{0}', space=vmem, size = 0x18000, scoped, tag = 'output window, operand 0, single buffered']
    %9 = vsyncpa [#allocation3], 0
    %10 = vsyncpa [#allocation6], 0
    %11 = vsyncpa [#allocation9], 0
    %12 = vsyncpa [#allocation4], 0
    // Predicated region
    $region2: #{tpu_custom_call.1} parent=1 // pred_check
      _
    $region3: #{tpu_custom_call.1} parent=1 // pred_check_branch
      %14 = sbr.rel (0) target = $region5
    $region4: #{tpu_custom_call.1} parent=1 // pred_region
      %16 = vsyncadd [#allocation3], 0
      %s17 = sshll.u32 %s0, 4
      %s18 = int_to_ptr.hbm [resolvable:$true] %s17
      %s19 = sshll.u32 [#allocation2], 4
      %s20 = int_to_ptr.vmem [resolvable:$true] %s19
      %25 = dma.hbm_to_vmem [thread:$0]  %s18, 3072, %s20, [#allocation3], 384, 384, 24
    $region5: #{tpu_custom_call.1} parent=1 // pred_fallthru
      _
    // Predicated region
    $region6: #{tpu_custom_call.1} parent=1 // pred_check
      _
    $region7: #{tpu_custom_call.1} parent=1 // pred_check_branch
      %27 = sbr.rel (0) target = $region9
    $region8: #{tpu_custom_call.1} parent=1 // pred_region
      %29 = vsyncadd [#allocation6], 0
      %s30 = sshll.u32 %s1, 4
      %s31 = int_to_ptr.hbm [resolvable:$true] %s30
      %s32 = sshll.u32 [#allocation5], 4
      %s33 = int_to_ptr.vmem [resolvable:$true] %s32
      %38 = dma.hbm_to_vmem [thread:$0]  %s31, 27648, %s33, [#allocation6], 576, 576, 36
    $region9: #{tpu_custom_call.1} parent=1 // pred_fallthru
      _
    // Predicated region
    $region10: #{tpu_custom_call.1} parent=1 // pred_check
      _
    $region11: #{tpu_custom_call.1} parent=1 // pred_check_branch
      %40 = sbr.rel (0) target = $region13
    $region12: #{tpu_custom_call.1} parent=1 // pred_region
      %42 = vsyncadd [#allocation6], 0
      %s43 = sshll.u32 %s2, 4
      %s44 = int_to_ptr.hbm [resolvable:$true] %s43
      %s45 = sshll.u32 [#allocation7], 4
      %s46 = int_to_ptr.vmem [resolvable:$true] %s45
      %51 = dma.hbm_to_vmem [thread:$0]  %s44, 9216, %s46, [#allocation6], 192, 192, 12
    $region13: #{tpu_custom_call.1} parent=1 // pred_fallthru
      _
    // Predicated region
    $region14: #{tpu_custom_call.1} parent=1 // pred_check
      _
    $region15: #{tpu_custom_call.1} parent=1 // pred_check_branch
      %53 = sbr.rel (0) target = $region17
    $region16: #{tpu_custom_call.1} parent=1 // pred_region
      %55 = vsyncadd [#allocation9], 0
      %s57 = sshll.u32 %s3, 4
      %s58 = int_to_ptr.hbm [resolvable:$true] %s57
      %s59 = sshll.u32 [#allocation8], 4
      %s60 = int_to_ptr.vmem [resolvable:$true] %s59
      %62 = dma.hbm_to_vmem [thread:$0]  %s58, 48, %s60, [#allocation9]
    $region17: #{tpu_custom_call.1} parent=1 // pred_fallthru
      _
    // Predicated region
    $region18: #{tpu_custom_call.1} parent=1 // pred_check
      _
    $region19: #{tpu_custom_call.1} parent=1 // pred_check_branch
      %64 = sbr.rel (0) target = $region21
    $region20: #{tpu_custom_call.1} parent=1 // pred_region
      %66 = dma.done [#allocation3], 3072
    $region21: #{tpu_custom_call.1} parent=1 // pred_fallthru
      _
    // Predicated region
    $region22: #{tpu_custom_call.1} parent=1 // pred_check
      _
    $region23: #{tpu_custom_call.1} parent=1 // pred_check_branch
      %68 = sbr.rel (0) target = $region25
    $region24: #{tpu_custom_call.1} parent=1 // pred_region
      %70 = dma.done [#allocation6], 27648
    $region25: #{tpu_custom_call.1} parent=1 // pred_fallthru
      _
    // Predicated region
    $region26: #{tpu_custom_call.1} parent=1 // pred_check
      _
    $region27: #{tpu_custom_call.1} parent=1 // pred_check_branch
      %72 = sbr.rel (0) target = $region29
    $region28: #{tpu_custom_call.1} parent=1 // pred_region
      %74 = dma.done [#allocation6], 9216
    $region29: #{tpu_custom_call.1} parent=1 // pred_fallthru
      _
    // Predicated region
    $region30: #{tpu_custom_call.1} parent=1 // pred_check
      _
    $region31: #{tpu_custom_call.1} parent=1 // pred_check_branch
      %76 = sbr.rel (0) target = $region33
    $region32: #{tpu_custom_call.1} parent=1 // pred_region
      %78 = dma.done [#allocation9], 48
    $region33: #{tpu_custom_call.1} parent=1 // pred_fallthru
      _
    %v80 = vld [vmem:[#allocation2] sm:$0xff]
    %v81 = vld [vmem:[#allocation2 + $0x8] sm:$0xff]
    %v82 = vld [vmem:[#allocation2 + $0x10] sm:$0xff]
    %v83 = vld [vmem:[#allocation2 + $0x18] sm:$0xff]
    %v84 = vld [vmem:[#allocation2 + $0x20] sm:$0xff]
    %v85 = vld [vmem:[#allocation2 + $0x28] sm:$0xff]
    %v86 = vld [vmem:[#allocation2 + $0x30] sm:$0xff]
    %v87 = vld [vmem:[#allocation2 + $0x38] sm:$0xff]
    %v88 = vld [vmem:[#allocation2 + $0x40] sm:$0xff]
    %v89 = vld [vmem:[#allocation2 + $0x48] sm:$0xff]
    %v90 = vld [vmem:[#allocation2 + $0x50] sm:$0xff]
    %v91 = vld [vmem:[#allocation2 + $0x58] sm:$0xff]
    %v92 = vld [vmem:[#allocation2 + $0x60] sm:$0xff]
    %v93 = vld [vmem:[#allocation2 + $0x68] sm:$0xff]
    %v94 = vld [vmem:[#allocation2 + $0x70] sm:$0xff]
    %v95 = vld [vmem:[#allocation2 + $0x78] sm:$0xff]
    %v96 = vld [vmem:[#allocation2 + $0x80] sm:$0xff]
    %v97 = vld [vmem:[#allocation2 + $0x88] sm:$0xff]
    %v98 = vld [vmem:[#allocation2 + $0x90] sm:$0xff]
    %v99 = vld [vmem:[#allocation2 + $0x98] sm:$0xff]
    %v100 = vld [vmem:[#allocation2 + $0xa0] sm:$0xff]
    %v101 = vld [vmem:[#allocation2 + $0xa8] sm:$0xff]
    %v102 = vld [vmem:[#allocation2 + $0xb0] sm:$0xff]
    %v103 = vld [vmem:[#allocation2 + $0xb8] sm:$0xff]
    %v104 = vpack.c.bf16 %v83, %v80
    %v105 = vpack.c.bf16 %v84, %v81
    %v106 = vpack.c.bf16 %v85, %v82
    %v107 = vpack.c.bf16 %v89, %v86
    %v108 = vpack.c.bf16 %v90, %v87
    %v109 = vpack.c.bf16 %v91, %v88
    %v110 = vpack.c.bf16 %v95, %v92
    %v111 = vpack.c.bf16 %v96, %v93
    %v112 = vpack.c.bf16 %v97, %v94
    %v113 = vpack.c.bf16 %v101, %v98
    %v114 = vpack.c.bf16 %v102, %v99
    %v115 = vpack.c.bf16 %v103, %v100
    %v116 = vld [vmem:[#allocation5] sm:$0xff]
    %v117 = vld [vmem:[#allocation5 + $0x8] sm:$0xff]
    %v118 = vld [vmem:[#allocation5 + $0x10] sm:$0xff]
    %v119 = vld [vmem:[#allocation5 + $0x18] sm:$0xff]
    %v120 = vld [vmem:[#allocation5 + $0x20] sm:$0xf]
    %v121 = vld [vmem:[#allocation5 + $0x24] sm:$0xff]
    %v122 = vld [vmem:[#allocation5 + $0x2c] sm:$0xff]
    %v123 = vld [vmem:[#allocation5 + $0x34] sm:$0xff]
    %v124 = vld [vmem:[#allocation5 + $0x3c] sm:$0xff]
    %v125 = vld [vmem:[#allocation5 + $0x44] sm:$0xf]
    %v126 = vld [vmem:[#allocation5 + $0x48] sm:$0xff]
    %v127 = vld [vmem:[#allocation5 + $0x50] sm:$0xff]
    %v128 = vld [vmem:[#allocation5 + $0x58] sm:$0xff]
    %v129 = vld [vmem:[#allocation5 + $0x60] sm:$0xff]
    %v130 = vld [vmem:[#allocation5 + $0x68] sm:$0xf]
    %v131 = vld [vmem:[#allocation5 + $0x6c] sm:$0xff]
    %v132 = vld [vmem:[#allocation5 + $0x74] sm:$0xff]
    %v133 = vld [vmem:[#allocation5 + $0x7c] sm:$0xff]
    %v134 = vld [vmem:[#allocation5 + $0x84] sm:$0xff]
    %v135 = vld [vmem:[#allocation5 + $0x8c] sm:$0xf]
    %v136 = vld [vmem:[#allocation5 + $0x90] sm:$0xff]
    %v137 = vld [vmem:[#allocation5 + $0x98] sm:$0xff]
    %v138 = vld [vmem:[#allocation5 + $0xa0] sm:$0xff]
    %v139 = vld [vmem:[#allocation5 + $0xa8] sm:$0xff]
    %v140 = vld [vmem:[#allocation5 + $0xb0] sm:$0xf]
    %v141 = vld [vmem:[#allocation5 + $0xb4] sm:$0xff]
    %v142 = vld [vmem:[#allocation5 + $0xbc] sm:$0xff]
    %v143 = vld [vmem:[#allocation5 + $0xc4] sm:$0xff]
    %v144 = vld [vmem:[#allocation5 + $0xcc] sm:$0xff]
    %v145 = vld [vmem:[#allocation5 + $0xd4] sm:$0xf]
    %v146 = vld [vmem:[#allocation5 + $0xd8] sm:$0xff]
    %v147 = vld [vmem:[#allocation5 + $0xe0] sm:$0xff]
    %v148 = vld [vmem:[#allocation5 + $0xe8] sm:$0xff]
    %v149 = vld [vmem:[#allocation5 + $0xf0] sm:$0xff]
    %v150 = vld [vmem:[#allocation5 + $0xf8] sm:$0xf]
    %v151 = vld [vmem:[#allocation5 + $0xfc] sm:$0xff]
    %v152 = vld [vmem:[#allocation5 + $0x104] sm:$0xff]
    %v153 = vld [vmem:[#allocation5 + $0x10c] sm:$0xff]
    %v154 = vld [vmem:[#allocation5 + $0x114] sm:$0xff]
    %v155 = vld [vmem:[#allocation5 + $0x11c] sm:$0xf]
    %v156 = vld [vmem:[#allocation5 + $0x120] sm:$0xff]
    %v157 = vld [vmem:[#allocation5 + $0x128] sm:$0xff]
    %v158 = vld [vmem:[#allocation5 + $0x130] sm:$0xff]
    %v159 = vld [vmem:[#allocation5 + $0x138] sm:$0xff]
    %v160 = vld [vmem:[#allocation5 + $0x140] sm:$0xf]
    %v161 = vld [vmem:[#allocation5 + $0x144] sm:$0xff]
    %v162 = vld [vmem:[#allocation5 + $0x14c] sm:$0xff]
    %v163 = vld [vmem:[#allocation5 + $0x154] sm:$0xff]
    %v164 = vld [vmem:[#allocation5 + $0x15c] sm:$0xff]
    %v165 = vld [vmem:[#allocation5 + $0x164] sm:$0xf]
    %v166 = vld [vmem:[#allocation5 + $0x168] sm:$0xff]
    %v167 = vld [vmem:[#allocation5 + $0x170] sm:$0xff]
    %v168 = vld [vmem:[#allocation5 + $0x178] sm:$0xff]
    %v169 = vld [vmem:[#allocation5 + $0x180] sm:$0xff]
    %v170 = vld [vmem:[#allocation5 + $0x188] sm:$0xf]
    %v171 = vld [vmem:[#allocation5 + $0x18c] sm:$0xff]
    %v172 = vld [vmem:[#allocation5 + $0x194] sm:$0xff]
    %v173 = vld [vmem:[#allocation5 + $0x19c] sm:$0xff]
    %v174 = vld [vmem:[#allocation5 + $0x1a4] sm:$0xff]
    %v175 = vld [vmem:[#allocation5 + $0x1ac] sm:$0xf]
    %v176 = vld [vmem:[#allocation5 + $0x1b0] sm:$0xff]
    %v177 = vld [vmem:[#allocation5 + $0x1b8] sm:$0xff]
    %v178 = vld [vmem:[#allocation5 + $0x1c0] sm:$0xff]
    %v179 = vld [vmem:[#allocation5 + $0x1c8] sm:$0xff]
    %v180 = vld [vmem:[#allocation5 + $0x1d0] sm:$0xf]
    %v181 = vld [vmem:[#allocation5 + $0x1d4] sm:$0xff]
    %v182 = vld [vmem:[#allocation5 + $0x1dc] sm:$0xff]
    %v183 = vld [vmem:[#allocation5 + $0x1e4] sm:$0xff]
    %v184 = vld [vmem:[#allocation5 + $0x1ec] sm:$0xff]
    %v185 = vld [vmem:[#allocation5 + $0x1f4] sm:$0xf]
    %v186 = vld [vmem:[#allocation5 + $0x1f8] sm:$0xff]
    %v187 = vld [vmem:[#allocation5 + $0x200] sm:$0xff]
    %v188 = vld [vmem:[#allocation5 + $0x208] sm:$0xff]
    %v189 = vld [vmem:[#allocation5 + $0x210] sm:$0xff]
    %v190 = vld [vmem:[#allocation5 + $0x218] sm:$0xf]
    %v191 = vld [vmem:[#allocation5 + $0x21c] sm:$0xff]
    %v192 = vld [vmem:[#allocation5 + $0x224] sm:$0xff]
    %v193 = vld [vmem:[#allocation5 + $0x22c] sm:$0xff]
    %v194 = vld [vmem:[#allocation5 + $0x234] sm:$0xff]
    %v195 = vld [vmem:[#allocation5 + $0x23c] sm:$0xf]
    %v196 = vld [vmem:[#allocation5 + $0x240] sm:$0xff]
    %v197 = vld [vmem:[#allocation5 + $0x248] sm:$0xff]
    %v198 = vld [vmem:[#allocation5 + $0x250] sm:$0xff]
    %v199 = vld [vmem:[#allocation5 + $0x258] sm:$0xff]
    %v200 = vld [vmem:[#allocation5 + $0x260] sm:$0xf]
    %v201 = vld [vmem:[#allocation5 + $0x264] sm:$0xff]
    %v202 = vld [vmem:[#allocation5 + $0x26c] sm:$0xff]
    %v203 = vld [vmem:[#allocation5 + $0x274] sm:$0xff]
    %v204 = vld [vmem:[#allocation5 + $0x27c] sm:$0xff]
    %v205 = vld [vmem:[#allocation5 + $0x284] sm:$0xf]
    %v206 = vld [vmem:[#allocation5 + $0x288] sm:$0xff]
    %v207 = vld [vmem:[#allocation5 + $0x290] sm:$0xff]
    %v208 = vld [vmem:[#allocation5 + $0x298] sm:$0xff]
    %v209 = vld [vmem:[#allocation5 + $0x2a0] sm:$0xff]
    %v210 = vld [vmem:[#allocation5 + $0x2a8] sm:$0xf]
    %v211 = vld [vmem:[#allocation5 + $0x2ac] sm:$0xff]
    %v212 = vld [vmem:[#allocation5 + $0x2b4] sm:$0xff]
    %v213 = vld [vmem:[#allocation5 + $0x2bc] sm:$0xff]
    %v214 = vld [vmem:[#allocation5 + $0x2c4] sm:$0xff]
    %v215 = vld [vmem:[#allocation5 + $0x2cc] sm:$0xf]
    %v216 = vld [vmem:[#allocation5 + $0x2d0] sm:$0xff]
    %v217 = vld [vmem:[#allocation5 + $0x2d8] sm:$0xff]
    %v218 = vld [vmem:[#allocation5 + $0x2e0] sm:$0xff]
    %v219 = vld [vmem:[#allocation5 + $0x2e8] sm:$0xff]
    %v220 = vld [vmem:[#allocation5 + $0x2f0] sm:$0xf]
    %v221 = vld [vmem:[#allocation5 + $0x2f4] sm:$0xff]
    %v222 = vld [vmem:[#allocation5 + $0x2fc] sm:$0xff]
    %v223 = vld [vmem:[#allocation5 + $0x304] sm:$0xff]
    %v224 = vld [vmem:[#allocation5 + $0x30c] sm:$0xff]
    %v225 = vld [vmem:[#allocation5 + $0x314] sm:$0xf]
    %v226 = vld [vmem:[#allocation5 + $0x318] sm:$0xff]
    %v227 = vld [vmem:[#allocation5 + $0x320] sm:$0xff]
    %v228 = vld [vmem:[#allocation5 + $0x328] sm:$0xff]
    %v229 = vld [vmem:[#allocation5 + $0x330] sm:$0xff]
    %v230 = vld [vmem:[#allocation5 + $0x338] sm:$0xf]
    %v231 = vld [vmem:[#allocation5 + $0x33c] sm:$0xff]
    %v232 = vld [vmem:[#allocation5 + $0x344] sm:$0xff]
    %v233 = vld [vmem:[#allocation5 + $0x34c] sm:$0xff]
    %v234 = vld [vmem:[#allocation5 + $0x354] sm:$0xff]
    %v235 = vld [vmem:[#allocation5 + $0x35c] sm:$0xf]
    %v236 = vld [vmem:[#allocation5 + $0x360] sm:$0xff]
    %v237 = vld [vmem:[#allocation5 + $0x368] sm:$0xff]
    %v238 = vld [vmem:[#allocation5 + $0x370] sm:$0xff]
    %v239 = vld [vmem:[#allocation5 + $0x378] sm:$0xff]
    %v240 = vld [vmem:[#allocation5 + $0x380] sm:$0xf]
    %v241 = vld [vmem:[#allocation5 + $0x384] sm:$0xff]
    %v242 = vld [vmem:[#allocation5 + $0x38c] sm:$0xff]
    %v243 = vld [vmem:[#allocation5 + $0x394] sm:$0xff]
    %v244 = vld [vmem:[#allocation5 + $0x39c] sm:$0xff]
    %v245 = vld [vmem:[#allocation5 + $0x3a4] sm:$0xf]
    %v246 = vld [vmem:[#allocation5 + $0x3a8] sm:$0xff]
    %v247 = vld [vmem:[#allocation5 + $0x3b0] sm:$0xff]
    %v248 = vld [vmem:[#allocation5 + $0x3b8] sm:$0xff]
    %v249 = vld [vmem:[#allocation5 + $0x3c0] sm:$0xff]
    %v250 = vld [vmem:[#allocation5 + $0x3c8] sm:$0xf]
    %v251 = vld [vmem:[#allocation5 + $0x3cc] sm:$0xff]
    %v252 = vld [vmem:[#allocation5 + $0x3d4] sm:$0xff]
    %v253 = vld [vmem:[#allocation5 + $0x3dc] sm:$0xff]
    %v254 = vld [vmem:[#allocation5 + $0x3e4] sm:$0xff]
    %v255 = vld [vmem:[#allocation5 + $0x3ec] sm:$0xf]
    %v256 = vld [vmem:[#allocation5 + $0x3f0] sm:$0xff]
    %v257 = vld [vmem:[#allocation5 + $0x3f8] sm:$0xff]
    %v258 = vld [vmem:[#allocation5 + $0x400] sm:$0xff]
    %v259 = vld [vmem:[#allocation5 + $0x408] sm:$0xff]
    %v260 = vld [vmem:[#allocation5 + $0x410] sm:$0xf]
    %v261 = vld [vmem:[#allocation5 + $0x414] sm:$0xff]
    %v262 = vld [vmem:[#allocation5 + $0x41c] sm:$0xff]
    %v263 = vld [vmem:[#allocation5 + $0x424] sm:$0xff]
    %v264 = vld [vmem:[#allocation5 + $0x42c] sm:$0xff]
    %v265 = vld [vmem:[#allocation5 + $0x434] sm:$0xf]
    %v266 = vld [vmem:[#allocation5 + $0x438] sm:$0xff]
    %v267 = vld [vmem:[#allocation5 + $0x440] sm:$0xff]
    %v268 = vld [vmem:[#allocation5 + $0x448] sm:$0xff]
    %v269 = vld [vmem:[#allocation5 + $0x450] sm:$0xff]
    %v270 = vld [vmem:[#allocation5 + $0x458] sm:$0xf]
    %v271 = vld [vmem:[#allocation5 + $0x45c] sm:$0xff]
    %v272 = vld [vmem:[#allocation5 + $0x464] sm:$0xff]
    %v273 = vld [vmem:[#allocation5 + $0x46c] sm:$0xff]
    %v274 = vld [vmem:[#allocation5 + $0x474] sm:$0xff]
    %v275 = vld [vmem:[#allocation5 + $0x47c] sm:$0xf]
    %v276 = vld [vmem:[#allocation5 + $0x480] sm:$0xff]
    %v277 = vld [vmem:[#allocation5 + $0x488] sm:$0xff]
    %v278 = vld [vmem:[#allocation5 + $0x490] sm:$0xff]
    %v279 = vld [vmem:[#allocation5 + $0x498] sm:$0xff]
    %v280 = vld [vmem:[#allocation5 + $0x4a0] sm:$0xf]
    %v281 = vld [vmem:[#allocation5 + $0x4a4] sm:$0xff]
    %v282 = vld [vmem:[#allocation5 + $0x4ac] sm:$0xff]
    %v283 = vld [vmem:[#allocation5 + $0x4b4] sm:$0xff]
    %v284 = vld [vmem:[#allocation5 + $0x4bc] sm:$0xff]
    %v285 = vld [vmem:[#allocation5 + $0x4c4] sm:$0xf]
    %v286 = vld [vmem:[#allocation5 + $0x4c8] sm:$0xff]
    %v287 = vld [vmem:[#allocation5 + $0x4d0] sm:$0xff]
    %v288 = vld [vmem:[#allocation5 + $0x4d8] sm:$0xff]
    %v289 = vld [vmem:[#allocation5 + $0x4e0] sm:$0xff]
    %v290 = vld [vmem:[#allocation5 + $0x4e8] sm:$0xf]
    %v291 = vld [vmem:[#allocation5 + $0x4ec] sm:$0xff]
    %v292 = vld [vmem:[#allocation5 + $0x4f4] sm:$0xff]
    %v293 = vld [vmem:[#allocation5 + $0x4fc] sm:$0xff]
    %v294 = vld [vmem:[#allocation5 + $0x504] sm:$0xff]
    %v295 = vld [vmem:[#allocation5 + $0x50c] sm:$0xf]
    %v296 = vld [vmem:[#allocation5 + $0x510] sm:$0xff]
    %v297 = vld [vmem:[#allocation5 + $0x518] sm:$0xff]
    %v298 = vld [vmem:[#allocation5 + $0x520] sm:$0xff]
    %v299 = vld [vmem:[#allocation5 + $0x528] sm:$0xff]
    %v300 = vld [vmem:[#allocation5 + $0x530] sm:$0xf]
    %v301 = vld [vmem:[#allocation5 + $0x534] sm:$0xff]
    %v302 = vld [vmem:[#allocation5 + $0x53c] sm:$0xff]
    %v303 = vld [vmem:[#allocation5 + $0x544] sm:$0xff]
    %v304 = vld [vmem:[#allocation5 + $0x54c] sm:$0xff]
    %v305 = vld [vmem:[#allocation5 + $0x554] sm:$0xf]
    %v306 = vld [vmem:[#allocation5 + $0x558] sm:$0xff]
    %v307 = vld [vmem:[#allocation5 + $0x560] sm:$0xff]
    %v308 = vld [vmem:[#allocation5 + $0x568] sm:$0xff]
    %v309 = vld [vmem:[#allocation5 + $0x570] sm:$0xff]
    %v310 = vld [vmem:[#allocation5 + $0x578] sm:$0xf]
    %v311 = vld [vmem:[#allocation5 + $0x57c] sm:$0xff]
    %v312 = vld [vmem:[#allocation5 + $0x584] sm:$0xff]
    %v313 = vld [vmem:[#allocation5 + $0x58c] sm:$0xff]
    %v314 = vld [vmem:[#allocation5 + $0x594] sm:$0xff]
    %v315 = vld [vmem:[#allocation5 + $0x59c] sm:$0xf]
    %v316 = vld [vmem:[#allocation5 + $0x5a0] sm:$0xff]
    %v317 = vld [vmem:[#allocation5 + $0x5a8] sm:$0xff]
    %v318 = vld [vmem:[#allocation5 + $0x5b0] sm:$0xff]
    %v319 = vld [vmem:[#allocation5 + $0x5b8] sm:$0xff]
    %v320 = vld [vmem:[#allocation5 + $0x5c0] sm:$0xf]
    %v321 = vld [vmem:[#allocation5 + $0x5c4] sm:$0xff]
    %v322 = vld [vmem:[#allocation5 + $0x5cc] sm:$0xff]
    %v323 = vld [vmem:[#allocation5 + $0x5d4] sm:$0xff]
    %v324 = vld [vmem:[#allocation5 + $0x5dc] sm:$0xff]
    %v325 = vld [vmem:[#allocation5 + $0x5e4] sm:$0xf]
    %v326 = vld [vmem:[#allocation5 + $0x5e8] sm:$0xff]
    %v327 = vld [vmem:[#allocation5 + $0x5f0] sm:$0xff]
    %v328 = vld [vmem:[#allocation5 + $0x5f8] sm:$0xff]
    %v329 = vld [vmem:[#allocation5 + $0x600] sm:$0xff]
    %v330 = vld [vmem:[#allocation5 + $0x608] sm:$0xf]
    %v331 = vld [vmem:[#allocation5 + $0x60c] sm:$0xff]
    %v332 = vld [vmem:[#allocation5 + $0x614] sm:$0xff]
    %v333 = vld [vmem:[#allocation5 + $0x61c] sm:$0xff]
    %v334 = vld [vmem:[#allocation5 + $0x624] sm:$0xff]
    %v335 = vld [vmem:[#allocation5 + $0x62c] sm:$0xf]
    %v336 = vld [vmem:[#allocation5 + $0x630] sm:$0xff]
    %v337 = vld [vmem:[#allocation5 + $0x638] sm:$0xff]
    %v338 = vld [vmem:[#allocation5 + $0x640] sm:$0xff]
    %v339 = vld [vmem:[#allocation5 + $0x648] sm:$0xff]
    %v340 = vld [vmem:[#allocation5 + $0x650] sm:$0xf]
    %v341 = vld [vmem:[#allocation5 + $0x654] sm:$0xff]
    %v342 = vld [vmem:[#allocation5 + $0x65c] sm:$0xff]
    %v343 = vld [vmem:[#allocation5 + $0x664] sm:$0xff]
    %v344 = vld [vmem:[#allocation5 + $0x66c] sm:$0xff]
    %v345 = vld [vmem:[#allocation5 + $0x674] sm:$0xf]
    %v346 = vld [vmem:[#allocation5 + $0x678] sm:$0xff]
    %v347 = vld [vmem:[#allocation5 + $0x680] sm:$0xff]
    %v348 = vld [vmem:[#allocation5 + $0x688] sm:$0xff]
    %v349 = vld [vmem:[#allocation5 + $0x690] sm:$0xff]
    %v350 = vld [vmem:[#allocation5 + $0x698] sm:$0xf]
    %v351 = vld [vmem:[#allocation5 + $0x69c] sm:$0xff]
    %v352 = vld [vmem:[#allocation5 + $0x6a4] sm:$0xff]
    %v353 = vld [vmem:[#allocation5 + $0x6ac] sm:$0xff]
    %v354 = vld [vmem:[#allocation5 + $0x6b4] sm:$0xff]
    %v355 = vld [vmem:[#allocation5 + $0x6bc] sm:$0xf]
    %v596 = vunpack.c.l.b16 %v116
    %v597 = vunpack.c.h.b16 %v116
    %v598 = vunpack.c.l.b16 %v117
    %v599 = vunpack.c.h.b16 %v117
    %v600 = vunpack.c.l.b16 %v118
    %v601 = vunpack.c.h.b16 %v118
    %v602 = vunpack.c.l.b16 %v119
    %v603 = vunpack.c.h.b16 %v119
    %v604 = vunpack.c.l.b16 %v120
    %v605 = vunpack.c.l.b16 %v121
    %v606 = vunpack.c.h.b16 %v121
    %v607 = vunpack.c.l.b16 %v122
    %v608 = vunpack.c.h.b16 %v122
    %v609 = vunpack.c.l.b16 %v123
    %v610 = vunpack.c.h.b16 %v123
    %v611 = vunpack.c.l.b16 %v124
    %v612 = vunpack.c.h.b16 %v124
    %v613 = vunpack.c.l.b16 %v125
    %v614 = vunpack.c.l.b16 %v126
    %v615 = vunpack.c.h.b16 %v126
    %v616 = vunpack.c.l.b16 %v127
    %v617 = vunpack.c.h.b16 %v127
    %v618 = vunpack.c.l.b16 %v128
    %v619 = vunpack.c.h.b16 %v128
    %v620 = vunpack.c.l.b16 %v129
    %v621 = vunpack.c.h.b16 %v129
    %v622 = vunpack.c.l.b16 %v130
    %v623 = vunpack.c.l.b16 %v131
    %v624 = vunpack.c.h.b16 %v131
    %v625 = vunpack.c.l.b16 %v132
    %v626 = vunpack.c.h.b16 %v132
    %v627 = vunpack.c.l.b16 %v133
    %v628 = vunpack.c.h.b16 %v133
    %v629 = vunpack.c.l.b16 %v134
    %v630 = vunpack.c.h.b16 %v134
    %v631 = vunpack.c.l.b16 %v135
    %v632 = vunpack.c.l.b16 %v136
    %v633 = vunpack.c.h.b16 %v136
    %v634 = vunpack.c.l.b16 %v137
    %v635 = vunpack.c.h.b16 %v137
    %v636 = vunpack.c.l.b16 %v138
    %v637 = vunpack.c.h.b16 %v138
    %v638 = vunpack.c.l.b16 %v139
    %v639 = vunpack.c.h.b16 %v139
    %v640 = vunpack.c.l.b16 %v140
    %v641 = vunpack.c.l.b16 %v141
    %v642 = vunpack.c.h.b16 %v141
    %v643 = vunpack.c.l.b16 %v142
    %v644 = vunpack.c.h.b16 %v142
    %v645 = vunpack.c.l.b16 %v143
    %v646 = vunpack.c.h.b16 %v143
    %v647 = vunpack.c.l.b16 %v144
    %v648 = vunpack.c.h.b16 %v144
    %v649 = vunpack.c.l.b16 %v145
    %v650 = vunpack.c.l.b16 %v146
    %v651 = vunpack.c.h.b16 %v146
    %v652 = vunpack.c.l.b16 %v147
    %v653 = vunpack.c.h.b16 %v147
    %v654 = vunpack.c.l.b16 %v148
    %v655 = vunpack.c.h.b16 %v148
    %v656 = vunpack.c.l.b16 %v149
    %v657 = vunpack.c.h.b16 %v149
    %v658 = vunpack.c.l.b16 %v150
    %v659 = vunpack.c.l.b16 %v151
    %v660 = vunpack.c.h.b16 %v151
    %v661 = vunpack.c.l.b16 %v152
    %v662 = vunpack.c.h.b16 %v152
    %v663 = vunpack.c.l.b16 %v153
    %v664 = vunpack.c.h.b16 %v153
    %v665 = vunpack.c.l.b16 %v154
    %v666 = vunpack.c.h.b16 %v154
    %v667 = vunpack.c.l.b16 %v155
    %v668 = vunpack.c.l.b16 %v156
    %v669 = vunpack.c.h.b16 %v156
    %v670 = vunpack.c.l.b16 %v157
    %v671 = vunpack.c.h.b16 %v157
    %v672 = vunpack.c.l.b16 %v158
    %v673 = vunpack.c.h.b16 %v158
    %v674 = vunpack.c.l.b16 %v159
    %v675 = vunpack.c.h.b16 %v159
    %v676 = vunpack.c.l.b16 %v160
    %v677 = vunpack.c.l.b16 %v161
    %v678 = vunpack.c.h.b16 %v161
    %v679 = vunpack.c.l.b16 %v162
    %v680 = vunpack.c.h.b16 %v162
    %v681 = vunpack.c.l.b16 %v163
    %v682 = vunpack.c.h.b16 %v163
    %v683 = vunpack.c.l.b16 %v164
    %v684 = vunpack.c.h.b16 %v164
    %v685 = vunpack.c.l.b16 %v165
    %v686 = vunpack.c.l.b16 %v166
    %v687 = vunpack.c.h.b16 %v166
    %v688 = vunpack.c.l.b16 %v167
    %v689 = vunpack.c.h.b16 %v167
    %v690 = vunpack.c.l.b16 %v168
    %v691 = vunpack.c.h.b16 %v168
    %v692 = vunpack.c.l.b16 %v169
    %v693 = vunpack.c.h.b16 %v169
    %v694 = vunpack.c.l.b16 %v170
    %v695 = vunpack.c.l.b16 %v171
    %v696 = vunpack.c.h.b16 %v171
    %v697 = vunpack.c.l.b16 %v172
    %v698 = vunpack.c.h.b16 %v172
    %v699 = vunpack.c.l.b16 %v173
    %v700 = vunpack.c.h.b16 %v173
    %v701 = vunpack.c.l.b16 %v174
    %v702 = vunpack.c.h.b16 %v174
    %v703 = vunpack.c.l.b16 %v175
    %v704 = vunpack.c.l.b16 %v176
    %v705 = vunpack.c.h.b16 %v176
    %v706 = vunpack.c.l.b16 %v177
    %v707 = vunpack.c.h.b16 %v177
    %v708 = vunpack.c.l.b16 %v178
    %v709 = vunpack.c.h.b16 %v178
    %v710 = vunpack.c.l.b16 %v179
    %v711 = vunpack.c.h.b16 %v179
    %v712 = vunpack.c.l.b16 %v180
    %v713 = vunpack.c.l.b16 %v181
    %v714 = vunpack.c.h.b16 %v181
    %v715 = vunpack.c.l.b16 %v182
    %v716 = vunpack.c.h.b16 %v182
    %v717 = vunpack.c.l.b16 %v183
    %v718 = vunpack.c.h.b16 %v183
    %v719 = vunpack.c.l.b16 %v184
    %v720 = vunpack.c.h.b16 %v184
    %v721 = vunpack.c.l.b16 %v185
    %v722 = vunpack.c.l.b16 %v186
    %v723 = vunpack.c.h.b16 %v186
    %v724 = vunpack.c.l.b16 %v187
    %v725 = vunpack.c.h.b16 %v187
    %v726 = vunpack.c.l.b16 %v188
    %v727 = vunpack.c.h.b16 %v188
    %v728 = vunpack.c.l.b16 %v189
    %v729 = vunpack.c.h.b16 %v189
    %v730 = vunpack.c.l.b16 %v190
    %v731 = vunpack.c.l.b16 %v191
    %v732 = vunpack.c.h.b16 %v191
    %v733 = vunpack.c.l.b16 %v192
    %v734 = vunpack.c.h.b16 %v192
    %v735 = vunpack.c.l.b16 %v193
    %v736 = vunpack.c.h.b16 %v193
    %v737 = vunpack.c.l.b16 %v194
    %v738 = vunpack.c.h.b16 %v194
    %v739 = vunpack.c.l.b16 %v195
    %v740 = vunpack.c.l.b16 %v196
    %v741 = vunpack.c.h.b16 %v196
    %v742 = vunpack.c.l.b16 %v197
    %v743 = vunpack.c.h.b16 %v197
    %v744 = vunpack.c.l.b16 %v198
    %v745 = vunpack.c.h.b16 %v198
    %v746 = vunpack.c.l.b16 %v199
    %v747 = vunpack.c.h.b16 %v199
    %v748 = vunpack.c.l.b16 %v200
    %v749 = vunpack.c.l.b16 %v201
    %v750 = vunpack.c.h.b16 %v201
    %v751 = vunpack.c.l.b16 %v202
    %v752 = vunpack.c.h.b16 %v202
    %v753 = vunpack.c.l.b16 %v203
    %v754 = vunpack.c.h.b16 %v203
    %v755 = vunpack.c.l.b16 %v204
    %v756 = vunpack.c.h.b16 %v204
    %v757 = vunpack.c.l.b16 %v205
    %v758 = vunpack.c.l.b16 %v206
    %v759 = vunpack.c.h.b16 %v206
    %v760 = vunpack.c.l.b16 %v207
    %v761 = vunpack.c.h.b16 %v207
    %v762 = vunpack.c.l.b16 %v208
    %v763 = vunpack.c.h.b16 %v208
    %v764 = vunpack.c.l.b16 %v209
    %v765 = vunpack.c.h.b16 %v209
    %v766 = vunpack.c.l.b16 %v210
    %v767 = vunpack.c.l.b16 %v211
    %v768 = vunpack.c.h.b16 %v211
    %v769 = vunpack.c.l.b16 %v212
    %v770 = vunpack.c.h.b16 %v212
    %v771 = vunpack.c.l.b16 %v213
    %v772 = vunpack.c.h.b16 %v213
    %v773 = vunpack.c.l.b16 %v214
    %v774 = vunpack.c.h.b16 %v214
    %v775 = vunpack.c.l.b16 %v215
    %v776 = vunpack.c.l.b16 %v216
    %v777 = vunpack.c.h.b16 %v216
    %v778 = vunpack.c.l.b16 %v217
    %v779 = vunpack.c.h.b16 %v217
    %v780 = vunpack.c.l.b16 %v218
    %v781 = vunpack.c.h.b16 %v218
    %v782 = vunpack.c.l.b16 %v219
    %v783 = vunpack.c.h.b16 %v219
    %v784 = vunpack.c.l.b16 %v220
    %v785 = vunpack.c.l.b16 %v221
    %v786 = vunpack.c.h.b16 %v221
    %v787 = vunpack.c.l.b16 %v222
    %v788 = vunpack.c.h.b16 %v222
    %v789 = vunpack.c.l.b16 %v223
    %v790 = vunpack.c.h.b16 %v223
    %v791 = vunpack.c.l.b16 %v224
    %v792 = vunpack.c.h.b16 %v224
    %v793 = vunpack.c.l.b16 %v225
    %v794 = vunpack.c.l.b16 %v226
    %v795 = vunpack.c.h.b16 %v226
    %v796 = vunpack.c.l.b16 %v227
    %v797 = vunpack.c.h.b16 %v227
    %v798 = vunpack.c.l.b16 %v228
    %v799 = vunpack.c.h.b16 %v228
    %v800 = vunpack.c.l.b16 %v229
    %v801 = vunpack.c.h.b16 %v229
    %v802 = vunpack.c.l.b16 %v230
    %v803 = vunpack.c.l.b16 %v231
    %v804 = vunpack.c.h.b16 %v231
    %v805 = vunpack.c.l.b16 %v232
    %v806 = vunpack.c.h.b16 %v232
    %v807 = vunpack.c.l.b16 %v233
    %v808 = vunpack.c.h.b16 %v233
    %v809 = vunpack.c.l.b16 %v234
    %v810 = vunpack.c.h.b16 %v234
    %v811 = vunpack.c.l.b16 %v235
    %v812 = vunpack.c.l.b16 %v236
    %v813 = vunpack.c.h.b16 %v236
    %v814 = vunpack.c.l.b16 %v237
    %v815 = vunpack.c.h.b16 %v237
    %v816 = vunpack.c.l.b16 %v238
    %v817 = vunpack.c.h.b16 %v238
    %v818 = vunpack.c.l.b16 %v239
    %v819 = vunpack.c.h.b16 %v239
    %v820 = vunpack.c.l.b16 %v240
    %v821 = vunpack.c.l.b16 %v241
    %v822 = vunpack.c.h.b16 %v241
    %v823 = vunpack.c.l.b16 %v242
    %v824 = vunpack.c.h.b16 %v242
    %v825 = vunpack.c.l.b16 %v243
    %v826 = vunpack.c.h.b16 %v243
    %v827 = vunpack.c.l.b16 %v244
    %v828 = vunpack.c.h.b16 %v244
    %v829 = vunpack.c.l.b16 %v245
    %v830 = vunpack.c.l.b16 %v246
    %v831 = vunpack.c.h.b16 %v246
    %v832 = vunpack.c.l.b16 %v247
    %v833 = vunpack.c.h.b16 %v247
    %v834 = vunpack.c.l.b16 %v248
    %v835 = vunpack.c.h.b16 %v248
    %v836 = vunpack.c.l.b16 %v249
    %v837 = vunpack.c.h.b16 %v249
    %v838 = vunpack.c.l.b16 %v250
    %v839 = vunpack.c.l.b16 %v251
    %v840 = vunpack.c.h.b16 %v251
    %v841 = vunpack.c.l.b16 %v252
    %v842 = vunpack.c.h.b16 %v252
    %v843 = vunpack.c.l.b16 %v253
    %v844 = vunpack.c.h.b16 %v253
    %v845 = vunpack.c.l.b16 %v254
    %v846 = vunpack.c.h.b16 %v254
    %v847 = vunpack.c.l.b16 %v255
    %v848 = vunpack.c.l.b16 %v256
    %v849 = vunpack.c.h.b16 %v256
    %v850 = vunpack.c.l.b16 %v257
    %v851 = vunpack.c.h.b16 %v257
    %v852 = vunpack.c.l.b16 %v258
    %v853 = vunpack.c.h.b16 %v258
    %v854 = vunpack.c.l.b16 %v259
    %v855 = vunpack.c.h.b16 %v259
    %v856 = vunpack.c.l.b16 %v260
    %v857 = vunpack.c.l.b16 %v261
    %v858 = vunpack.c.h.b16 %v261
    %v859 = vunpack.c.l.b16 %v262
    %v860 = vunpack.c.h.b16 %v262
    %v861 = vunpack.c.l.b16 %v263
    %v862 = vunpack.c.h.b16 %v263
    %v863 = vunpack.c.l.b16 %v264
    %v864 = vunpack.c.h.b16 %v264
    %v865 = vunpack.c.l.b16 %v265
    %v866 = vunpack.c.l.b16 %v266
    %v867 = vunpack.c.h.b16 %v266
    %v868 = vunpack.c.l.b16 %v267
    %v869 = vunpack.c.h.b16 %v267
    %v870 = vunpack.c.l.b16 %v268
    %v871 = vunpack.c.h.b16 %v268
    %v872 = vunpack.c.l.b16 %v269
    %v873 = vunpack.c.h.b16 %v269
    %v874 = vunpack.c.l.b16 %v270
    %v875 = vunpack.c.l.b16 %v271
    %v876 = vunpack.c.h.b16 %v271
    %v877 = vunpack.c.l.b16 %v272
    %v878 = vunpack.c.h.b16 %v272
    %v879 = vunpack.c.l.b16 %v273
    %v880 = vunpack.c.h.b16 %v273
    %v881 = vunpack.c.l.b16 %v274
    %v882 = vunpack.c.h.b16 %v274
    %v883 = vunpack.c.l.b16 %v275
    %v884 = vunpack.c.l.b16 %v276
    %v885 = vunpack.c.h.b16 %v276
    %v886 = vunpack.c.l.b16 %v277
    %v887 = vunpack.c.h.b16 %v277
    %v888 = vunpack.c.l.b16 %v278
    %v889 = vunpack.c.h.b16 %v278
    %v890 = vunpack.c.l.b16 %v279
    %v891 = vunpack.c.h.b16 %v279
    %v892 = vunpack.c.l.b16 %v280
    %v893 = vunpack.c.l.b16 %v281
    %v894 = vunpack.c.h.b16 %v281
    %v895 = vunpack.c.l.b16 %v282
    %v896 = vunpack.c.h.b16 %v282
    %v897 = vunpack.c.l.b16 %v283
    %v898 = vunpack.c.h.b16 %v283
    %v899 = vunpack.c.l.b16 %v284
    %v900 = vunpack.c.h.b16 %v284
    %v901 = vunpack.c.l.b16 %v285
    %v902 = vunpack.c.l.b16 %v286
    %v903 = vunpack.c.h.b16 %v286
    %v904 = vunpack.c.l.b16 %v287
    %v905 = vunpack.c.h.b16 %v287
    %v906 = vunpack.c.l.b16 %v288
    %v907 = vunpack.c.h.b16 %v288
    %v908 = vunpack.c.l.b16 %v289
    %v909 = vunpack.c.h.b16 %v289
    %v910 = vunpack.c.l.b16 %v290
    %v911 = vunpack.c.l.b16 %v291
    %v912 = vunpack.c.h.b16 %v291
    %v913 = vunpack.c.l.b16 %v292
    %v914 = vunpack.c.h.b16 %v292
    %v915 = vunpack.c.l.b16 %v293
    %v916 = vunpack.c.h.b16 %v293
    %v917 = vunpack.c.l.b16 %v294
    %v918 = vunpack.c.h.b16 %v294
    %v919 = vunpack.c.l.b16 %v295
    %v920 = vunpack.c.l.b16 %v296
    %v921 = vunpack.c.h.b16 %v296
    %v922 = vunpack.c.l.b16 %v297
    %v923 = vunpack.c.h.b16 %v297
    %v924 = vunpack.c.l.b16 %v298
    %v925 = vunpack.c.h.b16 %v298
    %v926 = vunpack.c.l.b16 %v299
    %v927 = vunpack.c.h.b16 %v299
    %v928 = vunpack.c.l.b16 %v300
    %v929 = vunpack.c.l.b16 %v301
    %v930 = vunpack.c.h.b16 %v301
    %v931 = vunpack.c.l.b16 %v302
    %v932 = vunpack.c.h.b16 %v302
    %v933 = vunpack.c.l.b16 %v303
    %v934 = vunpack.c.h.b16 %v303
    %v935 = vunpack.c.l.b16 %v304
    %v936 = vunpack.c.h.b16 %v304
    %v937 = vunpack.c.l.b16 %v305
    %v938 = vunpack.c.l.b16 %v306
    %v939 = vunpack.c.h.b16 %v306
    %v940 = vunpack.c.l.b16 %v307
    %v941 = vunpack.c.h.b16 %v307
    %v942 = vunpack.c.l.b16 %v308
    %v943 = vunpack.c.h.b16 %v308
    %v944 = vunpack.c.l.b16 %v309
    %v945 = vunpack.c.h.b16 %v309
    %v946 = vunpack.c.l.b16 %v310
    %v947 = vunpack.c.l.b16 %v311
    %v948 = vunpack.c.h.b16 %v311
    %v949 = vunpack.c.l.b16 %v312
    %v950 = vunpack.c.h.b16 %v312
    %v951 = vunpack.c.l.b16 %v313
    %v952 = vunpack.c.h.b16 %v313
    %v953 = vunpack.c.l.b16 %v314
    %v954 = vunpack.c.h.b16 %v314
    %v955 = vunpack.c.l.b16 %v315
    %v956 = vunpack.c.l.b16 %v316
    %v957 = vunpack.c.h.b16 %v316
    %v958 = vunpack.c.l.b16 %v317
    %v959 = vunpack.c.h.b16 %v317
    %v960 = vunpack.c.l.b16 %v318
    %v961 = vunpack.c.h.b16 %v318
    %v962 = vunpack.c.l.b16 %v319
    %v963 = vunpack.c.h.b16 %v319
    %v964 = vunpack.c.l.b16 %v320
    %v965 = vunpack.c.l.b16 %v321
    %v966 = vunpack.c.h.b16 %v321
    %v967 = vunpack.c.l.b16 %v322
    %v968 = vunpack.c.h.b16 %v322
    %v969 = vunpack.c.l.b16 %v323
    %v970 = vunpack.c.h.b16 %v323
    %v971 = vunpack.c.l.b16 %v324
    %v972 = vunpack.c.h.b16 %v324
    %v973 = vunpack.c.l.b16 %v325
    %v974 = vunpack.c.l.b16 %v326
    %v975 = vunpack.c.h.b16 %v326
    %v976 = vunpack.c.l.b16 %v327
    %v977 = vunpack.c.h.b16 %v327
    %v978 = vunpack.c.l.b16 %v328
    %v979 = vunpack.c.h.b16 %v328
    %v980 = vunpack.c.l.b16 %v329
    %v981 = vunpack.c.h.b16 %v329
    %v982 = vunpack.c.l.b16 %v330
    %v983 = vunpack.c.l.b16 %v331
    %v984 = vunpack.c.h.b16 %v331
    %v985 = vunpack.c.l.b16 %v332
    %v986 = vunpack.c.h.b16 %v332
    %v987 = vunpack.c.l.b16 %v333
    %v988 = vunpack.c.h.b16 %v333
    %v989 = vunpack.c.l.b16 %v334
    %v990 = vunpack.c.h.b16 %v334
    %v991 = vunpack.c.l.b16 %v335
    %v992 = vunpack.c.l.b16 %v336
    %v993 = vunpack.c.h.b16 %v336
    %v994 = vunpack.c.l.b16 %v337
    %v995 = vunpack.c.h.b16 %v337
    %v996 = vunpack.c.l.b16 %v338
    %v997 = vunpack.c.h.b16 %v338
    %v998 = vunpack.c.l.b16 %v339
    %v999 = vunpack.c.h.b16 %v339
    %v1000 = vunpack.c.l.b16 %v340
    %v1001 = vunpack.c.l.b16 %v341
    %v1002 = vunpack.c.h.b16 %v341
    %v1003 = vunpack.c.l.b16 %v342
    %v1004 = vunpack.c.h.b16 %v342
    %v1005 = vunpack.c.l.b16 %v343
    %v1006 = vunpack.c.h.b16 %v343
    %v1007 = vunpack.c.l.b16 %v344
    %v1008 = vunpack.c.h.b16 %v344
    %v1009 = vunpack.c.l.b16 %v345
    %v1010 = vunpack.c.l.b16 %v346
    %v1011 = vunpack.c.h.b16 %v346
    %v1012 = vunpack.c.l.b16 %v347
    %v1013 = vunpack.c.h.b16 %v347
    %v1014 = vunpack.c.l.b16 %v348
    %v1015 = vunpack.c.h.b16 %v348
    %v1016 = vunpack.c.l.b16 %v349
    %v1017 = vunpack.c.h.b16 %v349
    %v1018 = vunpack.c.l.b16 %v350
    %v1019 = vunpack.c.l.b16 %v351
    %v1020 = vunpack.c.h.b16 %v351
    %v1021 = vunpack.c.l.b16 %v352
    %v1022 = vunpack.c.h.b16 %v352
    %v1023 = vunpack.c.l.b16 %v353
    %v1024 = vunpack.c.h.b16 %v353
    %v1025 = vunpack.c.l.b16 %v354
    %v1026 = vunpack.c.h.b16 %v354
    %v1027 = vunpack.c.l.b16 %v355
    %v1028 = vpack.c.b16 %v605, %v596
    %v1029 = vpack.c.b16 %v606, %v597
    %v1030 = vpack.c.b16 %v607, %v598
    %v1031 = vpack.c.b16 %v608, %v599
    %v1032 = vpack.c.b16 %v609, %v600
    %v1033 = vpack.c.b16 %v610, %v601
    %v1034 = vpack.c.b16 %v611, %v602
    %v1035 = vpack.c.b16 %v612, %v603
    %v1036 = vpack.c.b16 %v613, %v604
    %v1037 = vpack.c.b16 %v623, %v614
    %v1038 = vpack.c.b16 %v624, %v615
    %v1039 = vpack.c.b16 %v625, %v616
    %v1040 = vpack.c.b16 %v626, %v617
    %v1041 = vpack.c.b16 %v627, %v618
    %v1042 = vpack.c.b16 %v628, %v619
    %v1043 = vpack.c.b16 %v629, %v620
    %v1044 = vpack.c.b16 %v630, %v621
    %v1045 = vpack.c.b16 %v631, %v622
    %v1046 = vpack.c.b16 %v641, %v632
    %v1047 = vpack.c.b16 %v642, %v633
    %v1048 = vpack.c.b16 %v643, %v634
    %v1049 = vpack.c.b16 %v644, %v635
    %v1050 = vpack.c.b16 %v645, %v636
    %v1051 = vpack.c.b16 %v646, %v637
    %v1052 = vpack.c.b16 %v647, %v638
    %v1053 = vpack.c.b16 %v648, %v639
    %v1054 = vpack.c.b16 %v649, %v640
    %v1055 = vpack.c.b16 %v659, %v650
    %v1056 = vpack.c.b16 %v660, %v651
    %v1057 = vpack.c.b16 %v661, %v652
    %v1058 = vpack.c.b16 %v662, %v653
    %v1059 = vpack.c.b16 %v663, %v654
    %v1060 = vpack.c.b16 %v664, %v655
    %v1061 = vpack.c.b16 %v665, %v656
    %v1062 = vpack.c.b16 %v666, %v657
    %v1063 = vpack.c.b16 %v667, %v658
    %v1064 = vpack.c.b16 %v677, %v668
    %v1065 = vpack.c.b16 %v678, %v669
    %v1066 = vpack.c.b16 %v679, %v670
    %v1067 = vpack.c.b16 %v680, %v671
    %v1068 = vpack.c.b16 %v681, %v672
    %v1069 = vpack.c.b16 %v682, %v673
    %v1070 = vpack.c.b16 %v683, %v674
    %v1071 = vpack.c.b16 %v684, %v675
    %v1072 = vpack.c.b16 %v685, %v676
    %v1073 = vpack.c.b16 %v695, %v686
    %v1074 = vpack.c.b16 %v696, %v687
    %v1075 = vpack.c.b16 %v697, %v688
    %v1076 = vpack.c.b16 %v698, %v689
    %v1077 = vpack.c.b16 %v699, %v690
    %v1078 = vpack.c.b16 %v700, %v691
    %v1079 = vpack.c.b16 %v701, %v692
    %v1080 = vpack.c.b16 %v702, %v693
    %v1081 = vpack.c.b16 %v703, %v694
    %v1082 = vpack.c.b16 %v713, %v704
    %v1083 = vpack.c.b16 %v714, %v705
    %v1084 = vpack.c.b16 %v715, %v706
    %v1085 = vpack.c.b16 %v716, %v707
    %v1086 = vpack.c.b16 %v717, %v708
    %v1087 = vpack.c.b16 %v718, %v709
    %v1088 = vpack.c.b16 %v719, %v710
    %v1089 = vpack.c.b16 %v720, %v711
    %v1090 = vpack.c.b16 %v721, %v712
    %v1091 = vpack.c.b16 %v731, %v722
    %v1092 = vpack.c.b16 %v732, %v723
    %v1093 = vpack.c.b16 %v733, %v724
    %v1094 = vpack.c.b16 %v734, %v725
    %v1095 = vpack.c.b16 %v735, %v726
    %v1096 = vpack.c.b16 %v736, %v727
    %v1097 = vpack.c.b16 %v737, %v728
    %v1098 = vpack.c.b16 %v738, %v729
    %v1099 = vpack.c.b16 %v739, %v730
    %v1100 = vpack.c.b16 %v749, %v740
    %v1101 = vpack.c.b16 %v750, %v741
    %v1102 = vpack.c.b16 %v751, %v742
    %v1103 = vpack.c.b16 %v752, %v743
    %v1104 = vpack.c.b16 %v753, %v744
    %v1105 = vpack.c.b16 %v754, %v745
    %v1106 = vpack.c.b16 %v755, %v746
    %v1107 = vpack.c.b16 %v756, %v747
    %v1108 = vpack.c.b16 %v757, %v748
    %v1109 = vpack.c.b16 %v767, %v758
    %v1110 = vpack.c.b16 %v768, %v759
    %v1111 = vpack.c.b16 %v769, %v760
    %v1112 = vpack.c.b16 %v770, %v761
    %v1113 = vpack.c.b16 %v771, %v762
    %v1114 = vpack.c.b16 %v772, %v763
    %v1115 = vpack.c.b16 %v773, %v764
    %v1116 = vpack.c.b16 %v774, %v765
    %v1117 = vpack.c.b16 %v775, %v766
    %v1118 = vpack.c.b16 %v785, %v776
    %v1119 = vpack.c.b16 %v786, %v777
    %v1120 = vpack.c.b16 %v787, %v778
    %v1121 = vpack.c.b16 %v788, %v779
    %v1122 = vpack.c.b16 %v789, %v780
    %v1123 = vpack.c.b16 %v790, %v781
    %v1124 = vpack.c.b16 %v791, %v782
    %v1125 = vpack.c.b16 %v792, %v783
    %v1126 = vpack.c.b16 %v793, %v784
    %v1127 = vpack.c.b16 %v803, %v794
    %v1128 = vpack.c.b16 %v804, %v795
    %v1129 = vpack.c.b16 %v805, %v796
    %v1130 = vpack.c.b16 %v806, %v797
    %v1131 = vpack.c.b16 %v807, %v798
    %v1132 = vpack.c.b16 %v808, %v799
    %v1133 = vpack.c.b16 %v809, %v800
    %v1134 = vpack.c.b16 %v810, %v801
    %v1135 = vpack.c.b16 %v811, %v802
    %v1136 = vpack.c.b16 %v821, %v812
    %v1137 = vpack.c.b16 %v822, %v813
    %v1138 = vpack.c.b16 %v823, %v814
    %v1139 = vpack.c.b16 %v824, %v815
    %v1140 = vpack.c.b16 %v825, %v816
    %v1141 = vpack.c.b16 %v826, %v817
    %v1142 = vpack.c.b16 %v827, %v818
    %v1143 = vpack.c.b16 %v828, %v819
    %v1144 = vpack.c.b16 %v829, %v820
    %v1145 = vpack.c.b16 %v839, %v830
    %v1146 = vpack.c.b16 %v840, %v831
    %v1147 = vpack.c.b16 %v841, %v832
    %v1148 = vpack.c.b16 %v842, %v833
    %v1149 = vpack.c.b16 %v843, %v834
    %v1150 = vpack.c.b16 %v844, %v835
    %v1151 = vpack.c.b16 %v845, %v836
    %v1152 = vpack.c.b16 %v846, %v837
    %v1153 = vpack.c.b16 %v847, %v838
    %v1154 = vpack.c.b16 %v857, %v848
    %v1155 = vpack.c.b16 %v858, %v849
    %v1156 = vpack.c.b16 %v859, %v850
    %v1157 = vpack.c.b16 %v860, %v851
    %v1158 = vpack.c.b16 %v861, %v852
    %v1159 = vpack.c.b16 %v862, %v853
    %v1160 = vpack.c.b16 %v863, %v854
    %v1161 = vpack.c.b16 %v864, %v855
    %v1162 = vpack.c.b16 %v865, %v856
    %v1163 = vpack.c.b16 %v875, %v866
    %v1164 = vpack.c.b16 %v876, %v867
    %v1165 = vpack.c.b16 %v877, %v868
    %v1166 = vpack.c.b16 %v878, %v869
    %v1167 = vpack.c.b16 %v879, %v870
    %v1168 = vpack.c.b16 %v880, %v871
    %v1169 = vpack.c.b16 %v881, %v872
    %v1170 = vpack.c.b16 %v882, %v873
    %v1171 = vpack.c.b16 %v883, %v874
    %v1172 = vpack.c.b16 %v893, %v884
    %v1173 = vpack.c.b16 %v894, %v885
    %v1174 = vpack.c.b16 %v895, %v886
    %v1175 = vpack.c.b16 %v896, %v887
    %v1176 = vpack.c.b16 %v897, %v888
    %v1177 = vpack.c.b16 %v898, %v889
    %v1178 = vpack.c.b16 %v899, %v890
    %v1179 = vpack.c.b16 %v900, %v891
    %v1180 = vpack.c.b16 %v901, %v892
    %v1181 = vpack.c.b16 %v911, %v902
    %v1182 = vpack.c.b16 %v912, %v903
    %v1183 = vpack.c.b16 %v913, %v904
    %v1184 = vpack.c.b16 %v914, %v905
    %v1185 = vpack.c.b16 %v915, %v906
    %v1186 = vpack.c.b16 %v916, %v907
    %v1187 = vpack.c.b16 %v917, %v908
    %v1188 = vpack.c.b16 %v918, %v909
    %v1189 = vpack.c.b16 %v919, %v910
    %v1190 = vpack.c.b16 %v929, %v920
    %v1191 = vpack.c.b16 %v930, %v921
    %v1192 = vpack.c.b16 %v931, %v922
    %v1193 = vpack.c.b16 %v932, %v923
    %v1194 = vpack.c.b16 %v933, %v924
    %v1195 = vpack.c.b16 %v934, %v925
    %v1196 = vpack.c.b16 %v935, %v926
    %v1197 = vpack.c.b16 %v936, %v927
    %v1198 = vpack.c.b16 %v937, %v928
    %v1199 = vpack.c.b16 %v947, %v938
    %v1200 = vpack.c.b16 %v948, %v939
    %v1201 = vpack.c.b16 %v949, %v940
    %v1202 = vpack.c.b16 %v950, %v941
    %v1203 = vpack.c.b16 %v951, %v942
    %v1204 = vpack.c.b16 %v952, %v943
    %v1205 = vpack.c.b16 %v953, %v944
    %v1206 = vpack.c.b16 %v954, %v945
    %v1207 = vpack.c.b16 %v955, %v946
    %v1208 = vpack.c.b16 %v965, %v956
    %v1209 = vpack.c.b16 %v966, %v957
    %v1210 = vpack.c.b16 %v967, %v958
    %v1211 = vpack.c.b16 %v968, %v959
    %v1212 = vpack.c.b16 %v969, %v960
    %v1213 = vpack.c.b16 %v970, %v961
    %v1214 = vpack.c.b16 %v971, %v962
    %v1215 = vpack.c.b16 %v972, %v963
    %v1216 = vpack.c.b16 %v973, %v964
    %v1217 = vpack.c.b16 %v983, %v974
    %v1218 = vpack.c.b16 %v984, %v975
    %v1219 = vpack.c.b16 %v985, %v976
    %v1220 = vpack.c.b16 %v986, %v977
    %v1221 = vpack.c.b16 %v987, %v978
    %v1222 = vpack.c.b16 %v988, %v979
    %v1223 = vpack.c.b16 %v989, %v980
    %v1224 = vpack.c.b16 %v990, %v981
    %v1225 = vpack.c.b16 %v991, %v982
    %v1226 = vpack.c.b16 %v1001, %v992
    %v1227 = vpack.c.b16 %v1002, %v993
    %v1228 = vpack.c.b16 %v1003, %v994
    %v1229 = vpack.c.b16 %v1004, %v995
    %v1230 = vpack.c.b16 %v1005, %v996
    %v1231 = vpack.c.b16 %v1006, %v997
    %v1232 = vpack.c.b16 %v1007, %v998
    %v1233 = vpack.c.b16 %v1008, %v999
    %v1234 = vpack.c.b16 %v1009, %v1000
    %v1235 = vpack.c.b16 %v1019, %v1010
    %v1236 = vpack.c.b16 %v1020, %v1011
    %v1237 = vpack.c.b16 %v1021, %v1012
    %v1238 = vpack.c.b16 %v1022, %v1013
    %v1239 = vpack.c.b16 %v1023, %v1014
    %v1240 = vpack.c.b16 %v1024, %v1015
    %v1241 = vpack.c.b16 %v1025, %v1016
    %v1242 = vpack.c.b16 %v1026, %v1017
    %v1243 = vpack.c.b16 %v1027, %v1018
    %1460 = vmatpush.bf16.msra.mxu0 %v1091
    %1461 = vmatpush.bf16.msra.mxu0 %v1082
    %1462 = vmatpush.bf16.msra.mxu0 %v1073
    %1463 = vmatpush.bf16.msra.mxu0 %v1064
    %1464 = vmatpush.bf16.msra.mxu0 %v1055
    %1465 = vmatpush.bf16.msra.mxu0 %v1046
    %1466 = vmatpush.bf16.msra.mxu0 %v1037
    %1467 = vmatpush.bf16.msra.mxu0 %v1028
    %1468 = vmatmul.bf16.gmra.mxu0 %v104
    %v1469 = vpop.f32.mrf.mxu0
    %v1470 = vadd.f32 0.0, %v1469
    %v1471 = vpop.f32.mrf.mxu0
    %v1472 = vadd.f32 0.0, %v1471
    %1473 = vmatmul.bf16.gmra.mxu0 %v107
    %v1474 = vpop.f32.mrf.mxu0
    %v1475 = vadd.f32 0.0, %v1474
    %v1476 = vpop.f32.mrf.mxu0
    %v1477 = vadd.f32 0.0, %v1476
    %1478 = vmatmul.bf16.gmra.mxu0 %v110
    %v1479 = vpop.f32.mrf.mxu0
    %v1480 = vadd.f32 0.0, %v1479
    %v1481 = vpop.f32.mrf.mxu0
    %v1482 = vadd.f32 0.0, %v1481
    %1483 = vmatmul.bf16.gmra.mxu0 %v113
    %v1484 = vpop.f32.mrf.mxu0
    %v1485 = vadd.f32 0.0, %v1484
    %v1486 = vpop.f32.mrf.mxu0
    %v1487 = vadd.f32 0.0, %v1486
    %1488 = vdwg.mxu0
    %1489 = vmatpush.bf16.msra.mxu0 %v1163
    %1490 = vmatpush.bf16.msra.mxu0 %v1154
    %1491 = vmatpush.bf16.msra.mxu0 %v1145
    %1492 = vmatpush.bf16.msra.mxu0 %v1136
    %1493 = vmatpush.bf16.msra.mxu0 %v1127
    %1494 = vmatpush.bf16.msra.mxu0 %v1118
    %1495 = vmatpush.bf16.msra.mxu0 %v1109
    %1496 = vmatpush.bf16.msra.mxu0 %v1100
    %1497 = vmatmul.bf16.gmra.mxu0 %v105
    %v1498 = vpop.f32.mrf.mxu0
    %v1499 = vadd.f32 %v1470, %v1498
    %v1500 = vpop.f32.mrf.mxu0
    %v1501 = vadd.f32 %v1472, %v1500
    %1502 = vmatmul.bf16.gmra.mxu0 %v108
    %v1503 = vpop.f32.mrf.mxu0
    %v1504 = vadd.f32 %v1475, %v1503
    %v1505 = vpop.f32.mrf.mxu0
    %v1506 = vadd.f32 %v1477, %v1505
    %1507 = vmatmul.bf16.gmra.mxu0 %v111
    %v1508 = vpop.f32.mrf.mxu0
    %v1509 = vadd.f32 %v1480, %v1508
    %v1510 = vpop.f32.mrf.mxu0
    %v1511 = vadd.f32 %v1482, %v1510
    %1512 = vmatmul.bf16.gmra.mxu0 %v114
    %v1513 = vpop.f32.mrf.mxu0
    %v1514 = vadd.f32 %v1485, %v1513
    %v1515 = vpop.f32.mrf.mxu0
    %v1516 = vadd.f32 %v1487, %v1515
    %1517 = vdwg.mxu0
    %1518 = vmatpush.bf16.msra.mxu0 %v1235
    %1519 = vmatpush.bf16.msra.mxu0 %v1226
    %1520 = vmatpush.bf16.msra.mxu0 %v1217
    %1521 = vmatpush.bf16.msra.mxu0 %v1208
    %1522 = vmatpush.bf16.msra.mxu0 %v1199
    %1523 = vmatpush.bf16.msra.mxu0 %v1190
    %1524 = vmatpush.bf16.msra.mxu0 %v1181
    %1525 = vmatpush.bf16.msra.mxu0 %v1172
    %1526 = vmatmul.bf16.gmra.mxu0 %v106
    %v1527 = vpop.f32.mrf.mxu0
    %v1528 = vadd.f32 %v1499, %v1527
    %v1529 = vpop.f32.mrf.mxu0
    %v1530 = vadd.f32 %v1501, %v1529
    %1531 = vmatmul.bf16.gmra.mxu0 %v109
    %v1532 = vpop.f32.mrf.mxu0
    %v1533 = vadd.f32 %v1504, %v1532
    %v1534 = vpop.f32.mrf.mxu0
    %v1535 = vadd.f32 %v1506, %v1534
    %1536 = vmatmul.bf16.gmra.mxu0 %v112
    %v1537 = vpop.f32.mrf.mxu0
    %v1538 = vadd.f32 %v1509, %v1537
    %v1539 = vpop.f32.mrf.mxu0
    %v1540 = vadd.f32 %v1511, %v1539
    %1541 = vmatmul.bf16.gmra.mxu0 %v115
    %v1542 = vpop.f32.mrf.mxu0
    %v1543 = vadd.f32 %v1514, %v1542
    %v1544 = vpop.f32.mrf.mxu0
    %v1545 = vadd.f32 %v1516, %v1544
    %1546 = vdwg.mxu0
    %1547 = vmatpush.bf16.msra.mxu0 %v1092
    %1548 = vmatpush.bf16.msra.mxu0 %v1083
    %1549 = vmatpush.bf16.msra.mxu0 %v1074
    %1550 = vmatpush.bf16.msra.mxu0 %v1065
    %1551 = vmatpush.bf16.msra.mxu0 %v1056
    %1552 = vmatpush.bf16.msra.mxu0 %v1047
    %1553 = vmatpush.bf16.msra.mxu0 %v1038
    %1554 = vmatpush.bf16.msra.mxu0 %v1029
    %1555 = vmatmul.bf16.gmra.mxu0 %v104
    %v1556 = vpop.f32.mrf.mxu0
    %v1557 = vadd.f32 0.0, %v1556
    %v1558 = vpop.f32.mrf.mxu0
    %v1559 = vadd.f32 0.0, %v1558
    %1560 = vmatmul.bf16.gmra.mxu0 %v107
    %v1561 = vpop.f32.mrf.mxu0
    %v1562 = vadd.f32 0.0, %v1561
    %v1563 = vpop.f32.mrf.mxu0
    %v1564 = vadd.f32 0.0, %v1563
    %1565 = vmatmul.bf16.gmra.mxu0 %v110
    %v1566 = vpop.f32.mrf.mxu0
    %v1567 = vadd.f32 0.0, %v1566
    %v1568 = vpop.f32.mrf.mxu0
    %v1569 = vadd.f32 0.0, %v1568
    %1570 = vmatmul.bf16.gmra.mxu0 %v113
    %v1571 = vpop.f32.mrf.mxu0
    %v1572 = vadd.f32 0.0, %v1571
    %v1573 = vpop.f32.mrf.mxu0
    %v1574 = vadd.f32 0.0, %v1573
    %1575 = vdwg.mxu0
    %1576 = vmatpush.bf16.msra.mxu0 %v1164
    %1577 = vmatpush.bf16.msra.mxu0 %v1155
    %1578 = vmatpush.bf16.msra.mxu0 %v1146
    %1579 = vmatpush.bf16.msra.mxu0 %v1137
    %1580 = vmatpush.bf16.msra.mxu0 %v1128
    %1581 = vmatpush.bf16.msra.mxu0 %v1119
    %1582 = vmatpush.bf16.msra.mxu0 %v1110
    %1583 = vmatpush.bf16.msra.mxu0 %v1101
    %1584 = vmatmul.bf16.gmra.mxu0 %v105
    %v1585 = vpop.f32.mrf.mxu0
    %v1586 = vadd.f32 %v1557, %v1585
    %v1587 = vpop.f32.mrf.mxu0
    %v1588 = vadd.f32 %v1559, %v1587
    %1589 = vmatmul.bf16.gmra.mxu0 %v108
    %v1590 = vpop.f32.mrf.mxu0
    %v1591 = vadd.f32 %v1562, %v1590
    %v1592 = vpop.f32.mrf.mxu0
    %v1593 = vadd.f32 %v1564, %v1592
    %1594 = vmatmul.bf16.gmra.mxu0 %v111
    %v1595 = vpop.f32.mrf.mxu0
    %v1596 = vadd.f32 %v1567, %v1595
    %v1597 = vpop.f32.mrf.mxu0
    %v1598 = vadd.f32 %v1569, %v1597
    %1599 = vmatmul.bf16.gmra.mxu0 %v114
    %v1600 = vpop.f32.mrf.mxu0
    %v1601 = vadd.f32 %v1572, %v1600
    %v1602 = vpop.f32.mrf.mxu0
    %v1603 = vadd.f32 %v1574, %v1602
    %1604 = vdwg.mxu0
    %1605 = vmatpush.bf16.msra.mxu0 %v1236
    %1606 = vmatpush.bf16.msra.mxu0 %v1227
    %1607 = vmatpush.bf16.msra.mxu0 %v1218
    %1608 = vmatpush.bf16.msra.mxu0 %v1209
    %1609 = vmatpush.bf16.msra.mxu0 %v1200
    %1610 = vmatpush.bf16.msra.mxu0 %v1191
    %1611 = vmatpush.bf16.msra.mxu0 %v1182
    %1612 = vmatpush.bf16.msra.mxu0 %v1173
    %1613 = vmatmul.bf16.gmra.mxu0 %v106
    %v1614 = vpop.f32.mrf.mxu0
    %v1615 = vadd.f32 %v1586, %v1614
    %v1616 = vpop.f32.mrf.mxu0
    %v1617 = vadd.f32 %v1588, %v1616
    %1618 = vmatmul.bf16.gmra.mxu0 %v109
    %v1619 = vpop.f32.mrf.mxu0
    %v1620 = vadd.f32 %v1591, %v1619
    %v1621 = vpop.f32.mrf.mxu0
    %v1622 = vadd.f32 %v1593, %v1621
    %1623 = vmatmul.bf16.gmra.mxu0 %v112
    %v1624 = vpop.f32.mrf.mxu0
    %v1625 = vadd.f32 %v1596, %v1624
    %v1626 = vpop.f32.mrf.mxu0
    %v1627 = vadd.f32 %v1598, %v1626
    %1628 = vmatmul.bf16.gmra.mxu0 %v115
    %v1629 = vpop.f32.mrf.mxu0
    %v1630 = vadd.f32 %v1601, %v1629
    %v1631 = vpop.f32.mrf.mxu0
    %v1632 = vadd.f32 %v1603, %v1631
    %1633 = vdwg.mxu0
    %1634 = vmatpush.bf16.msra.mxu0 %v1093
    %1635 = vmatpush.bf16.msra.mxu0 %v1084
    %1636 = vmatpush.bf16.msra.mxu0 %v1075
    %1637 = vmatpush.bf16.msra.mxu0 %v1066
    %1638 = vmatpush.bf16.msra.mxu0 %v1057
    %1639 = vmatpush.bf16.msra.mxu0 %v1048
    %1640 = vmatpush.bf16.msra.mxu0 %v1039
    %1641 = vmatpush.bf16.msra.mxu0 %v1030
    %1642 = vmatmul.bf16.gmra.mxu0 %v104
    %v1643 = vpop.f32.mrf.mxu0
    %v1644 = vadd.f32 0.0, %v1643
    %v1645 = vpop.f32.mrf.mxu0
    %v1646 = vadd.f32 0.0, %v1645
    %1647 = vmatmul.bf16.gmra.mxu0 %v107
    %v1648 = vpop.f32.mrf.mxu0
    %v1649 = vadd.f32 0.0, %v1648
    %v1650 = vpop.f32.mrf.mxu0
    %v1651 = vadd.f32 0.0, %v1650
    %1652 = vmatmul.bf16.gmra.mxu0 %v110
    %v1653 = vpop.f32.mrf.mxu0
    %v1654 = vadd.f32 0.0, %v1653
    %v1655 = vpop.f32.mrf.mxu0
    %v1656 = vadd.f32 0.0, %v1655
    %1657 = vmatmul.bf16.gmra.mxu0 %v113
    %v1658 = vpop.f32.mrf.mxu0
    %v1659 = vadd.f32 0.0, %v1658
    %v1660 = vpop.f32.mrf.mxu0
    %v1661 = vadd.f32 0.0, %v1660
    %1662 = vdwg.mxu0
    %1663 = vmatpush.bf16.msra.mxu0 %v1165
    %1664 = vmatpush.bf16.msra.mxu0 %v1156
    %1665 = vmatpush.bf16.msra.mxu0 %v1147
    %1666 = vmatpush.bf16.msra.mxu0 %v1138
    %1667 = vmatpush.bf16.msra.mxu0 %v1129
    %1668 = vmatpush.bf16.msra.mxu0 %v1120
    %1669 = vmatpush.bf16.msra.mxu0 %v1111
    %1670 = vmatpush.bf16.msra.mxu0 %v1102
    %1671 = vmatmul.bf16.gmra.mxu0 %v105
    %v1672 = vpop.f32.mrf.mxu0
    %v1673 = vadd.f32 %v1644, %v1672
    %v1674 = vpop.f32.mrf.mxu0
    %v1675 = vadd.f32 %v1646, %v1674
    %1676 = vmatmul.bf16.gmra.mxu0 %v108
    %v1677 = vpop.f32.mrf.mxu0
    %v1678 = vadd.f32 %v1649, %v1677
    %v1679 = vpop.f32.mrf.mxu0
    %v1680 = vadd.f32 %v1651, %v1679
    %1681 = vmatmul.bf16.gmra.mxu0 %v111
    %v1682 = vpop.f32.mrf.mxu0
    %v1683 = vadd.f32 %v1654, %v1682
    %v1684 = vpop.f32.mrf.mxu0
    %v1685 = vadd.f32 %v1656, %v1684
    %1686 = vmatmul.bf16.gmra.mxu0 %v114
    %v1687 = vpop.f32.mrf.mxu0
    %v1688 = vadd.f32 %v1659, %v1687
    %v1689 = vpop.f32.mrf.mxu0
    %v1690 = vadd.f32 %v1661, %v1689
    %1691 = vdwg.mxu0
    %1692 = vmatpush.bf16.msra.mxu0 %v1237
    %1693 = vmatpush.bf16.msra.mxu0 %v1228
    %1694 = vmatpush.bf16.msra.mxu0 %v1219
    %1695 = vmatpush.bf16.msra.mxu0 %v1210
    %1696 = vmatpush.bf16.msra.mxu0 %v1201
    %1697 = vmatpush.bf16.msra.mxu0 %v1192
    %1698 = vmatpush.bf16.msra.mxu0 %v1183
    %1699 = vmatpush.bf16.msra.mxu0 %v1174
    %1700 = vmatmul.bf16.gmra.mxu0 %v106
    %v1701 = vpop.f32.mrf.mxu0
    %v1702 = vadd.f32 %v1673, %v1701
    %v1703 = vpop.f32.mrf.mxu0
    %v1704 = vadd.f32 %v1675, %v1703
    %1705 = vmatmul.bf16.gmra.mxu0 %v109
    %v1706 = vpop.f32.mrf.mxu0
    %v1707 = vadd.f32 %v1678, %v1706
    %v1708 = vpop.f32.mrf.mxu0
    %v1709 = vadd.f32 %v1680, %v1708
    %1710 = vmatmul.bf16.gmra.mxu0 %v112
    %v1711 = vpop.f32.mrf.mxu0
    %v1712 = vadd.f32 %v1683, %v1711
    %v1713 = vpop.f32.mrf.mxu0
    %v1714 = vadd.f32 %v1685, %v1713
    %1715 = vmatmul.bf16.gmra.mxu0 %v115
    %v1716 = vpop.f32.mrf.mxu0
    %v1717 = vadd.f32 %v1688, %v1716
    %v1718 = vpop.f32.mrf.mxu0
    %v1719 = vadd.f32 %v1690, %v1718
    %1720 = vdwg.mxu0
    %1721 = vmatpush.bf16.msra.mxu0 %v1094
    %1722 = vmatpush.bf16.msra.mxu0 %v1085
    %1723 = vmatpush.bf16.msra.mxu0 %v1076
    %1724 = vmatpush.bf16.msra.mxu0 %v1067
    %1725 = vmatpush.bf16.msra.mxu0 %v1058
    %1726 = vmatpush.bf16.msra.mxu0 %v1049
    %1727 = vmatpush.bf16.msra.mxu0 %v1040
    %1728 = vmatpush.bf16.msra.mxu0 %v1031
    %1729 = vmatmul.bf16.gmra.mxu0 %v104
    %v1730 = vpop.f32.mrf.mxu0
    %v1731 = vadd.f32 0.0, %v1730
    %v1732 = vpop.f32.mrf.mxu0
    %v1733 = vadd.f32 0.0, %v1732
    %1734 = vmatmul.bf16.gmra.mxu0 %v107
    %v1735 = vpop.f32.mrf.mxu0
    %v1736 = vadd.f32 0.0, %v1735
    %v1737 = vpop.f32.mrf.mxu0
    %v1738 = vadd.f32 0.0, %v1737
    %1739 = vmatmul.bf16.gmra.mxu0 %v110
    %v1740 = vpop.f32.mrf.mxu0
    %v1741 = vadd.f32 0.0, %v1740
    %v1742 = vpop.f32.mrf.mxu0
    %v1743 = vadd.f32 0.0, %v1742
    %1744 = vmatmul.bf16.gmra.mxu0 %v113
    %v1745 = vpop.f32.mrf.mxu0
    %v1746 = vadd.f32 0.0, %v1745
    %v1747 = vpop.f32.mrf.mxu0
    %v1748 = vadd.f32 0.0, %v1747
    %1749 = vdwg.mxu0
    %1750 = vmatpush.bf16.msra.mxu0 %v1166
    %1751 = vmatpush.bf16.msra.mxu0 %v1157
    %1752 = vmatpush.bf16.msra.mxu0 %v1148
    %1753 = vmatpush.bf16.msra.mxu0 %v1139
    %1754 = vmatpush.bf16.msra.mxu0 %v1130
    %1755 = vmatpush.bf16.msra.mxu0 %v1121
    %1756 = vmatpush.bf16.msra.mxu0 %v1112
    %1757 = vmatpush.bf16.msra.mxu0 %v1103
    %1758 = vmatmul.bf16.gmra.mxu0 %v105
    %v1759 = vpop.f32.mrf.mxu0
    %v1760 = vadd.f32 %v1731, %v1759
    %v1761 = vpop.f32.mrf.mxu0
    %v1762 = vadd.f32 %v1733, %v1761
    %1763 = vmatmul.bf16.gmra.mxu0 %v108
    %v1764 = vpop.f32.mrf.mxu0
    %v1765 = vadd.f32 %v1736, %v1764
    %v1766 = vpop.f32.mrf.mxu0
    %v1767 = vadd.f32 %v1738, %v1766
    %1768 = vmatmul.bf16.gmra.mxu0 %v111
    %v1769 = vpop.f32.mrf.mxu0
    %v1770 = vadd.f32 %v1741, %v1769
    %v1771 = vpop.f32.mrf.mxu0
    %v1772 = vadd.f32 %v1743, %v1771
    %1773 = vmatmul.bf16.gmra.mxu0 %v114
    %v1774 = vpop.f32.mrf.mxu0
    %v1775 = vadd.f32 %v1746, %v1774
    %v1776 = vpop.f32.mrf.mxu0
    %v1777 = vadd.f32 %v1748, %v1776
    %1778 = vdwg.mxu0
    %1779 = vmatpush.bf16.msra.mxu0 %v1238
    %1780 = vmatpush.bf16.msra.mxu0 %v1229
    %1781 = vmatpush.bf16.msra.mxu0 %v1220
    %1782 = vmatpush.bf16.msra.mxu0 %v1211
    %1783 = vmatpush.bf16.msra.mxu0 %v1202
    %1784 = vmatpush.bf16.msra.mxu0 %v1193
    %1785 = vmatpush.bf16.msra.mxu0 %v1184
    %1786 = vmatpush.bf16.msra.mxu0 %v1175
    %1787 = vmatmul.bf16.gmra.mxu0 %v106
    %v1788 = vpop.f32.mrf.mxu0
    %v1789 = vadd.f32 %v1760, %v1788
    %v1790 = vpop.f32.mrf.mxu0
    %v1791 = vadd.f32 %v1762, %v1790
    %1792 = vmatmul.bf16.gmra.mxu0 %v109
    %v1793 = vpop.f32.mrf.mxu0
    %v1794 = vadd.f32 %v1765, %v1793
    %v1795 = vpop.f32.mrf.mxu0
    %v1796 = vadd.f32 %v1767, %v1795
    %1797 = vmatmul.bf16.gmra.mxu0 %v112
    %v1798 = vpop.f32.mrf.mxu0
    %v1799 = vadd.f32 %v1770, %v1798
    %v1800 = vpop.f32.mrf.mxu0
    %v1801 = vadd.f32 %v1772, %v1800
    %1802 = vmatmul.bf16.gmra.mxu0 %v115
    %v1803 = vpop.f32.mrf.mxu0
    %v1804 = vadd.f32 %v1775, %v1803
    %v1805 = vpop.f32.mrf.mxu0
    %v1806 = vadd.f32 %v1777, %v1805
    %1807 = vdwg.mxu0
    %1808 = vmatpush.bf16.msra.mxu0 %v1095
    %1809 = vmatpush.bf16.msra.mxu0 %v1086
    %1810 = vmatpush.bf16.msra.mxu0 %v1077
    %1811 = vmatpush.bf16.msra.mxu0 %v1068
    %1812 = vmatpush.bf16.msra.mxu0 %v1059
    %1813 = vmatpush.bf16.msra.mxu0 %v1050
    %1814 = vmatpush.bf16.msra.mxu0 %v1041
    %1815 = vmatpush.bf16.msra.mxu0 %v1032
    %1816 = vmatmul.bf16.gmra.mxu0 %v104
    %v1817 = vpop.f32.mrf.mxu0
    %v1818 = vadd.f32 0.0, %v1817
    %v1819 = vpop.f32.mrf.mxu0
    %v1820 = vadd.f32 0.0, %v1819
    %1821 = vmatmul.bf16.gmra.mxu0 %v107
    %v1822 = vpop.f32.mrf.mxu0
    %v1823 = vadd.f32 0.0, %v1822
    %v1824 = vpop.f32.mrf.mxu0
    %v1825 = vadd.f32 0.0, %v1824
    %1826 = vmatmul.bf16.gmra.mxu0 %v110
    %v1827 = vpop.f32.mrf.mxu0
    %v1828 = vadd.f32 0.0, %v1827
    %v1829 = vpop.f32.mrf.mxu0
    %v1830 = vadd.f32 0.0, %v1829
    %1831 = vmatmul.bf16.gmra.mxu0 %v113
    %v1832 = vpop.f32.mrf.mxu0
    %v1833 = vadd.f32 0.0, %v1832
    %v1834 = vpop.f32.mrf.mxu0
    %v1835 = vadd.f32 0.0, %v1834
    %1836 = vdwg.mxu0
    %1837 = vmatpush.bf16.msra.mxu0 %v1167
    %1838 = vmatpush.bf16.msra.mxu0 %v1158
    %1839 = vmatpush.bf16.msra.mxu0 %v1149
    %1840 = vmatpush.bf16.msra.mxu0 %v1140
    %1841 = vmatpush.bf16.msra.mxu0 %v1131
    %1842 = vmatpush.bf16.msra.mxu0 %v1122
    %1843 = vmatpush.bf16.msra.mxu0 %v1113
    %1844 = vmatpush.bf16.msra.mxu0 %v1104
    %1845 = vmatmul.bf16.gmra.mxu0 %v105
    %v1846 = vpop.f32.mrf.mxu0
    %v1847 = vadd.f32 %v1818, %v1846
    %v1848 = vpop.f32.mrf.mxu0
    %v1849 = vadd.f32 %v1820, %v1848
    %1850 = vmatmul.bf16.gmra.mxu0 %v108
    %v1851 = vpop.f32.mrf.mxu0
    %v1852 = vadd.f32 %v1823, %v1851
    %v1853 = vpop.f32.mrf.mxu0
    %v1854 = vadd.f32 %v1825, %v1853
    %1855 = vmatmul.bf16.gmra.mxu0 %v111
    %v1856 = vpop.f32.mrf.mxu0
    %v1857 = vadd.f32 %v1828, %v1856
    %v1858 = vpop.f32.mrf.mxu0
    %v1859 = vadd.f32 %v1830, %v1858
    %1860 = vmatmul.bf16.gmra.mxu0 %v114
    %v1861 = vpop.f32.mrf.mxu0
    %v1862 = vadd.f32 %v1833, %v1861
    %v1863 = vpop.f32.mrf.mxu0
    %v1864 = vadd.f32 %v1835, %v1863
    %1865 = vdwg.mxu0
    %1866 = vmatpush.bf16.msra.mxu0 %v1239
    %1867 = vmatpush.bf16.msra.mxu0 %v1230
    %1868 = vmatpush.bf16.msra.mxu0 %v1221
    %1869 = vmatpush.bf16.msra.mxu0 %v1212
    %1870 = vmatpush.bf16.msra.mxu0 %v1203
    %1871 = vmatpush.bf16.msra.mxu0 %v1194
    %1872 = vmatpush.bf16.msra.mxu0 %v1185
    %1873 = vmatpush.bf16.msra.mxu0 %v1176
    %1874 = vmatmul.bf16.gmra.mxu0 %v106
    %v1875 = vpop.f32.mrf.mxu0
    %v1876 = vadd.f32 %v1847, %v1875
    %v1877 = vpop.f32.mrf.mxu0
    %v1878 = vadd.f32 %v1849, %v1877
    %1879 = vmatmul.bf16.gmra.mxu0 %v109
    %v1880 = vpop.f32.mrf.mxu0
    %v1881 = vadd.f32 %v1852, %v1880
    %v1882 = vpop.f32.mrf.mxu0
    %v1883 = vadd.f32 %v1854, %v1882
    %1884 = vmatmul.bf16.gmra.mxu0 %v112
    %v1885 = vpop.f32.mrf.mxu0
    %v1886 = vadd.f32 %v1857, %v1885
    %v1887 = vpop.f32.mrf.mxu0
    %v1888 = vadd.f32 %v1859, %v1887
    %1889 = vmatmul.bf16.gmra.mxu0 %v115
    %v1890 = vpop.f32.mrf.mxu0
    %v1891 = vadd.f32 %v1862, %v1890
    %v1892 = vpop.f32.mrf.mxu0
    %v1893 = vadd.f32 %v1864, %v1892
    %1894 = vdwg.mxu0
    %1895 = vmatpush.bf16.msra.mxu0 %v1096
    %1896 = vmatpush.bf16.msra.mxu0 %v1087
    %1897 = vmatpush.bf16.msra.mxu0 %v1078
    %1898 = vmatpush.bf16.msra.mxu0 %v1069
    %1899 = vmatpush.bf16.msra.mxu0 %v1060
    %1900 = vmatpush.bf16.msra.mxu0 %v1051
    %1901 = vmatpush.bf16.msra.mxu0 %v1042
    %1902 = vmatpush.bf16.msra.mxu0 %v1033
    %1903 = vmatmul.bf16.gmra.mxu0 %v104
    %v1904 = vpop.f32.mrf.mxu0
    %v1905 = vadd.f32 0.0, %v1904
    %v1906 = vpop.f32.mrf.mxu0
    %v1907 = vadd.f32 0.0, %v1906
    %1908 = vmatmul.bf16.gmra.mxu0 %v107
    %v1909 = vpop.f32.mrf.mxu0
    %v1910 = vadd.f32 0.0, %v1909
    %v1911 = vpop.f32.mrf.mxu0
    %v1912 = vadd.f32 0.0, %v1911
    %1913 = vmatmul.bf16.gmra.mxu0 %v110
    %v1914 = vpop.f32.mrf.mxu0
    %v1915 = vadd.f32 0.0, %v1914
    %v1916 = vpop.f32.mrf.mxu0
    %v1917 = vadd.f32 0.0, %v1916
    %1918 = vmatmul.bf16.gmra.mxu0 %v113
    %v1919 = vpop.f32.mrf.mxu0
    %v1920 = vadd.f32 0.0, %v1919
    %v1921 = vpop.f32.mrf.mxu0
    %v1922 = vadd.f32 0.0, %v1921
    %1923 = vdwg.mxu0
    %1924 = vmatpush.bf16.msra.mxu0 %v1168
    %1925 = vmatpush.bf16.msra.mxu0 %v1159
    %1926 = vmatpush.bf16.msra.mxu0 %v1150
    %1927 = vmatpush.bf16.msra.mxu0 %v1141
    %1928 = vmatpush.bf16.msra.mxu0 %v1132
    %1929 = vmatpush.bf16.msra.mxu0 %v1123
    %1930 = vmatpush.bf16.msra.mxu0 %v1114
    %1931 = vmatpush.bf16.msra.mxu0 %v1105
    %1932 = vmatmul.bf16.gmra.mxu0 %v105
    %v1933 = vpop.f32.mrf.mxu0
    %v1934 = vadd.f32 %v1905, %v1933
    %v1935 = vpop.f32.mrf.mxu0
    %v1936 = vadd.f32 %v1907, %v1935
    %1937 = vmatmul.bf16.gmra.mxu0 %v108
    %v1938 = vpop.f32.mrf.mxu0
    %v1939 = vadd.f32 %v1910, %v1938
    %v1940 = vpop.f32.mrf.mxu0
    %v1941 = vadd.f32 %v1912, %v1940
    %1942 = vmatmul.bf16.gmra.mxu0 %v111
    %v1943 = vpop.f32.mrf.mxu0
    %v1944 = vadd.f32 %v1915, %v1943
    %v1945 = vpop.f32.mrf.mxu0
    %v1946 = vadd.f32 %v1917, %v1945
    %1947 = vmatmul.bf16.gmra.mxu0 %v114
    %v1948 = vpop.f32.mrf.mxu0
    %v1949 = vadd.f32 %v1920, %v1948
    %v1950 = vpop.f32.mrf.mxu0
    %v1951 = vadd.f32 %v1922, %v1950
    %1952 = vdwg.mxu0
    %1953 = vmatpush.bf16.msra.mxu0 %v1240
    %1954 = vmatpush.bf16.msra.mxu0 %v1231
    %1955 = vmatpush.bf16.msra.mxu0 %v1222
    %1956 = vmatpush.bf16.msra.mxu0 %v1213
    %1957 = vmatpush.bf16.msra.mxu0 %v1204
    %1958 = vmatpush.bf16.msra.mxu0 %v1195
    %1959 = vmatpush.bf16.msra.mxu0 %v1186
    %1960 = vmatpush.bf16.msra.mxu0 %v1177
    %1961 = vmatmul.bf16.gmra.mxu0 %v106
    %v1962 = vpop.f32.mrf.mxu0
    %v1963 = vadd.f32 %v1934, %v1962
    %v1964 = vpop.f32.mrf.mxu0
    %v1965 = vadd.f32 %v1936, %v1964
    %1966 = vmatmul.bf16.gmra.mxu0 %v109
    %v1967 = vpop.f32.mrf.mxu0
    %v1968 = vadd.f32 %v1939, %v1967
    %v1969 = vpop.f32.mrf.mxu0
    %v1970 = vadd.f32 %v1941, %v1969
    %1971 = vmatmul.bf16.gmra.mxu0 %v112
    %v1972 = vpop.f32.mrf.mxu0
    %v1973 = vadd.f32 %v1944, %v1972
    %v1974 = vpop.f32.mrf.mxu0
    %v1975 = vadd.f32 %v1946, %v1974
    %1976 = vmatmul.bf16.gmra.mxu0 %v115
    %v1977 = vpop.f32.mrf.mxu0
    %v1978 = vadd.f32 %v1949, %v1977
    %v1979 = vpop.f32.mrf.mxu0
    %v1980 = vadd.f32 %v1951, %v1979
    %1981 = vdwg.mxu0
    %1982 = vmatpush.bf16.msra.mxu0 %v1097
    %1983 = vmatpush.bf16.msra.mxu0 %v1088
    %1984 = vmatpush.bf16.msra.mxu0 %v1079
    %1985 = vmatpush.bf16.msra.mxu0 %v1070
    %1986 = vmatpush.bf16.msra.mxu0 %v1061
    %1987 = vmatpush.bf16.msra.mxu0 %v1052
    %1988 = vmatpush.bf16.msra.mxu0 %v1043
    %1989 = vmatpush.bf16.msra.mxu0 %v1034
    %1990 = vmatmul.bf16.gmra.mxu0 %v104
    %v1991 = vpop.f32.mrf.mxu0
    %v1992 = vadd.f32 0.0, %v1991
    %v1993 = vpop.f32.mrf.mxu0
    %v1994 = vadd.f32 0.0, %v1993
    %1995 = vmatmul.bf16.gmra.mxu0 %v107
    %v1996 = vpop.f32.mrf.mxu0
    %v1997 = vadd.f32 0.0, %v1996
    %v1998 = vpop.f32.mrf.mxu0
    %v1999 = vadd.f32 0.0, %v1998
    %2000 = vmatmul.bf16.gmra.mxu0 %v110
    %v2001 = vpop.f32.mrf.mxu0
    %v2002 = vadd.f32 0.0, %v2001
    %v2003 = vpop.f32.mrf.mxu0
    %v2004 = vadd.f32 0.0, %v2003
    %2005 = vmatmul.bf16.gmra.mxu0 %v113
    %v2006 = vpop.f32.mrf.mxu0
    %v2007 = vadd.f32 0.0, %v2006
    %v2008 = vpop.f32.mrf.mxu0
    %v2009 = vadd.f32 0.0, %v2008
    %2010 = vdwg.mxu0
    %2011 = vmatpush.bf16.msra.mxu0 %v1169
    %2012 = vmatpush.bf16.msra.mxu0 %v1160
    %2013 = vmatpush.bf16.msra.mxu0 %v1151
    %2014 = vmatpush.bf16.msra.mxu0 %v1142
    %2015 = vmatpush.bf16.msra.mxu0 %v1133
    %2016 = vmatpush.bf16.msra.mxu0 %v1124
    %2017 = vmatpush.bf16.msra.mxu0 %v1115
    %2018 = vmatpush.bf16.msra.mxu0 %v1106
    %2019 = vmatmul.bf16.gmra.mxu0 %v105
    %v2020 = vpop.f32.mrf.mxu0
    %v2021 = vadd.f32 %v1992, %v2020
    %v2022 = vpop.f32.mrf.mxu0
    %v2023 = vadd.f32 %v1994, %v2022
    %2024 = vmatmul.bf16.gmra.mxu0 %v108
    %v2025 = vpop.f32.mrf.mxu0
    %v2026 = vadd.f32 %v1997, %v2025
    %v2027 = vpop.f32.mrf.mxu0
    %v2028 = vadd.f32 %v1999, %v2027
    %2029 = vmatmul.bf16.gmra.mxu0 %v111
    %v2030 = vpop.f32.mrf.mxu0
    %v2031 = vadd.f32 %v2002, %v2030
    %v2032 = vpop.f32.mrf.mxu0
    %v2033 = vadd.f32 %v2004, %v2032
    %2034 = vmatmul.bf16.gmra.mxu0 %v114
    %v2035 = vpop.f32.mrf.mxu0
    %v2036 = vadd.f32 %v2007, %v2035
    %v2037 = vpop.f32.mrf.mxu0
    %v2038 = vadd.f32 %v2009, %v2037
    %2039 = vdwg.mxu0
    %2040 = vmatpush.bf16.msra.mxu0 %v1241
    %2041 = vmatpush.bf16.msra.mxu0 %v1232
    %2042 = vmatpush.bf16.msra.mxu0 %v1223
    %2043 = vmatpush.bf16.msra.mxu0 %v1214
    %2044 = vmatpush.bf16.msra.mxu0 %v1205
    %2045 = vmatpush.bf16.msra.mxu0 %v1196
    %2046 = vmatpush.bf16.msra.mxu0 %v1187
    %2047 = vmatpush.bf16.msra.mxu0 %v1178
    %2048 = vmatmul.bf16.gmra.mxu0 %v106
    %v2049 = vpop.f32.mrf.mxu0
    %v2050 = vadd.f32 %v2021, %v2049
    %v2051 = vpop.f32.mrf.mxu0
    %v2052 = vadd.f32 %v2023, %v2051
    %2053 = vmatmul.bf16.gmra.mxu0 %v109
    %v2054 = vpop.f32.mrf.mxu0
    %v2055 = vadd.f32 %v2026, %v2054
    %v2056 = vpop.f32.mrf.mxu0
    %v2057 = vadd.f32 %v2028, %v2056
    %2058 = vmatmul.bf16.gmra.mxu0 %v112
    %v2059 = vpop.f32.mrf.mxu0
    %v2060 = vadd.f32 %v2031, %v2059
    %v2061 = vpop.f32.mrf.mxu0
    %v2062 = vadd.f32 %v2033, %v2061
    %2063 = vmatmul.bf16.gmra.mxu0 %v115
    %v2064 = vpop.f32.mrf.mxu0
    %v2065 = vadd.f32 %v2036, %v2064
    %v2066 = vpop.f32.mrf.mxu0
    %v2067 = vadd.f32 %v2038, %v2066
    %2068 = vdwg.mxu0
    %2069 = vmatpush.bf16.msra.mxu0 %v1098
    %2070 = vmatpush.bf16.msra.mxu0 %v1089
    %2071 = vmatpush.bf16.msra.mxu0 %v1080
    %2072 = vmatpush.bf16.msra.mxu0 %v1071
    %2073 = vmatpush.bf16.msra.mxu0 %v1062
    %2074 = vmatpush.bf16.msra.mxu0 %v1053
    %2075 = vmatpush.bf16.msra.mxu0 %v1044
    %2076 = vmatpush.bf16.msra.mxu0 %v1035
    %2077 = vmatmul.bf16.gmra.mxu0 %v104
    %v2078 = vpop.f32.mrf.mxu0
    %v2079 = vadd.f32 0.0, %v2078
    %v2080 = vpop.f32.mrf.mxu0
    %v2081 = vadd.f32 0.0, %v2080
    %2082 = vmatmul.bf16.gmra.mxu0 %v107
    %v2083 = vpop.f32.mrf.mxu0
    %v2084 = vadd.f32 0.0, %v2083
    %v2085 = vpop.f32.mrf.mxu0
    %v2086 = vadd.f32 0.0, %v2085
    %2087 = vmatmul.bf16.gmra.mxu0 %v110
    %v2088 = vpop.f32.mrf.mxu0
    %v2089 = vadd.f32 0.0, %v2088
    %v2090 = vpop.f32.mrf.mxu0
    %v2091 = vadd.f32 0.0, %v2090
    %2092 = vmatmul.bf16.gmra.mxu0 %v113
    %v2093 = vpop.f32.mrf.mxu0
    %v2094 = vadd.f32 0.0, %v2093
    %v2095 = vpop.f32.mrf.mxu0
    %v2096 = vadd.f32 0.0, %v2095
    %2097 = vdwg.mxu0
    %2098 = vmatpush.bf16.msra.mxu0 %v1170
    %2099 = vmatpush.bf16.msra.mxu0 %v1161
    %2100 = vmatpush.bf16.msra.mxu0 %v1152
    %2101 = vmatpush.bf16.msra.mxu0 %v1143
    %2102 = vmatpush.bf16.msra.mxu0 %v1134
    %2103 = vmatpush.bf16.msra.mxu0 %v1125
    %2104 = vmatpush.bf16.msra.mxu0 %v1116
    %2105 = vmatpush.bf16.msra.mxu0 %v1107
    %2106 = vmatmul.bf16.gmra.mxu0 %v105
    %v2107 = vpop.f32.mrf.mxu0
    %v2108 = vadd.f32 %v2079, %v2107
    %v2109 = vpop.f32.mrf.mxu0
    %v2110 = vadd.f32 %v2081, %v2109
    %2111 = vmatmul.bf16.gmra.mxu0 %v108
    %v2112 = vpop.f32.mrf.mxu0
    %v2113 = vadd.f32 %v2084, %v2112
    %v2114 = vpop.f32.mrf.mxu0
    %v2115 = vadd.f32 %v2086, %v2114
    %2116 = vmatmul.bf16.gmra.mxu0 %v111
    %v2117 = vpop.f32.mrf.mxu0
    %v2118 = vadd.f32 %v2089, %v2117
    %v2119 = vpop.f32.mrf.mxu0
    %v2120 = vadd.f32 %v2091, %v2119
    %2121 = vmatmul.bf16.gmra.mxu0 %v114
    %v2122 = vpop.f32.mrf.mxu0
    %v2123 = vadd.f32 %v2094, %v2122
    %v2124 = vpop.f32.mrf.mxu0
    %v2125 = vadd.f32 %v2096, %v2124
    %2126 = vdwg.mxu0
    %2127 = vmatpush.bf16.msra.mxu0 %v1242
    %2128 = vmatpush.bf16.msra.mxu0 %v1233
    %2129 = vmatpush.bf16.msra.mxu0 %v1224
    %2130 = vmatpush.bf16.msra.mxu0 %v1215
    %2131 = vmatpush.bf16.msra.mxu0 %v1206
    %2132 = vmatpush.bf16.msra.mxu0 %v1197
    %2133 = vmatpush.bf16.msra.mxu0 %v1188
    %2134 = vmatpush.bf16.msra.mxu0 %v1179
    %2135 = vmatmul.bf16.gmra.mxu0 %v106
    %v2136 = vpop.f32.mrf.mxu0
    %v2137 = vadd.f32 %v2108, %v2136
    %v2138 = vpop.f32.mrf.mxu0
    %v2139 = vadd.f32 %v2110, %v2138
    %2140 = vmatmul.bf16.gmra.mxu0 %v109
    %v2141 = vpop.f32.mrf.mxu0
    %v2142 = vadd.f32 %v2113, %v2141
    %v2143 = vpop.f32.mrf.mxu0
    %v2144 = vadd.f32 %v2115, %v2143
    %2145 = vmatmul.bf16.gmra.mxu0 %v112
    %v2146 = vpop.f32.mrf.mxu0
    %v2147 = vadd.f32 %v2118, %v2146
    %v2148 = vpop.f32.mrf.mxu0
    %v2149 = vadd.f32 %v2120, %v2148
    %2150 = vmatmul.bf16.gmra.mxu0 %v115
    %v2151 = vpop.f32.mrf.mxu0
    %v2152 = vadd.f32 %v2123, %v2151
    %v2153 = vpop.f32.mrf.mxu0
    %v2154 = vadd.f32 %v2125, %v2153
    %2155 = vdwg.mxu0
    %2156 = vmatpush.bf16.msra.mxu0 %v1099
    %2157 = vmatpush.bf16.msra.mxu0 %v1090
    %2158 = vmatpush.bf16.msra.mxu0 %v1081
    %2159 = vmatpush.bf16.msra.mxu0 %v1072
    %2160 = vmatpush.bf16.msra.mxu0 %v1063
    %2161 = vmatpush.bf16.msra.mxu0 %v1054
    %2162 = vmatpush.bf16.msra.mxu0 %v1045
    %2163 = vmatpush.bf16.msra.mxu0 %v1036
    %2164 = vmatmul.bf16.gmra.mxu0 %v104
    %v2165 = vpop.f32.mrf.mxu0
    %v2166 = vadd.f32 0.0, %v2165
    %v2167 = vpop.f32.mrf.mxu0
    %v2168 = vadd.f32 0.0, %v2167
    %2169 = vmatmul.bf16.gmra.mxu0 %v107
    %v2170 = vpop.f32.mrf.mxu0
    %v2171 = vadd.f32 0.0, %v2170
    %v2172 = vpop.f32.mrf.mxu0
    %v2173 = vadd.f32 0.0, %v2172
    %2174 = vmatmul.bf16.gmra.mxu0 %v110
    %v2175 = vpop.f32.mrf.mxu0
    %v2176 = vadd.f32 0.0, %v2175
    %v2177 = vpop.f32.mrf.mxu0
    %v2178 = vadd.f32 0.0, %v2177
    %2179 = vmatmul.bf16.gmra.mxu0 %v113
    %v2180 = vpop.f32.mrf.mxu0
    %v2181 = vadd.f32 0.0, %v2180
    %v2182 = vpop.f32.mrf.mxu0
    %v2183 = vadd.f32 0.0, %v2182
    %2184 = vdwg.mxu0
    %2185 = vmatpush.bf16.msra.mxu0 %v1171
    %2186 = vmatpush.bf16.msra.mxu0 %v1162
    %2187 = vmatpush.bf16.msra.mxu0 %v1153
    %2188 = vmatpush.bf16.msra.mxu0 %v1144
    %2189 = vmatpush.bf16.msra.mxu0 %v1135
    %2190 = vmatpush.bf16.msra.mxu0 %v1126
    %2191 = vmatpush.bf16.msra.mxu0 %v1117
    %2192 = vmatpush.bf16.msra.mxu0 %v1108
    %2193 = vmatmul.bf16.gmra.mxu0 %v105
    %v2194 = vpop.f32.mrf.mxu0
    %v2195 = vadd.f32 %v2166, %v2194
    %v2196 = vpop.f32.mrf.mxu0
    %v2197 = vadd.f32 %v2168, %v2196
    %2198 = vmatmul.bf16.gmra.mxu0 %v108
    %v2199 = vpop.f32.mrf.mxu0
    %v2200 = vadd.f32 %v2171, %v2199
    %v2201 = vpop.f32.mrf.mxu0
    %v2202 = vadd.f32 %v2173, %v2201
    %2203 = vmatmul.bf16.gmra.mxu0 %v111
    %v2204 = vpop.f32.mrf.mxu0
    %v2205 = vadd.f32 %v2176, %v2204
    %v2206 = vpop.f32.mrf.mxu0
    %v2207 = vadd.f32 %v2178, %v2206
    %2208 = vmatmul.bf16.gmra.mxu0 %v114
    %v2209 = vpop.f32.mrf.mxu0
    %v2210 = vadd.f32 %v2181, %v2209
    %v2211 = vpop.f32.mrf.mxu0
    %v2212 = vadd.f32 %v2183, %v2211
    %2213 = vdwg.mxu0
    %2214 = vmatpush.bf16.msra.mxu0 %v1243
    %2215 = vmatpush.bf16.msra.mxu0 %v1234
    %2216 = vmatpush.bf16.msra.mxu0 %v1225
    %2217 = vmatpush.bf16.msra.mxu0 %v1216
    %2218 = vmatpush.bf16.msra.mxu0 %v1207
    %2219 = vmatpush.bf16.msra.mxu0 %v1198
    %2220 = vmatpush.bf16.msra.mxu0 %v1189
    %2221 = vmatpush.bf16.msra.mxu0 %v1180
    %2222 = vmatmul.bf16.gmra.mxu0 %v106
    %v2223 = vpop.f32.mrf.mxu0
    %v2224 = vadd.f32 %v2195, %v2223
    %v2225 = vpop.f32.mrf.mxu0
    %v2226 = vadd.f32 %v2197, %v2225
    %2227 = vmatmul.bf16.gmra.mxu0 %v109
    %v2228 = vpop.f32.mrf.mxu0
    %v2229 = vadd.f32 %v2200, %v2228
    %v2230 = vpop.f32.mrf.mxu0
    %v2231 = vadd.f32 %v2202, %v2230
    %2232 = vmatmul.bf16.gmra.mxu0 %v112
    %v2233 = vpop.f32.mrf.mxu0
    %v2234 = vadd.f32 %v2205, %v2233
    %v2235 = vpop.f32.mrf.mxu0
    %v2236 = vadd.f32 %v2207, %v2235
    %2237 = vmatmul.bf16.gmra.mxu0 %v115
    %v2238 = vpop.f32.mrf.mxu0
    %v2239 = vadd.f32 %v2210, %v2238
    %v2240 = vpop.f32.mrf.mxu0
    %v2241 = vadd.f32 %v2212, %v2240
    %2242 = vdwg.mxu0
    %v2243 = vpack.c.bf16 %v1615, %v1528
    %v2244 = vpack.c.bf16 %v1789, %v1702
    %v2245 = vpack.c.bf16 %v1963, %v1876
    %v2246 = vpack.c.bf16 %v2137, %v2050
    %v2247 = vpack.c.bf16 %v2224, %v2224
    %v2248 = vpack.c.bf16 %v1617, %v1530
    %v2249 = vpack.c.bf16 %v1791, %v1704
    %v2250 = vpack.c.bf16 %v1965, %v1878
    %v2251 = vpack.c.bf16 %v2139, %v2052
    %v2252 = vpack.c.bf16 %v2226, %v2226
    %v2253 = vpack.c.bf16 %v1620, %v1533
    %v2254 = vpack.c.bf16 %v1794, %v1707
    %v2255 = vpack.c.bf16 %v1968, %v1881
    %v2256 = vpack.c.bf16 %v2142, %v2055
    %v2257 = vpack.c.bf16 %v2229, %v2229
    %v2258 = vpack.c.bf16 %v1622, %v1535
    %v2259 = vpack.c.bf16 %v1796, %v1709
    %v2260 = vpack.c.bf16 %v1970, %v1883
    %v2261 = vpack.c.bf16 %v2144, %v2057
    %v2262 = vpack.c.bf16 %v2231, %v2231
    %v2263 = vpack.c.bf16 %v1625, %v1538
    %v2264 = vpack.c.bf16 %v1799, %v1712
    %v2265 = vpack.c.bf16 %v1973, %v1886
    %v2266 = vpack.c.bf16 %v2147, %v2060
    %v2267 = vpack.c.bf16 %v2234, %v2234
    %v2268 = vpack.c.bf16 %v1627, %v1540
    %v2269 = vpack.c.bf16 %v1801, %v1714
    %v2270 = vpack.c.bf16 %v1975, %v1888
    %v2271 = vpack.c.bf16 %v2149, %v2062
    %v2272 = vpack.c.bf16 %v2236, %v2236
    %v2273 = vpack.c.bf16 %v1630, %v1543
    %v2274 = vpack.c.bf16 %v1804, %v1717
    %v2275 = vpack.c.bf16 %v1978, %v1891
    %v2276 = vpack.c.bf16 %v2152, %v2065
    %v2277 = vpack.c.bf16 %v2239, %v2239
    %v2278 = vpack.c.bf16 %v1632, %v1545
    %v2279 = vpack.c.bf16 %v1806, %v1719
    %v2280 = vpack.c.bf16 %v1980, %v1893
    %v2281 = vpack.c.bf16 %v2154, %v2067
    %v2282 = vpack.c.bf16 %v2241, %v2241
    %v2283 = vlaneseq
    %v2284 = vshrl.u32 %v2283, 7
    %v2285 = vadd.s32 %v2284, 8
    %v2286 = vadd.s32 %v2284, 16
    %v2287 = vadd.s32 %v2284, 24
    %v2288 = vlaneseq
    %v2289 = vand.u32 %v2288, 127
    %vm2290 = vcmp.le.s32.totalorder %v2289, %v2284
    %vm2291 = vcmp.le.s32.totalorder %v2289, %v2285
    %vm2292 = vcmp.le.s32.totalorder %v2289, %v2286
    %vm2293 = vcmp.le.s32.totalorder %v2289, %v2287
    %v2294 = vld [vmem:[#allocation8] sm:$0x7]
    %v2299 = vunpack.c.l.b16 %v2243
    %v2300 = vunpack.c.l.b16 %v2248
    %v2301 = vunpack.c.l.b16 %v2253
    %v2302 = vunpack.c.l.b16 %v2258
    %v2303 = vpack.c.b16 %v2300, %v2299
    %v2304 = vpack.c.b16 %v2302, %v2301
    %v2309 = vunpack.c.h.b16 %v2244
    %v2310 = vunpack.c.h.b16 %v2249
    %v2311 = vunpack.c.h.b16 %v2254
    %v2312 = vunpack.c.h.b16 %v2259
    %v2313 = vpack.c.b16 %v2310, %v2309
    %v2314 = vpack.c.b16 %v2312, %v2311
    %vm2315 = vcmask 523264
    %v2317 = vsel %vm2315, %v2303, 0
    %v2320 = vsel %vm2315, %v2304, 0
    %v2323 = vsel %vm2315, %v2313, 0
    %v2326 = vsel %vm2315, %v2314, 0
    %2328 = vmatpush.bf16.xpose.msra.mxu0 0
    %2329 = vmatpush.bf16.xpose.msra.mxu0 0
    %2330 = vmatpush.bf16.xpose.msra.mxu0 0
    %2331 = vmatpush.bf16.xpose.msra.mxu0 0
    %2332 = vmatpush.bf16.xpose.msra.mxu0 0
    %2333 = vmatpush.bf16.xpose.msra.mxu0 0
    %2334 = vmatpush.bf16.xpose.msra.mxu0 %v2326
    %2335 = vmatpush.bf16.xpose.msra.mxu0 %v2323
    %2336 = vmatmul.bf16.gmra.mxu0 %v2317
    %v2337 = vpop.f32.mrf.mxu0
    %v2338 = vadd.f32 0.0, %v2337
    %v2339 = vpop.f32.mrf.mxu0
    %v2340 = vadd.f32 0.0, %v2339
    %2341 = vmatmul.bf16.gmra.mxu0 %v2320
    %v2342 = vpop.f32.mrf.mxu0
    %v2343 = vadd.f32 0.0, %v2342
    %v2344 = vpop.f32.mrf.mxu0
    %v2345 = vadd.f32 0.0, %v2344
    %2346 = vdwg.mxu0
    %v2347 = vsel %vm2290, %v2338, -inf
    %v2348 = vsel %vm2291, %v2340, -inf
    %v2349 = vsel %vm2292, %v2343, -inf
    %v2350 = vsel %vm2293, %v2345, -inf
    %vm2351 = vcmask 261120
    %v2352 = vsel %vm2351, %v2347, -inf
    %2353 = vmax.xlane.f32.xlu0 %v2352
    %v2354 = vpop.xlane.xlu0 %2353
    %v2355 = vsel %vm2351, %v2348, -inf
    %2356 = vmax.xlane.f32.xlu0 %v2355
    %v2357 = vpop.xlane.xlu0 %2356
    %v2358 = vsel %vm2351, %v2349, -inf
    %2359 = vmax.xlane.f32.xlu0 %v2358
    %v2360 = vpop.xlane.xlu0 %2359
    %v2361 = vsel %vm2351, %v2350, -inf
    %2362 = vmax.xlane.f32.xlu0 %v2361
    %v2363 = vpop.xlane.xlu0 %2362
    %v2364 = vsub.f32 %v2347, %v2354
    %v2365 = vsub.f32 %v2348, %v2357
    %v2366 = vsub.f32 %v2349, %v2360
    %v2367 = vsub.f32 %v2350, %v2363
    %v2368 = vmul.f32 %v2364, 1.442695
    %v2369 = vpow.pop %v2368
    %v2370 = vmul.f32 %v2365, 1.442695
    %v2371 = vpow.pop %v2370
    %v2372 = vmul.f32 %v2366, 1.442695
    %v2373 = vpow.pop %v2372
    %v2374 = vmul.f32 %v2367, 1.442695
    %v2375 = vpow.pop %v2374
    %v2376 = vsel %vm2351, %v2369, 0.0
    %2377 = vadd.xlane.f32.xlu0 %v2376
    %v2378 = vpop.xlane.xlu0 %2377
    %v2379 = vsel %vm2351, %v2371, 0.0
    %2380 = vadd.xlane.f32.xlu0 %v2379
    %v2381 = vpop.xlane.xlu0 %2380
    %v2382 = vsel %vm2351, %v2373, 0.0
    %2383 = vadd.xlane.f32.xlu0 %v2382
    %v2384 = vpop.xlane.xlu0 %2383
    %v2385 = vsel %vm2351, %v2375, 0.0
    %2386 = vadd.xlane.f32.xlu0 %v2385
    %v2387 = vpop.xlane.xlu0 %2386
    %v2388 = vrcp.pop %v2378
    %v2389 = vrcp.pop %v2381
    %v2390 = vrcp.pop %v2384
    %v2391 = vrcp.pop %v2387
    %v2392 = vmul.f32 %v2369, %v2388
    %v2393 = vmul.f32 %v2371, %v2389
    %v2394 = vmul.f32 %v2373, %v2390
    %v2395 = vmul.f32 %v2375, %v2391
    %v2396 = vpack.c.bf16 %v2393, %v2392
    %v2397 = vpack.c.bf16 %v2395, %v2394
    %v2402 = vunpack.c.l.b16 %v2246
    %v2403 = vunpack.c.l.b16 %v2251
    %v2404 = vunpack.c.l.b16 %v2256
    %v2405 = vunpack.c.l.b16 %v2261
    %v2406 = vpack.c.b16 %v2403, %v2402
    %v2407 = vpack.c.b16 %v2405, %v2404
    %v2411 = vsel %vm2351, %v2396, 0
    %v2414 = vsel %vm2351, %v2397, 0
    %2416 = vmatpush.bf16.msra.mxu0 0
    %2417 = vmatpush.bf16.msra.mxu0 0
    %2418 = vmatpush.bf16.msra.mxu0 0
    %2419 = vmatpush.bf16.msra.mxu0 0
    %2420 = vmatpush.bf16.msra.mxu0 0
    %2421 = vmatpush.bf16.msra.mxu0 0
    %2422 = vmatpush.bf16.msra.mxu0 %v2407
    %2423 = vmatpush.bf16.msra.mxu0 %v2406
    %2424 = vmatmul.bf16.gmra.mxu0 %v2411
    %v2425 = vpop.f32.mrf.mxu0
    %v2426 = vadd.f32 0.0, %v2425
    %v2427 = vpop.f32.mrf.mxu0
    %v2428 = vadd.f32 0.0, %v2427
    %2429 = vmatmul.bf16.gmra.mxu0 %v2414
    %v2430 = vpop.f32.mrf.mxu0
    %v2431 = vadd.f32 0.0, %v2430
    %v2432 = vpop.f32.mrf.mxu0
    %v2433 = vadd.f32 0.0, %v2432
    %2434 = vdwg.mxu0
    %v2435 = vpack.c.bf16 %v2428, %v2426
    %v2436 = vpack.c.bf16 %v2433, %v2431
    %v2437 = vld [vmem:[#allocation7] sm:$0xff]
    %v2438 = vld [vmem:[#allocation7 + $0x8] sm:$0xf]
    %v2439 = vld [vmem:[#allocation7 + $0xc] sm:$0xff]
    %v2440 = vld [vmem:[#allocation7 + $0x14] sm:$0xf]
    %v2441 = vld [vmem:[#allocation7 + $0x18] sm:$0xff]
    %v2442 = vld [vmem:[#allocation7 + $0x20] sm:$0xf]
    %v2443 = vld [vmem:[#allocation7 + $0x24] sm:$0xff]
    %v2444 = vld [vmem:[#allocation7 + $0x2c] sm:$0xf]
    %v2445 = vld [vmem:[#allocation7 + $0x30] sm:$0xff]
    %v2446 = vld [vmem:[#allocation7 + $0x38] sm:$0xf]
    %v2447 = vld [vmem:[#allocation7 + $0x3c] sm:$0xff]
    %v2448 = vld [vmem:[#allocation7 + $0x44] sm:$0xf]
    %v2449 = vld [vmem:[#allocation7 + $0x48] sm:$0xff]
    %v2450 = vld [vmem:[#allocation7 + $0x50] sm:$0xf]
    %v2451 = vld [vmem:[#allocation7 + $0x54] sm:$0xff]
    %v2452 = vld [vmem:[#allocation7 + $0x5c] sm:$0xf]
    %2453 = vrot.lane.b32.xlu0 %v2303, 64
    %v2454 = vpop.permute.xlu0 %2453
    %2455 = vrot.lane.b32.xlu0 %v2304, 64
    %v2456 = vpop.permute.xlu0 %2455
    %2457 = vrot.lane.b32.xlu0 %v2313, 64
    %v2458 = vpop.permute.xlu0 %2457
    %2459 = vrot.lane.b32.xlu0 %v2314, 64
    %v2460 = vpop.permute.xlu0 %2459
    %v2462 = vsel %vm2315, %v2454, 0
    %v2465 = vsel %vm2315, %v2456, 0
    %v2468 = vsel %vm2315, %v2458, 0
    %v2471 = vsel %vm2315, %v2460, 0
    %2473 = vmatpush.bf16.xpose.msra.mxu0 0
    %2474 = vmatpush.bf16.xpose.msra.mxu0 0
    %2475 = vmatpush.bf16.xpose.msra.mxu0 0
    %2476 = vmatpush.bf16.xpose.msra.mxu0 0
    %2477 = vmatpush.bf16.xpose.msra.mxu0 0
    %2478 = vmatpush.bf16.xpose.msra.mxu0 0
    %2479 = vmatpush.bf16.xpose.msra.mxu0 %v2471
    %2480 = vmatpush.bf16.xpose.msra.mxu0 %v2468
    %2481 = vmatmul.bf16.gmra.mxu0 %v2462
    %v2482 = vpop.f32.mrf.mxu0
    %v2483 = vadd.f32 0.0, %v2482
    %v2484 = vpop.f32.mrf.mxu0
    %v2485 = vadd.f32 0.0, %v2484
    %2486 = vmatmul.bf16.gmra.mxu0 %v2465
    %v2487 = vpop.f32.mrf.mxu0
    %v2488 = vadd.f32 0.0, %v2487
    %v2489 = vpop.f32.mrf.mxu0
    %v2490 = vadd.f32 0.0, %v2489
    %2491 = vdwg.mxu0
    %v2492 = vsel %vm2290, %v2483, -inf
    %v2493 = vsel %vm2291, %v2485, -inf
    %v2494 = vsel %vm2292, %v2488, -inf
    %v2495 = vsel %vm2293, %v2490, -inf
    %v2496 = vsel %vm2351, %v2492, -inf
    %2497 = vmax.xlane.f32.xlu0 %v2496
    %v2498 = vpop.xlane.xlu0 %2497
    %v2499 = vsel %vm2351, %v2493, -inf
    %2500 = vmax.xlane.f32.xlu0 %v2499
    %v2501 = vpop.xlane.xlu0 %2500
    %v2502 = vsel %vm2351, %v2494, -inf
    %2503 = vmax.xlane.f32.xlu0 %v2502
    %v2504 = vpop.xlane.xlu0 %2503
    %v2505 = vsel %vm2351, %v2495, -inf
    %2506 = vmax.xlane.f32.xlu0 %v2505
    %v2507 = vpop.xlane.xlu0 %2506
    %v2508 = vsub.f32 %v2492, %v2498
    %v2509 = vsub.f32 %v2493, %v2501
    %v2510 = vsub.f32 %v2494, %v2504
    %v2511 = vsub.f32 %v2495, %v2507
    %v2512 = vmul.f32 %v2508, 1.442695
    %v2513 = vpow.pop %v2512
    %v2514 = vmul.f32 %v2509, 1.442695
    %v2515 = vpow.pop %v2514
    %v2516 = vmul.f32 %v2510, 1.442695
    %v2517 = vpow.pop %v2516
    %v2518 = vmul.f32 %v2511, 1.442695
    %v2519 = vpow.pop %v2518
    %v2520 = vsel %vm2351, %v2513, 0.0
    %2521 = vadd.xlane.f32.xlu0 %v2520
    %v2522 = vpop.xlane.xlu0 %2521
    %v2523 = vsel %vm2351, %v2515, 0.0
    %2524 = vadd.xlane.f32.xlu0 %v2523
    %v2525 = vpop.xlane.xlu0 %2524
    %v2526 = vsel %vm2351, %v2517, 0.0
    %2527 = vadd.xlane.f32.xlu0 %v2526
    %v2528 = vpop.xlane.xlu0 %2527
    %v2529 = vsel %vm2351, %v2519, 0.0
    %2530 = vadd.xlane.f32.xlu0 %v2529
    %v2531 = vpop.xlane.xlu0 %2530
    %v2532 = vrcp.pop %v2522
    %v2533 = vrcp.pop %v2525
    %v2534 = vrcp.pop %v2528
    %v2535 = vrcp.pop %v2531
    %v2536 = vmul.f32 %v2513, %v2532
    %v2537 = vmul.f32 %v2515, %v2533
    %v2538 = vmul.f32 %v2517, %v2534
    %v2539 = vmul.f32 %v2519, %v2535
    %v2540 = vpack.c.bf16 %v2537, %v2536
    %v2541 = vpack.c.bf16 %v2539, %v2538
    %2542 = vrot.lane.b32.xlu0 %v2406, 64
    %v2543 = vpop.permute.xlu0 %2542
    %2544 = vrot.lane.b32.xlu0 %v2407, 64
    %v2545 = vpop.permute.xlu0 %2544
    %v2549 = vsel %vm2351, %v2540, 0
    %v2552 = vsel %vm2351, %v2541, 0
    %2554 = vmatpush.bf16.msra.mxu0 0
    %2555 = vmatpush.bf16.msra.mxu0 0
    %2556 = vmatpush.bf16.msra.mxu0 0
    %2557 = vmatpush.bf16.msra.mxu0 0
    %2558 = vmatpush.bf16.msra.mxu0 0
    %2559 = vmatpush.bf16.msra.mxu0 0
    %2560 = vmatpush.bf16.msra.mxu0 %v2545
    %2561 = vmatpush.bf16.msra.mxu0 %v2543
    %2562 = vmatmul.bf16.gmra.mxu0 %v2549
    %v2563 = vpop.f32.mrf.mxu0
    %v2564 = vadd.f32 0.0, %v2563
    %v2565 = vpop.f32.mrf.mxu0
    %v2566 = vadd.f32 0.0, %v2565
    %2567 = vmatmul.bf16.gmra.mxu0 %v2552
    %v2568 = vpop.f32.mrf.mxu0
    %v2569 = vadd.f32 0.0, %v2568
    %v2570 = vpop.f32.mrf.mxu0
    %v2571 = vadd.f32 0.0, %v2570
    %2572 = vdwg.mxu0
    %v2573 = vpack.c.bf16 %v2566, %v2564
    %v2574 = vpack.c.bf16 %v2571, %v2569
    %v2575 = vld [vmem:[#allocation7 + $0x60] sm:$0xff]
    %v2576 = vld [vmem:[#allocation7 + $0x68] sm:$0xf]
    %v2577 = vld [vmem:[#allocation7 + $0x6c] sm:$0xff]
    %v2578 = vld [vmem:[#allocation7 + $0x74] sm:$0xf]
    %v2579 = vld [vmem:[#allocation7 + $0x78] sm:$0xff]
    %v2580 = vld [vmem:[#allocation7 + $0x80] sm:$0xf]
    %v2581 = vld [vmem:[#allocation7 + $0x84] sm:$0xff]
    %v2582 = vld [vmem:[#allocation7 + $0x8c] sm:$0xf]
    %v2583 = vld [vmem:[#allocation7 + $0x90] sm:$0xff]
    %v2584 = vld [vmem:[#allocation7 + $0x98] sm:$0xf]
    %v2585 = vld [vmem:[#allocation7 + $0x9c] sm:$0xff]
    %v2586 = vld [vmem:[#allocation7 + $0xa4] sm:$0xf]
    %v2587 = vld [vmem:[#allocation7 + $0xa8] sm:$0xff]
    %v2588 = vld [vmem:[#allocation7 + $0xb0] sm:$0xf]
    %v2589 = vld [vmem:[#allocation7 + $0xb4] sm:$0xff]
    %v2590 = vld [vmem:[#allocation7 + $0xbc] sm:$0xf]
    %v2607 = vunpack.c.l.b16 %v2575
    %v2608 = vunpack.c.h.b16 %v2575
    %v2609 = vunpack.c.l.b16 %v2576
    %v2610 = vunpack.c.l.b16 %v2577
    %v2611 = vunpack.c.h.b16 %v2577
    %v2612 = vunpack.c.l.b16 %v2578
    %v2613 = vunpack.c.l.b16 %v2579
    %v2614 = vunpack.c.h.b16 %v2579
    %v2615 = vunpack.c.l.b16 %v2580
    %v2616 = vunpack.c.l.b16 %v2581
    %v2617 = vunpack.c.h.b16 %v2581
    %v2618 = vunpack.c.l.b16 %v2582
    %v2619 = vunpack.c.l.b16 %v2583
    %v2620 = vunpack.c.h.b16 %v2583
    %v2621 = vunpack.c.l.b16 %v2584
    %v2622 = vunpack.c.l.b16 %v2585
    %v2623 = vunpack.c.h.b16 %v2585
    %v2624 = vunpack.c.l.b16 %v2586
    %v2625 = vunpack.c.l.b16 %v2587
    %v2626 = vunpack.c.h.b16 %v2587
    %v2627 = vunpack.c.l.b16 %v2588
    %v2628 = vunpack.c.l.b16 %v2589
    %v2629 = vunpack.c.h.b16 %v2589
    %v2630 = vunpack.c.l.b16 %v2590
    %v2631 = vpack.c.b16 %v2610, %v2607
    %v2632 = vpack.c.b16 %v2611, %v2608
    %v2633 = vpack.c.b16 %v2612, %v2609
    %v2634 = vpack.c.b16 %v2616, %v2613
    %v2635 = vpack.c.b16 %v2617, %v2614
    %v2636 = vpack.c.b16 %v2618, %v2615
    %v2637 = vpack.c.b16 %v2622, %v2619
    %v2638 = vpack.c.b16 %v2623, %v2620
    %v2639 = vpack.c.b16 %v2624, %v2621
    %v2640 = vpack.c.b16 %v2628, %v2625
    %v2641 = vpack.c.b16 %v2629, %v2626
    %v2642 = vpack.c.b16 %v2630, %v2627
    %v2656 = vsel %vm2315, %v2573, 0
    %v2659 = vsel %vm2315, %v2574, 0
    %2661 = vmatpush.bf16.msra.mxu0 0
    %2662 = vmatpush.bf16.msra.mxu0 0
    %2663 = vmatpush.bf16.msra.mxu0 0
    %2664 = vmatpush.bf16.msra.mxu0 0
    %2665 = vmatpush.bf16.msra.mxu0 %v2640
    %2666 = vmatpush.bf16.msra.mxu0 %v2637
    %2667 = vmatpush.bf16.msra.mxu0 %v2634
    %2668 = vmatpush.bf16.msra.mxu0 %v2631
    %2669 = vmatmul.bf16.gmra.mxu0 %v2656
    %v2670 = vpop.f32.mrf.mxu0
    %v2671 = vadd.f32 0.0, %v2670
    %v2672 = vpop.f32.mrf.mxu0
    %v2673 = vadd.f32 0.0, %v2672
    %2674 = vmatmul.bf16.gmra.mxu0 %v2659
    %v2675 = vpop.f32.mrf.mxu0
    %v2676 = vadd.f32 0.0, %v2675
    %v2677 = vpop.f32.mrf.mxu0
    %v2678 = vadd.f32 0.0, %v2677
    %2679 = vdwg.mxu0
    %2680 = vmatpush.bf16.msra.mxu0 0
    %2681 = vmatpush.bf16.msra.mxu0 0
    %2682 = vmatpush.bf16.msra.mxu0 0
    %2683 = vmatpush.bf16.msra.mxu0 0
    %2684 = vmatpush.bf16.msra.mxu0 %v2641
    %2685 = vmatpush.bf16.msra.mxu0 %v2638
    %2686 = vmatpush.bf16.msra.mxu0 %v2635
    %2687 = vmatpush.bf16.msra.mxu0 %v2632
    %2688 = vmatmul.bf16.gmra.mxu0 %v2656
    %v2689 = vpop.f32.mrf.mxu0
    %v2690 = vadd.f32 0.0, %v2689
    %v2691 = vpop.f32.mrf.mxu0
    %v2692 = vadd.f32 0.0, %v2691
    %2693 = vmatmul.bf16.gmra.mxu0 %v2659
    %v2694 = vpop.f32.mrf.mxu0
    %v2695 = vadd.f32 0.0, %v2694
    %v2696 = vpop.f32.mrf.mxu0
    %v2697 = vadd.f32 0.0, %v2696
    %2698 = vdwg.mxu0
    %2699 = vmatpush.bf16.msra.mxu0 0
    %2700 = vmatpush.bf16.msra.mxu0 0
    %2701 = vmatpush.bf16.msra.mxu0 0
    %2702 = vmatpush.bf16.msra.mxu0 0
    %2703 = vmatpush.bf16.msra.mxu0 %v2642
    %2704 = vmatpush.bf16.msra.mxu0 %v2639
    %2705 = vmatpush.bf16.msra.mxu0 %v2636
    %2706 = vmatpush.bf16.msra.mxu0 %v2633
    %2707 = vmatmul.bf16.gmra.mxu0 %v2656
    %v2708 = vpop.f32.mrf.mxu0
    %v2709 = vadd.f32 0.0, %v2708
    %v2710 = vpop.f32.mrf.mxu0
    %v2711 = vadd.f32 0.0, %v2710
    %2712 = vmatmul.bf16.gmra.mxu0 %v2659
    %v2713 = vpop.f32.mrf.mxu0
    %v2714 = vadd.f32 0.0, %v2713
    %v2715 = vpop.f32.mrf.mxu0
    %v2716 = vadd.f32 0.0, %v2715
    %2717 = vdwg.mxu0
    %v2734 = vunpack.c.l.b16 %v2437
    %v2735 = vunpack.c.h.b16 %v2437
    %v2736 = vunpack.c.l.b16 %v2438
    %v2737 = vunpack.c.l.b16 %v2439
    %v2738 = vunpack.c.h.b16 %v2439
    %v2739 = vunpack.c.l.b16 %v2440
    %v2740 = vunpack.c.l.b16 %v2441
    %v2741 = vunpack.c.h.b16 %v2441
    %v2742 = vunpack.c.l.b16 %v2442
    %v2743 = vunpack.c.l.b16 %v2443
    %v2744 = vunpack.c.h.b16 %v2443
    %v2745 = vunpack.c.l.b16 %v2444
    %v2746 = vunpack.c.l.b16 %v2445
    %v2747 = vunpack.c.h.b16 %v2445
    %v2748 = vunpack.c.l.b16 %v2446
    %v2749 = vunpack.c.l.b16 %v2447
    %v2750 = vunpack.c.h.b16 %v2447
    %v2751 = vunpack.c.l.b16 %v2448
    %v2752 = vunpack.c.l.b16 %v2449
    %v2753 = vunpack.c.h.b16 %v2449
    %v2754 = vunpack.c.l.b16 %v2450
    %v2755 = vunpack.c.l.b16 %v2451
    %v2756 = vunpack.c.h.b16 %v2451
    %v2757 = vunpack.c.l.b16 %v2452
    %v2758 = vpack.c.b16 %v2737, %v2734
    %v2759 = vpack.c.b16 %v2738, %v2735
    %v2760 = vpack.c.b16 %v2739, %v2736
    %v2761 = vpack.c.b16 %v2743, %v2740
    %v2762 = vpack.c.b16 %v2744, %v2741
    %v2763 = vpack.c.b16 %v2745, %v2742
    %v2764 = vpack.c.b16 %v2749, %v2746
    %v2765 = vpack.c.b16 %v2750, %v2747
    %v2766 = vpack.c.b16 %v2751, %v2748
    %v2767 = vpack.c.b16 %v2755, %v2752
    %v2768 = vpack.c.b16 %v2756, %v2753
    %v2769 = vpack.c.b16 %v2757, %v2754
    %v2783 = vsel %vm2315, %v2435, 0
    %v2786 = vsel %vm2315, %v2436, 0
    %2788 = vmatpush.bf16.msra.mxu0 0
    %2789 = vmatpush.bf16.msra.mxu0 0
    %2790 = vmatpush.bf16.msra.mxu0 0
    %2791 = vmatpush.bf16.msra.mxu0 0
    %2792 = vmatpush.bf16.msra.mxu0 %v2767
    %2793 = vmatpush.bf16.msra.mxu0 %v2764
    %2794 = vmatpush.bf16.msra.mxu0 %v2761
    %2795 = vmatpush.bf16.msra.mxu0 %v2758
    %2796 = vmatmul.bf16.gmra.mxu0 %v2783
    %v2797 = vpop.f32.mrf.mxu0
    %v2798 = vadd.f32 %v2671, %v2797
    %v2799 = vpop.f32.mrf.mxu0
    %v2800 = vadd.f32 %v2673, %v2799
    %2801 = vmatmul.bf16.gmra.mxu0 %v2786
    %v2802 = vpop.f32.mrf.mxu0
    %v2803 = vadd.f32 %v2676, %v2802
    %v2804 = vpop.f32.mrf.mxu0
    %v2805 = vadd.f32 %v2678, %v2804
    %2806 = vdwg.mxu0
    %2807 = vmatpush.bf16.msra.mxu0 0
    %2808 = vmatpush.bf16.msra.mxu0 0
    %2809 = vmatpush.bf16.msra.mxu0 0
    %2810 = vmatpush.bf16.msra.mxu0 0
    %2811 = vmatpush.bf16.msra.mxu0 %v2768
    %2812 = vmatpush.bf16.msra.mxu0 %v2765
    %2813 = vmatpush.bf16.msra.mxu0 %v2762
    %2814 = vmatpush.bf16.msra.mxu0 %v2759
    %2815 = vmatmul.bf16.gmra.mxu0 %v2783
    %v2816 = vpop.f32.mrf.mxu0
    %v2817 = vadd.f32 %v2690, %v2816
    %v2818 = vpop.f32.mrf.mxu0
    %v2819 = vadd.f32 %v2692, %v2818
    %2820 = vmatmul.bf16.gmra.mxu0 %v2786
    %v2821 = vpop.f32.mrf.mxu0
    %v2822 = vadd.f32 %v2695, %v2821
    %v2823 = vpop.f32.mrf.mxu0
    %v2824 = vadd.f32 %v2697, %v2823
    %2825 = vdwg.mxu0
    %2826 = vmatpush.bf16.msra.mxu0 0
    %2827 = vmatpush.bf16.msra.mxu0 0
    %2828 = vmatpush.bf16.msra.mxu0 0
    %2829 = vmatpush.bf16.msra.mxu0 0
    %2830 = vmatpush.bf16.msra.mxu0 %v2769
    %2831 = vmatpush.bf16.msra.mxu0 %v2766
    %2832 = vmatpush.bf16.msra.mxu0 %v2763
    %2833 = vmatpush.bf16.msra.mxu0 %v2760
    %2834 = vmatmul.bf16.gmra.mxu0 %v2783
    %v2835 = vpop.f32.mrf.mxu0
    %v2836 = vadd.f32 %v2709, %v2835
    %v2837 = vpop.f32.mrf.mxu0
    %v2838 = vadd.f32 %v2711, %v2837
    %2839 = vmatmul.bf16.gmra.mxu0 %v2786
    %v2840 = vpop.f32.mrf.mxu0
    %v2841 = vadd.f32 %v2714, %v2840
    %v2842 = vpop.f32.mrf.mxu0
    %v2843 = vadd.f32 %v2716, %v2842
    %2844 = vdwg.mxu0
    %v2845 = vunpack.c.h.b16 %v2243
    %v2846 = vunpack.c.h.b16 %v2248
    %v2847 = vunpack.c.h.b16 %v2253
    %v2848 = vunpack.c.h.b16 %v2258
    %v2849 = vpack.c.b16 %v2846, %v2845
    %v2850 = vpack.c.b16 %v2848, %v2847
    %v2855 = vunpack.c.l.b16 %v2245
    %v2856 = vunpack.c.l.b16 %v2250
    %v2857 = vunpack.c.l.b16 %v2255
    %v2858 = vunpack.c.l.b16 %v2260
    %v2859 = vpack.c.b16 %v2856, %v2855
    %v2860 = vpack.c.b16 %v2858, %v2857
    %v2862 = vsel %vm2315, %v2849, 0
    %v2865 = vsel %vm2315, %v2850, 0
    %v2868 = vsel %vm2315, %v2859, 0
    %v2871 = vsel %vm2315, %v2860, 0
    %2873 = vmatpush.bf16.xpose.msra.mxu0 0
    %2874 = vmatpush.bf16.xpose.msra.mxu0 0
    %2875 = vmatpush.bf16.xpose.msra.mxu0 0
    %2876 = vmatpush.bf16.xpose.msra.mxu0 0
    %2877 = vmatpush.bf16.xpose.msra.mxu0 0
    %2878 = vmatpush.bf16.xpose.msra.mxu0 0
    %2879 = vmatpush.bf16.xpose.msra.mxu0 %v2871
    %2880 = vmatpush.bf16.xpose.msra.mxu0 %v2868
    %2881 = vmatmul.bf16.gmra.mxu0 %v2862
    %v2882 = vpop.f32.mrf.mxu0
    %v2883 = vadd.f32 0.0, %v2882
    %v2884 = vpop.f32.mrf.mxu0
    %v2885 = vadd.f32 0.0, %v2884
    %2886 = vmatmul.bf16.gmra.mxu0 %v2865
    %v2887 = vpop.f32.mrf.mxu0
    %v2888 = vadd.f32 0.0, %v2887
    %v2889 = vpop.f32.mrf.mxu0
    %v2890 = vadd.f32 0.0, %v2889
    %2891 = vdwg.mxu0
    %v2892 = vsel %vm2290, %v2883, -inf
    %v2893 = vsel %vm2291, %v2885, -inf
    %v2894 = vsel %vm2292, %v2888, -inf
    %v2895 = vsel %vm2293, %v2890, -inf
    %v2896 = vsel %vm2351, %v2892, -inf
    %2897 = vmax.xlane.f32.xlu0 %v2896
    %v2898 = vpop.xlane.xlu0 %2897
    %v2899 = vsel %vm2351, %v2893, -inf
    %2900 = vmax.xlane.f32.xlu0 %v2899
    %v2901 = vpop.xlane.xlu0 %2900
    %v2902 = vsel %vm2351, %v2894, -inf
    %2903 = vmax.xlane.f32.xlu0 %v2902
    %v2904 = vpop.xlane.xlu0 %2903
    %v2905 = vsel %vm2351, %v2895, -inf
    %2906 = vmax.xlane.f32.xlu0 %v2905
    %v2907 = vpop.xlane.xlu0 %2906
    %v2908 = vsub.f32 %v2892, %v2898
    %v2909 = vsub.f32 %v2893, %v2901
    %v2910 = vsub.f32 %v2894, %v2904
    %v2911 = vsub.f32 %v2895, %v2907
    %v2912 = vmul.f32 %v2908, 1.442695
    %v2913 = vpow.pop %v2912
    %v2914 = vmul.f32 %v2909, 1.442695
    %v2915 = vpow.pop %v2914
    %v2916 = vmul.f32 %v2910, 1.442695
    %v2917 = vpow.pop %v2916
    %v2918 = vmul.f32 %v2911, 1.442695
    %v2919 = vpow.pop %v2918
    %v2920 = vsel %vm2351, %v2913, 0.0
    %2921 = vadd.xlane.f32.xlu0 %v2920
    %v2922 = vpop.xlane.xlu0 %2921
    %v2923 = vsel %vm2351, %v2915, 0.0
    %2924 = vadd.xlane.f32.xlu0 %v2923
    %v2925 = vpop.xlane.xlu0 %2924
    %v2926 = vsel %vm2351, %v2917, 0.0
    %2927 = vadd.xlane.f32.xlu0 %v2926
    %v2928 = vpop.xlane.xlu0 %2927
    %v2929 = vsel %vm2351, %v2919, 0.0
    %2930 = vadd.xlane.f32.xlu0 %v2929
    %v2931 = vpop.xlane.xlu0 %2930
    %v2932 = vrcp.pop %v2922
    %v2933 = vrcp.pop %v2925
    %v2934 = vrcp.pop %v2928
    %v2935 = vrcp.pop %v2931
    %v2936 = vmul.f32 %v2913, %v2932
    %v2937 = vmul.f32 %v2915, %v2933
    %v2938 = vmul.f32 %v2917, %v2934
    %v2939 = vmul.f32 %v2919, %v2935
    %v2940 = vpack.c.bf16 %v2937, %v2936
    %v2941 = vpack.c.bf16 %v2939, %v2938
    %v2942 = vunpack.c.h.b16 %v2246
    %v2943 = vunpack.c.h.b16 %v2251
    %v2944 = vunpack.c.h.b16 %v2256
    %v2945 = vunpack.c.h.b16 %v2261
    %v2946 = vpack.c.b16 %v2943, %v2942
    %v2947 = vpack.c.b16 %v2945, %v2944
    %v2951 = vsel %vm2351, %v2940, 0
    %v2954 = vsel %vm2351, %v2941, 0
    %2956 = vmatpush.bf16.msra.mxu0 0
    %2957 = vmatpush.bf16.msra.mxu0 0
    %2958 = vmatpush.bf16.msra.mxu0 0
    %2959 = vmatpush.bf16.msra.mxu0 0
    %2960 = vmatpush.bf16.msra.mxu0 0
    %2961 = vmatpush.bf16.msra.mxu0 0
    %2962 = vmatpush.bf16.msra.mxu0 %v2947
    %2963 = vmatpush.bf16.msra.mxu0 %v2946
    %2964 = vmatmul.bf16.gmra.mxu0 %v2951
    %v2965 = vpop.f32.mrf.mxu0
    %v2966 = vadd.f32 0.0, %v2965
    %v2967 = vpop.f32.mrf.mxu0
    %v2968 = vadd.f32 0.0, %v2967
    %2969 = vmatmul.bf16.gmra.mxu0 %v2954
    %v2970 = vpop.f32.mrf.mxu0
    %v2971 = vadd.f32 0.0, %v2970
    %v2972 = vpop.f32.mrf.mxu0
    %v2973 = vadd.f32 0.0, %v2972
    %2974 = vdwg.mxu0
    %v2975 = vpack.c.bf16 %v2968, %v2966
    %v2976 = vpack.c.bf16 %v2973, %v2971
    %v2977 = vld [vmem:[#allocation7 + $0xc0] sm:$0xff]
    %v2978 = vld [vmem:[#allocation7 + $0xc8] sm:$0xf]
    %v2979 = vld [vmem:[#allocation7 + $0xcc] sm:$0xff]
    %v2980 = vld [vmem:[#allocation7 + $0xd4] sm:$0xf]
    %v2981 = vld [vmem:[#allocation7 + $0xd8] sm:$0xff]
    %v2982 = vld [vmem:[#allocation7 + $0xe0] sm:$0xf]
    %v2983 = vld [vmem:[#allocation7 + $0xe4] sm:$0xff]
    %v2984 = vld [vmem:[#allocation7 + $0xec] sm:$0xf]
    %v2985 = vld [vmem:[#allocation7 + $0xf0] sm:$0xff]
    %v2986 = vld [vmem:[#allocation7 + $0xf8] sm:$0xf]
    %v2987 = vld [vmem:[#allocation7 + $0xfc] sm:$0xff]
    %v2988 = vld [vmem:[#allocation7 + $0x104] sm:$0xf]
    %v2989 = vld [vmem:[#allocation7 + $0x108] sm:$0xff]
    %v2990 = vld [vmem:[#allocation7 + $0x110] sm:$0xf]
    %v2991 = vld [vmem:[#allocation7 + $0x114] sm:$0xff]
    %v2992 = vld [vmem:[#allocation7 + $0x11c] sm:$0xf]
    %v3009 = vunpack.c.l.b16 %v2977
    %v3010 = vunpack.c.h.b16 %v2977
    %v3011 = vunpack.c.l.b16 %v2978
    %v3012 = vunpack.c.l.b16 %v2979
    %v3013 = vunpack.c.h.b16 %v2979
    %v3014 = vunpack.c.l.b16 %v2980
    %v3015 = vunpack.c.l.b16 %v2981
    %v3016 = vunpack.c.h.b16 %v2981
    %v3017 = vunpack.c.l.b16 %v2982
    %v3018 = vunpack.c.l.b16 %v2983
    %v3019 = vunpack.c.h.b16 %v2983
    %v3020 = vunpack.c.l.b16 %v2984
    %v3021 = vunpack.c.l.b16 %v2985
    %v3022 = vunpack.c.h.b16 %v2985
    %v3023 = vunpack.c.l.b16 %v2986
    %v3024 = vunpack.c.l.b16 %v2987
    %v3025 = vunpack.c.h.b16 %v2987
    %v3026 = vunpack.c.l.b16 %v2988
    %v3027 = vunpack.c.l.b16 %v2989
    %v3028 = vunpack.c.h.b16 %v2989
    %v3029 = vunpack.c.l.b16 %v2990
    %v3030 = vunpack.c.l.b16 %v2991
    %v3031 = vunpack.c.h.b16 %v2991
    %v3032 = vunpack.c.l.b16 %v2992
    %v3033 = vpack.c.b16 %v3012, %v3009
    %v3034 = vpack.c.b16 %v3013, %v3010
    %v3035 = vpack.c.b16 %v3014, %v3011
    %v3036 = vpack.c.b16 %v3018, %v3015
    %v3037 = vpack.c.b16 %v3019, %v3016
    %v3038 = vpack.c.b16 %v3020, %v3017
    %v3039 = vpack.c.b16 %v3024, %v3021
    %v3040 = vpack.c.b16 %v3025, %v3022
    %v3041 = vpack.c.b16 %v3026, %v3023
    %v3042 = vpack.c.b16 %v3030, %v3027
    %v3043 = vpack.c.b16 %v3031, %v3028
    %v3044 = vpack.c.b16 %v3032, %v3029
    %v3058 = vsel %vm2315, %v2975, 0
    %v3061 = vsel %vm2315, %v2976, 0
    %3063 = vmatpush.bf16.msra.mxu0 0
    %3064 = vmatpush.bf16.msra.mxu0 0
    %3065 = vmatpush.bf16.msra.mxu0 0
    %3066 = vmatpush.bf16.msra.mxu0 0
    %3067 = vmatpush.bf16.msra.mxu0 %v3042
    %3068 = vmatpush.bf16.msra.mxu0 %v3039
    %3069 = vmatpush.bf16.msra.mxu0 %v3036
    %3070 = vmatpush.bf16.msra.mxu0 %v3033
    %3071 = vmatmul.bf16.gmra.mxu0 %v3058
    %v3072 = vpop.f32.mrf.mxu0
    %v3073 = vadd.f32 0.0, %v3072
    %v3074 = vpop.f32.mrf.mxu0
    %v3075 = vadd.f32 0.0, %v3074
    %3076 = vmatmul.bf16.gmra.mxu0 %v3061
    %v3077 = vpop.f32.mrf.mxu0
    %v3078 = vadd.f32 0.0, %v3077
    %v3079 = vpop.f32.mrf.mxu0
    %v3080 = vadd.f32 0.0, %v3079
    %3081 = vdwg.mxu0
    %3082 = vmatpush.bf16.msra.mxu0 0
    %3083 = vmatpush.bf16.msra.mxu0 0
    %3084 = vmatpush.bf16.msra.mxu0 0
    %3085 = vmatpush.bf16.msra.mxu0 0
    %3086 = vmatpush.bf16.msra.mxu0 %v3043
    %3087 = vmatpush.bf16.msra.mxu0 %v3040
    %3088 = vmatpush.bf16.msra.mxu0 %v3037
    %3089 = vmatpush.bf16.msra.mxu0 %v3034
    %3090 = vmatmul.bf16.gmra.mxu0 %v3058
    %v3091 = vpop.f32.mrf.mxu0
    %v3092 = vadd.f32 0.0, %v3091
    %v3093 = vpop.f32.mrf.mxu0
    %v3094 = vadd.f32 0.0, %v3093
    %3095 = vmatmul.bf16.gmra.mxu0 %v3061
    %v3096 = vpop.f32.mrf.mxu0
    %v3097 = vadd.f32 0.0, %v3096
    %v3098 = vpop.f32.mrf.mxu0
    %v3099 = vadd.f32 0.0, %v3098
    %3100 = vdwg.mxu0
    %3101 = vmatpush.bf16.msra.mxu0 0
    %3102 = vmatpush.bf16.msra.mxu0 0
    %3103 = vmatpush.bf16.msra.mxu0 0
    %3104 = vmatpush.bf16.msra.mxu0 0
    %3105 = vmatpush.bf16.msra.mxu0 %v3044
    %3106 = vmatpush.bf16.msra.mxu0 %v3041
    %3107 = vmatpush.bf16.msra.mxu0 %v3038
    %3108 = vmatpush.bf16.msra.mxu0 %v3035
    %3109 = vmatmul.bf16.gmra.mxu0 %v3058
    %v3110 = vpop.f32.mrf.mxu0
    %v3111 = vadd.f32 0.0, %v3110
    %v3112 = vpop.f32.mrf.mxu0
    %v3113 = vadd.f32 0.0, %v3112
    %3114 = vmatmul.bf16.gmra.mxu0 %v3061
    %v3115 = vpop.f32.mrf.mxu0
    %v3116 = vadd.f32 0.0, %v3115
    %v3117 = vpop.f32.mrf.mxu0
    %v3118 = vadd.f32 0.0, %v3117
    %3119 = vdwg.mxu0
    %v3120 = vadd.f32 %v2798, %v3073
    %v3121 = vadd.f32 %v2817, %v3092
    %v3122 = vadd.f32 %v2836, %v3111
    %v3123 = vadd.f32 %v2800, %v3075
    %v3124 = vadd.f32 %v2819, %v3094
    %v3125 = vadd.f32 %v2838, %v3113
    %v3126 = vadd.f32 %v2803, %v3078
    %v3127 = vadd.f32 %v2822, %v3097
    %v3128 = vadd.f32 %v2841, %v3116
    %v3129 = vadd.f32 %v2805, %v3080
    %v3130 = vadd.f32 %v2824, %v3099
    %v3131 = vadd.f32 %v2843, %v3118
    %3132 = vrot.lane.b32.xlu0 %v2849, 64
    %v3133 = vpop.permute.xlu0 %3132
    %3134 = vrot.lane.b32.xlu0 %v2850, 64
    %v3135 = vpop.permute.xlu0 %3134
    %3136 = vrot.lane.b32.xlu0 %v2859, 64
    %v3137 = vpop.permute.xlu0 %3136
    %3138 = vrot.lane.b32.xlu0 %v2860, 64
    %v3139 = vpop.permute.xlu0 %3138
    %v3141 = vsel %vm2315, %v3133, 0
    %v3144 = vsel %vm2315, %v3135, 0
    %v3147 = vsel %vm2315, %v3137, 0
    %v3150 = vsel %vm2315, %v3139, 0
    %3152 = vmatpush.bf16.xpose.msra.mxu0 0
    %3153 = vmatpush.bf16.xpose.msra.mxu0 0
    %3154 = vmatpush.bf16.xpose.msra.mxu0 0
    %3155 = vmatpush.bf16.xpose.msra.mxu0 0
    %3156 = vmatpush.bf16.xpose.msra.mxu0 0
    %3157 = vmatpush.bf16.xpose.msra.mxu0 0
    %3158 = vmatpush.bf16.xpose.msra.mxu0 %v3150
    %3159 = vmatpush.bf16.xpose.msra.mxu0 %v3147
    %3160 = vmatmul.bf16.gmra.mxu0 %v3141
    %v3161 = vpop.f32.mrf.mxu0
    %v3162 = vadd.f32 0.0, %v3161
    %v3163 = vpop.f32.mrf.mxu0
    %v3164 = vadd.f32 0.0, %v3163
    %3165 = vmatmul.bf16.gmra.mxu0 %v3144
    %v3166 = vpop.f32.mrf.mxu0
    %v3167 = vadd.f32 0.0, %v3166
    %v3168 = vpop.f32.mrf.mxu0
    %v3169 = vadd.f32 0.0, %v3168
    %3170 = vdwg.mxu0
    %v3171 = vsel %vm2290, %v3162, -inf
    %v3172 = vsel %vm2291, %v3164, -inf
    %v3173 = vsel %vm2292, %v3167, -inf
    %v3174 = vsel %vm2293, %v3169, -inf
    %v3175 = vsel %vm2351, %v3171, -inf
    %3176 = vmax.xlane.f32.xlu0 %v3175
    %v3177 = vpop.xlane.xlu0 %3176
    %v3178 = vsel %vm2351, %v3172, -inf
    %3179 = vmax.xlane.f32.xlu0 %v3178
    %v3180 = vpop.xlane.xlu0 %3179
    %v3181 = vsel %vm2351, %v3173, -inf
    %3182 = vmax.xlane.f32.xlu0 %v3181
    %v3183 = vpop.xlane.xlu0 %3182
    %v3184 = vsel %vm2351, %v3174, -inf
    %3185 = vmax.xlane.f32.xlu0 %v3184
    %v3186 = vpop.xlane.xlu0 %3185
    %v3187 = vsub.f32 %v3171, %v3177
    %v3188 = vsub.f32 %v3172, %v3180
    %v3189 = vsub.f32 %v3173, %v3183
    %v3190 = vsub.f32 %v3174, %v3186
    %v3191 = vmul.f32 %v3187, 1.442695
    %v3192 = vpow.pop %v3191
    %v3193 = vmul.f32 %v3188, 1.442695
    %v3194 = vpow.pop %v3193
    %v3195 = vmul.f32 %v3189, 1.442695
    %v3196 = vpow.pop %v3195
    %v3197 = vmul.f32 %v3190, 1.442695
    %v3198 = vpow.pop %v3197
    %v3199 = vsel %vm2351, %v3192, 0.0
    %3200 = vadd.xlane.f32.xlu0 %v3199
    %v3201 = vpop.xlane.xlu0 %3200
    %v3202 = vsel %vm2351, %v3194, 0.0
    %3203 = vadd.xlane.f32.xlu0 %v3202
    %v3204 = vpop.xlane.xlu0 %3203
    %v3205 = vsel %vm2351, %v3196, 0.0
    %3206 = vadd.xlane.f32.xlu0 %v3205
    %v3207 = vpop.xlane.xlu0 %3206
    %v3208 = vsel %vm2351, %v3198, 0.0
    %3209 = vadd.xlane.f32.xlu0 %v3208
    %v3210 = vpop.xlane.xlu0 %3209
    %v3211 = vrcp.pop %v3201
    %v3212 = vrcp.pop %v3204
    %v3213 = vrcp.pop %v3207
    %v3214 = vrcp.pop %v3210
    %v3215 = vmul.f32 %v3192, %v3211
    %v3216 = vmul.f32 %v3194, %v3212
    %v3217 = vmul.f32 %v3196, %v3213
    %v3218 = vmul.f32 %v3198, %v3214
    %v3219 = vpack.c.bf16 %v3216, %v3215
    %v3220 = vpack.c.bf16 %v3218, %v3217
    %3221 = vrot.lane.b32.xlu0 %v2946, 64
    %v3222 = vpop.permute.xlu0 %3221
    %3223 = vrot.lane.b32.xlu0 %v2947, 64
    %v3224 = vpop.permute.xlu0 %3223
    %v3228 = vsel %vm2351, %v3219, 0
    %v3231 = vsel %vm2351, %v3220, 0
    %3233 = vmatpush.bf16.msra.mxu0 0
    %3234 = vmatpush.bf16.msra.mxu0 0
    %3235 = vmatpush.bf16.msra.mxu0 0
    %3236 = vmatpush.bf16.msra.mxu0 0
    %3237 = vmatpush.bf16.msra.mxu0 0
    %3238 = vmatpush.bf16.msra.mxu0 0
    %3239 = vmatpush.bf16.msra.mxu0 %v3224
    %3240 = vmatpush.bf16.msra.mxu0 %v3222
    %3241 = vmatmul.bf16.gmra.mxu0 %v3228
    %v3242 = vpop.f32.mrf.mxu0
    %v3243 = vadd.f32 0.0, %v3242
    %v3244 = vpop.f32.mrf.mxu0
    %v3245 = vadd.f32 0.0, %v3244
    %3246 = vmatmul.bf16.gmra.mxu0 %v3231
    %v3247 = vpop.f32.mrf.mxu0
    %v3248 = vadd.f32 0.0, %v3247
    %v3249 = vpop.f32.mrf.mxu0
    %v3250 = vadd.f32 0.0, %v3249
    %3251 = vdwg.mxu0
    %v3252 = vpack.c.bf16 %v3245, %v3243
    %v3253 = vpack.c.bf16 %v3250, %v3248
    %v3254 = vld [vmem:[#allocation7 + $0x120] sm:$0xff]
    %v3255 = vld [vmem:[#allocation7 + $0x128] sm:$0xf]
    %v3256 = vld [vmem:[#allocation7 + $0x12c] sm:$0xff]
    %v3257 = vld [vmem:[#allocation7 + $0x134] sm:$0xf]
    %v3258 = vld [vmem:[#allocation7 + $0x138] sm:$0xff]
    %v3259 = vld [vmem:[#allocation7 + $0x140] sm:$0xf]
    %v3260 = vld [vmem:[#allocation7 + $0x144] sm:$0xff]
    %v3261 = vld [vmem:[#allocation7 + $0x14c] sm:$0xf]
    %v3262 = vld [vmem:[#allocation7 + $0x150] sm:$0xff]
    %v3263 = vld [vmem:[#allocation7 + $0x158] sm:$0xf]
    %v3264 = vld [vmem:[#allocation7 + $0x15c] sm:$0xff]
    %v3265 = vld [vmem:[#allocation7 + $0x164] sm:$0xf]
    %v3266 = vld [vmem:[#allocation7 + $0x168] sm:$0xff]
    %v3267 = vld [vmem:[#allocation7 + $0x170] sm:$0xf]
    %v3268 = vld [vmem:[#allocation7 + $0x174] sm:$0xff]
    %v3269 = vld [vmem:[#allocation7 + $0x17c] sm:$0xf]
    %v3286 = vunpack.c.l.b16 %v3254
    %v3287 = vunpack.c.h.b16 %v3254
    %v3288 = vunpack.c.l.b16 %v3255
    %v3289 = vunpack.c.l.b16 %v3256
    %v3290 = vunpack.c.h.b16 %v3256
    %v3291 = vunpack.c.l.b16 %v3257
    %v3292 = vunpack.c.l.b16 %v3258
    %v3293 = vunpack.c.h.b16 %v3258
    %v3294 = vunpack.c.l.b16 %v3259
    %v3295 = vunpack.c.l.b16 %v3260
    %v3296 = vunpack.c.h.b16 %v3260
    %v3297 = vunpack.c.l.b16 %v3261
    %v3298 = vunpack.c.l.b16 %v3262
    %v3299 = vunpack.c.h.b16 %v3262
    %v3300 = vunpack.c.l.b16 %v3263
    %v3301 = vunpack.c.l.b16 %v3264
    %v3302 = vunpack.c.h.b16 %v3264
    %v3303 = vunpack.c.l.b16 %v3265
    %v3304 = vunpack.c.l.b16 %v3266
    %v3305 = vunpack.c.h.b16 %v3266
    %v3306 = vunpack.c.l.b16 %v3267
    %v3307 = vunpack.c.l.b16 %v3268
    %v3308 = vunpack.c.h.b16 %v3268
    %v3309 = vunpack.c.l.b16 %v3269
    %v3310 = vpack.c.b16 %v3289, %v3286
    %v3311 = vpack.c.b16 %v3290, %v3287
    %v3312 = vpack.c.b16 %v3291, %v3288
    %v3313 = vpack.c.b16 %v3295, %v3292
    %v3314 = vpack.c.b16 %v3296, %v3293
    %v3315 = vpack.c.b16 %v3297, %v3294
    %v3316 = vpack.c.b16 %v3301, %v3298
    %v3317 = vpack.c.b16 %v3302, %v3299
    %v3318 = vpack.c.b16 %v3303, %v3300
    %v3319 = vpack.c.b16 %v3307, %v3304
    %v3320 = vpack.c.b16 %v3308, %v3305
    %v3321 = vpack.c.b16 %v3309, %v3306
    %v3335 = vsel %vm2315, %v3252, 0
    %v3338 = vsel %vm2315, %v3253, 0
    %3340 = vmatpush.bf16.msra.mxu0 0
    %3341 = vmatpush.bf16.msra.mxu0 0
    %3342 = vmatpush.bf16.msra.mxu0 0
    %3343 = vmatpush.bf16.msra.mxu0 0
    %3344 = vmatpush.bf16.msra.mxu0 %v3319
    %3345 = vmatpush.bf16.msra.mxu0 %v3316
    %3346 = vmatpush.bf16.msra.mxu0 %v3313
    %3347 = vmatpush.bf16.msra.mxu0 %v3310
    %3348 = vmatmul.bf16.gmra.mxu0 %v3335
    %v3349 = vpop.f32.mrf.mxu0
    %v3350 = vadd.f32 0.0, %v3349
    %v3351 = vpop.f32.mrf.mxu0
    %v3352 = vadd.f32 0.0, %v3351
    %3353 = vmatmul.bf16.gmra.mxu0 %v3338
    %v3354 = vpop.f32.mrf.mxu0
    %v3355 = vadd.f32 0.0, %v3354
    %v3356 = vpop.f32.mrf.mxu0
    %v3357 = vadd.f32 0.0, %v3356
    %3358 = vdwg.mxu0
    %3359 = vmatpush.bf16.msra.mxu0 0
    %3360 = vmatpush.bf16.msra.mxu0 0
    %3361 = vmatpush.bf16.msra.mxu0 0
    %3362 = vmatpush.bf16.msra.mxu0 0
    %3363 = vmatpush.bf16.msra.mxu0 %v3320
    %3364 = vmatpush.bf16.msra.mxu0 %v3317
    %3365 = vmatpush.bf16.msra.mxu0 %v3314
    %3366 = vmatpush.bf16.msra.mxu0 %v3311
    %3367 = vmatmul.bf16.gmra.mxu0 %v3335
    %v3368 = vpop.f32.mrf.mxu0
    %v3369 = vadd.f32 0.0, %v3368
    %v3370 = vpop.f32.mrf.mxu0
    %v3371 = vadd.f32 0.0, %v3370
    %3372 = vmatmul.bf16.gmra.mxu0 %v3338
    %v3373 = vpop.f32.mrf.mxu0
    %v3374 = vadd.f32 0.0, %v3373
    %v3375 = vpop.f32.mrf.mxu0
    %v3376 = vadd.f32 0.0, %v3375
    %3377 = vdwg.mxu0
    %3378 = vmatpush.bf16.msra.mxu0 0
    %3379 = vmatpush.bf16.msra.mxu0 0
    %3380 = vmatpush.bf16.msra.mxu0 0
    %3381 = vmatpush.bf16.msra.mxu0 0
    %3382 = vmatpush.bf16.msra.mxu0 %v3321
    %3383 = vmatpush.bf16.msra.mxu0 %v3318
    %3384 = vmatpush.bf16.msra.mxu0 %v3315
    %3385 = vmatpush.bf16.msra.mxu0 %v3312
    %3386 = vmatmul.bf16.gmra.mxu0 %v3335
    %v3387 = vpop.f32.mrf.mxu0
    %v3388 = vadd.f32 0.0, %v3387
    %v3389 = vpop.f32.mrf.mxu0
    %v3390 = vadd.f32 0.0, %v3389
    %3391 = vmatmul.bf16.gmra.mxu0 %v3338
    %v3392 = vpop.f32.mrf.mxu0
    %v3393 = vadd.f32 0.0, %v3392
    %v3394 = vpop.f32.mrf.mxu0
    %v3395 = vadd.f32 0.0, %v3394
    %3396 = vdwg.mxu0
    %v3397 = vadd.f32 %v3120, %v3350
    %v3398 = vadd.f32 %v3121, %v3369
    %v3399 = vadd.f32 %v3122, %v3388
    %v3400 = vadd.f32 %v3123, %v3352
    %v3401 = vadd.f32 %v3124, %v3371
    %v3402 = vadd.f32 %v3125, %v3390
    %v3403 = vadd.f32 %v3126, %v3355
    %v3404 = vadd.f32 %v3127, %v3374
    %v3405 = vadd.f32 %v3128, %v3393
    %v3406 = vadd.f32 %v3129, %v3357
    %v3407 = vadd.f32 %v3130, %v3376
    %v3408 = vadd.f32 %v3131, %v3395
    %v3409 = vunpack.c.l.b16 %v2244
    %v3410 = vunpack.c.l.b16 %v2249
    %v3411 = vunpack.c.l.b16 %v2254
    %v3412 = vunpack.c.l.b16 %v2259
    %v3413 = vpack.c.b16 %v3410, %v3409
    %v3414 = vpack.c.b16 %v3412, %v3411
    %v3415 = vunpack.c.h.b16 %v2245
    %v3416 = vunpack.c.h.b16 %v2250
    %v3417 = vunpack.c.h.b16 %v2255
    %v3418 = vunpack.c.h.b16 %v2260
    %v3419 = vpack.c.b16 %v3416, %v3415
    %v3420 = vpack.c.b16 %v3418, %v3417
    %v3422 = vsel %vm2315, %v3413, 0
    %v3425 = vsel %vm2315, %v3414, 0
    %v3428 = vsel %vm2315, %v3419, 0
    %v3431 = vsel %vm2315, %v3420, 0
    %3433 = vmatpush.bf16.xpose.msra.mxu0 0
    %3434 = vmatpush.bf16.xpose.msra.mxu0 0
    %3435 = vmatpush.bf16.xpose.msra.mxu0 0
    %3436 = vmatpush.bf16.xpose.msra.mxu0 0
    %3437 = vmatpush.bf16.xpose.msra.mxu0 0
    %3438 = vmatpush.bf16.xpose.msra.mxu0 0
    %3439 = vmatpush.bf16.xpose.msra.mxu0 %v3431
    %3440 = vmatpush.bf16.xpose.msra.mxu0 %v3428
    %3441 = vmatmul.bf16.gmra.mxu0 %v3422
    %v3442 = vpop.f32.mrf.mxu0
    %v3443 = vadd.f32 0.0, %v3442
    %v3444 = vpop.f32.mrf.mxu0
    %v3445 = vadd.f32 0.0, %v3444
    %3446 = vmatmul.bf16.gmra.mxu0 %v3425
    %v3447 = vpop.f32.mrf.mxu0
    %v3448 = vadd.f32 0.0, %v3447
    %v3449 = vpop.f32.mrf.mxu0
    %v3450 = vadd.f32 0.0, %v3449
    %3451 = vdwg.mxu0
    %v3452 = vsel %vm2290, %v3443, -inf
    %v3453 = vsel %vm2291, %v3445, -inf
    %v3454 = vsel %vm2292, %v3448, -inf
    %v3455 = vsel %vm2293, %v3450, -inf
    %v3456 = vsel %vm2351, %v3452, -inf
    %3457 = vmax.xlane.f32.xlu0 %v3456
    %v3458 = vpop.xlane.xlu0 %3457
    %v3459 = vsel %vm2351, %v3453, -inf
    %3460 = vmax.xlane.f32.xlu0 %v3459
    %v3461 = vpop.xlane.xlu0 %3460
    %v3462 = vsel %vm2351, %v3454, -inf
    %3463 = vmax.xlane.f32.xlu0 %v3462
    %v3464 = vpop.xlane.xlu0 %3463
    %v3465 = vsel %vm2351, %v3455, -inf
    %3466 = vmax.xlane.f32.xlu0 %v3465
    %v3467 = vpop.xlane.xlu0 %3466
    %v3468 = vsub.f32 %v3452, %v3458
    %v3469 = vsub.f32 %v3453, %v3461
    %v3470 = vsub.f32 %v3454, %v3464
    %v3471 = vsub.f32 %v3455, %v3467
    %v3472 = vmul.f32 %v3468, 1.442695
    %v3473 = vpow.pop %v3472
    %v3474 = vmul.f32 %v3469, 1.442695
    %v3475 = vpow.pop %v3474
    %v3476 = vmul.f32 %v3470, 1.442695
    %v3477 = vpow.pop %v3476
    %v3478 = vmul.f32 %v3471, 1.442695
    %v3479 = vpow.pop %v3478
    %v3480 = vsel %vm2351, %v3473, 0.0
    %3481 = vadd.xlane.f32.xlu0 %v3480
    %v3482 = vpop.xlane.xlu0 %3481
    %v3483 = vsel %vm2351, %v3475, 0.0
    %3484 = vadd.xlane.f32.xlu0 %v3483
    %v3485 = vpop.xlane.xlu0 %3484
    %v3486 = vsel %vm2351, %v3477, 0.0
    %3487 = vadd.xlane.f32.xlu0 %v3486
    %v3488 = vpop.xlane.xlu0 %3487
    %v3489 = vsel %vm2351, %v3479, 0.0
    %3490 = vadd.xlane.f32.xlu0 %v3489
    %v3491 = vpop.xlane.xlu0 %3490
    %v3492 = vrcp.pop %v3482
    %v3493 = vrcp.pop %v3485
    %v3494 = vrcp.pop %v3488
    %v3495 = vrcp.pop %v3491
    %v3496 = vmul.f32 %v3473, %v3492
    %v3497 = vmul.f32 %v3475, %v3493
    %v3498 = vmul.f32 %v3477, %v3494
    %v3499 = vmul.f32 %v3479, %v3495
    %v3500 = vpack.c.bf16 %v3497, %v3496
    %v3501 = vpack.c.bf16 %v3499, %v3498
    %v3506 = vunpack.c.l.b16 %v2247
    %v3507 = vunpack.c.l.b16 %v2252
    %v3508 = vunpack.c.l.b16 %v2257
    %v3509 = vunpack.c.l.b16 %v2262
    %v3510 = vpack.c.b16 %v3507, %v3506
    %v3511 = vpack.c.b16 %v3509, %v3508
    %v3515 = vsel %vm2351, %v3500, 0
    %v3518 = vsel %vm2351, %v3501, 0
    %3520 = vmatpush.bf16.msra.mxu0 0
    %3521 = vmatpush.bf16.msra.mxu0 0
    %3522 = vmatpush.bf16.msra.mxu0 0
    %3523 = vmatpush.bf16.msra.mxu0 0
    %3524 = vmatpush.bf16.msra.mxu0 0
    %3525 = vmatpush.bf16.msra.mxu0 0
    %3526 = vmatpush.bf16.msra.mxu0 %v3511
    %3527 = vmatpush.bf16.msra.mxu0 %v3510
    %3528 = vmatmul.bf16.gmra.mxu0 %v3515
    %v3529 = vpop.f32.mrf.mxu0
    %v3530 = vadd.f32 0.0, %v3529
    %v3531 = vpop.f32.mrf.mxu0
    %v3532 = vadd.f32 0.0, %v3531
    %3533 = vmatmul.bf16.gmra.mxu0 %v3518
    %v3534 = vpop.f32.mrf.mxu0
    %v3535 = vadd.f32 0.0, %v3534
    %v3536 = vpop.f32.mrf.mxu0
    %v3537 = vadd.f32 0.0, %v3536
    %3538 = vdwg.mxu0
    %v3539 = vpack.c.bf16 %v3532, %v3530
    %v3540 = vpack.c.bf16 %v3537, %v3535
    %v3541 = vld [vmem:[#allocation7 + $0x180] sm:$0xff]
    %v3542 = vld [vmem:[#allocation7 + $0x188] sm:$0xf]
    %v3543 = vld [vmem:[#allocation7 + $0x18c] sm:$0xff]
    %v3544 = vld [vmem:[#allocation7 + $0x194] sm:$0xf]
    %v3545 = vld [vmem:[#allocation7 + $0x198] sm:$0xff]
    %v3546 = vld [vmem:[#allocation7 + $0x1a0] sm:$0xf]
    %v3547 = vld [vmem:[#allocation7 + $0x1a4] sm:$0xff]
    %v3548 = vld [vmem:[#allocation7 + $0x1ac] sm:$0xf]
    %v3549 = vld [vmem:[#allocation7 + $0x1b0] sm:$0xff]
    %v3550 = vld [vmem:[#allocation7 + $0x1b8] sm:$0xf]
    %v3551 = vld [vmem:[#allocation7 + $0x1bc] sm:$0xff]
    %v3552 = vld [vmem:[#allocation7 + $0x1c4] sm:$0xf]
    %v3553 = vld [vmem:[#allocation7 + $0x1c8] sm:$0xff]
    %v3554 = vld [vmem:[#allocation7 + $0x1d0] sm:$0xf]
    %v3555 = vld [vmem:[#allocation7 + $0x1d4] sm:$0xff]
    %v3556 = vld [vmem:[#allocation7 + $0x1dc] sm:$0xf]
    %v3573 = vunpack.c.l.b16 %v3541
    %v3574 = vunpack.c.h.b16 %v3541
    %v3575 = vunpack.c.l.b16 %v3542
    %v3576 = vunpack.c.l.b16 %v3543
    %v3577 = vunpack.c.h.b16 %v3543
    %v3578 = vunpack.c.l.b16 %v3544
    %v3579 = vunpack.c.l.b16 %v3545
    %v3580 = vunpack.c.h.b16 %v3545
    %v3581 = vunpack.c.l.b16 %v3546
    %v3582 = vunpack.c.l.b16 %v3547
    %v3583 = vunpack.c.h.b16 %v3547
    %v3584 = vunpack.c.l.b16 %v3548
    %v3585 = vunpack.c.l.b16 %v3549
    %v3586 = vunpack.c.h.b16 %v3549
    %v3587 = vunpack.c.l.b16 %v3550
    %v3588 = vunpack.c.l.b16 %v3551
    %v3589 = vunpack.c.h.b16 %v3551
    %v3590 = vunpack.c.l.b16 %v3552
    %v3591 = vunpack.c.l.b16 %v3553
    %v3592 = vunpack.c.h.b16 %v3553
    %v3593 = vunpack.c.l.b16 %v3554
    %v3594 = vunpack.c.l.b16 %v3555
    %v3595 = vunpack.c.h.b16 %v3555
    %v3596 = vunpack.c.l.b16 %v3556
    %v3597 = vpack.c.b16 %v3576, %v3573
    %v3598 = vpack.c.b16 %v3577, %v3574
    %v3599 = vpack.c.b16 %v3578, %v3575
    %v3600 = vpack.c.b16 %v3582, %v3579
    %v3601 = vpack.c.b16 %v3583, %v3580
    %v3602 = vpack.c.b16 %v3584, %v3581
    %v3603 = vpack.c.b16 %v3588, %v3585
    %v3604 = vpack.c.b16 %v3589, %v3586
    %v3605 = vpack.c.b16 %v3590, %v3587
    %v3606 = vpack.c.b16 %v3594, %v3591
    %v3607 = vpack.c.b16 %v3595, %v3592
    %v3608 = vpack.c.b16 %v3596, %v3593
    %v3622 = vsel %vm2315, %v3539, 0
    %v3625 = vsel %vm2315, %v3540, 0
    %3627 = vmatpush.bf16.msra.mxu0 0
    %3628 = vmatpush.bf16.msra.mxu0 0
    %3629 = vmatpush.bf16.msra.mxu0 0
    %3630 = vmatpush.bf16.msra.mxu0 0
    %3631 = vmatpush.bf16.msra.mxu0 %v3606
    %3632 = vmatpush.bf16.msra.mxu0 %v3603
    %3633 = vmatpush.bf16.msra.mxu0 %v3600
    %3634 = vmatpush.bf16.msra.mxu0 %v3597
    %3635 = vmatmul.bf16.gmra.mxu0 %v3622
    %v3636 = vpop.f32.mrf.mxu0
    %v3637 = vadd.f32 0.0, %v3636
    %v3638 = vpop.f32.mrf.mxu0
    %v3639 = vadd.f32 0.0, %v3638
    %3640 = vmatmul.bf16.gmra.mxu0 %v3625
    %v3641 = vpop.f32.mrf.mxu0
    %v3642 = vadd.f32 0.0, %v3641
    %v3643 = vpop.f32.mrf.mxu0
    %v3644 = vadd.f32 0.0, %v3643
    %3645 = vdwg.mxu0
    %3646 = vmatpush.bf16.msra.mxu0 0
    %3647 = vmatpush.bf16.msra.mxu0 0
    %3648 = vmatpush.bf16.msra.mxu0 0
    %3649 = vmatpush.bf16.msra.mxu0 0
    %3650 = vmatpush.bf16.msra.mxu0 %v3607
    %3651 = vmatpush.bf16.msra.mxu0 %v3604
    %3652 = vmatpush.bf16.msra.mxu0 %v3601
    %3653 = vmatpush.bf16.msra.mxu0 %v3598
    %3654 = vmatmul.bf16.gmra.mxu0 %v3622
    %v3655 = vpop.f32.mrf.mxu0
    %v3656 = vadd.f32 0.0, %v3655
    %v3657 = vpop.f32.mrf.mxu0
    %v3658 = vadd.f32 0.0, %v3657
    %3659 = vmatmul.bf16.gmra.mxu0 %v3625
    %v3660 = vpop.f32.mrf.mxu0
    %v3661 = vadd.f32 0.0, %v3660
    %v3662 = vpop.f32.mrf.mxu0
    %v3663 = vadd.f32 0.0, %v3662
    %3664 = vdwg.mxu0
    %3665 = vmatpush.bf16.msra.mxu0 0
    %3666 = vmatpush.bf16.msra.mxu0 0
    %3667 = vmatpush.bf16.msra.mxu0 0
    %3668 = vmatpush.bf16.msra.mxu0 0
    %3669 = vmatpush.bf16.msra.mxu0 %v3608
    %3670 = vmatpush.bf16.msra.mxu0 %v3605
    %3671 = vmatpush.bf16.msra.mxu0 %v3602
    %3672 = vmatpush.bf16.msra.mxu0 %v3599
    %3673 = vmatmul.bf16.gmra.mxu0 %v3622
    %v3674 = vpop.f32.mrf.mxu0
    %v3675 = vadd.f32 0.0, %v3674
    %v3676 = vpop.f32.mrf.mxu0
    %v3677 = vadd.f32 0.0, %v3676
    %3678 = vmatmul.bf16.gmra.mxu0 %v3625
    %v3679 = vpop.f32.mrf.mxu0
    %v3680 = vadd.f32 0.0, %v3679
    %v3681 = vpop.f32.mrf.mxu0
    %v3682 = vadd.f32 0.0, %v3681
    %3683 = vdwg.mxu0
    %v3684 = vadd.f32 %v3397, %v3637
    %v3685 = vadd.f32 %v3398, %v3656
    %v3686 = vadd.f32 %v3399, %v3675
    %v3687 = vadd.f32 %v3400, %v3639
    %v3688 = vadd.f32 %v3401, %v3658
    %v3689 = vadd.f32 %v3402, %v3677
    %v3690 = vadd.f32 %v3403, %v3642
    %v3691 = vadd.f32 %v3404, %v3661
    %v3692 = vadd.f32 %v3405, %v3680
    %v3693 = vadd.f32 %v3406, %v3644
    %v3694 = vadd.f32 %v3407, %v3663
    %v3695 = vadd.f32 %v3408, %v3682
    %3696 = vrot.lane.b32.xlu0 %v3413, 64
    %v3697 = vpop.permute.xlu0 %3696
    %3698 = vrot.lane.b32.xlu0 %v3414, 64
    %v3699 = vpop.permute.xlu0 %3698
    %3700 = vrot.lane.b32.xlu0 %v3419, 64
    %v3701 = vpop.permute.xlu0 %3700
    %3702 = vrot.lane.b32.xlu0 %v3420, 64
    %v3703 = vpop.permute.xlu0 %3702
    %v3705 = vsel %vm2315, %v3697, 0
    %v3708 = vsel %vm2315, %v3699, 0
    %v3711 = vsel %vm2315, %v3701, 0
    %v3714 = vsel %vm2315, %v3703, 0
    %3716 = vmatpush.bf16.xpose.msra.mxu0 0
    %3717 = vmatpush.bf16.xpose.msra.mxu0 0
    %3718 = vmatpush.bf16.xpose.msra.mxu0 0
    %3719 = vmatpush.bf16.xpose.msra.mxu0 0
    %3720 = vmatpush.bf16.xpose.msra.mxu0 0
    %3721 = vmatpush.bf16.xpose.msra.mxu0 0
    %3722 = vmatpush.bf16.xpose.msra.mxu0 %v3714
    %3723 = vmatpush.bf16.xpose.msra.mxu0 %v3711
    %3724 = vmatmul.bf16.gmra.mxu0 %v3705
    %v3725 = vpop.f32.mrf.mxu0
    %v3726 = vadd.f32 0.0, %v3725
    %v3727 = vpop.f32.mrf.mxu0
    %v3728 = vadd.f32 0.0, %v3727
    %3729 = vmatmul.bf16.gmra.mxu0 %v3708
    %v3730 = vpop.f32.mrf.mxu0
    %v3731 = vadd.f32 0.0, %v3730
    %v3732 = vpop.f32.mrf.mxu0
    %v3733 = vadd.f32 0.0, %v3732
    %3734 = vdwg.mxu0
    %v3735 = vsel %vm2290, %v3726, -inf
    %v3736 = vsel %vm2291, %v3728, -inf
    %v3737 = vsel %vm2292, %v3731, -inf
    %v3738 = vsel %vm2293, %v3733, -inf
    %v3739 = vsel %vm2351, %v3735, -inf
    %3740 = vmax.xlane.f32.xlu0 %v3739
    %v3741 = vpop.xlane.xlu0 %3740
    %v3742 = vsel %vm2351, %v3736, -inf
    %3743 = vmax.xlane.f32.xlu0 %v3742
    %v3744 = vpop.xlane.xlu0 %3743
    %v3745 = vsel %vm2351, %v3737, -inf
    %3746 = vmax.xlane.f32.xlu0 %v3745
    %v3747 = vpop.xlane.xlu0 %3746
    %v3748 = vsel %vm2351, %v3738, -inf
    %3749 = vmax.xlane.f32.xlu0 %v3748
    %v3750 = vpop.xlane.xlu0 %3749
    %v3751 = vsub.f32 %v3735, %v3741
    %v3752 = vsub.f32 %v3736, %v3744
    %v3753 = vsub.f32 %v3737, %v3747
    %v3754 = vsub.f32 %v3738, %v3750
    %v3755 = vmul.f32 %v3751, 1.442695
    %v3756 = vpow.pop %v3755
    %v3757 = vmul.f32 %v3752, 1.442695
    %v3758 = vpow.pop %v3757
    %v3759 = vmul.f32 %v3753, 1.442695
    %v3760 = vpow.pop %v3759
    %v3761 = vmul.f32 %v3754, 1.442695
    %v3762 = vpow.pop %v3761
    %v3763 = vsel %vm2351, %v3756, 0.0
    %3764 = vadd.xlane.f32.xlu0 %v3763
    %v3765 = vpop.xlane.xlu0 %3764
    %v3766 = vsel %vm2351, %v3758, 0.0
    %3767 = vadd.xlane.f32.xlu0 %v3766
    %v3768 = vpop.xlane.xlu0 %3767
    %v3769 = vsel %vm2351, %v3760, 0.0
    %3770 = vadd.xlane.f32.xlu0 %v3769
    %v3771 = vpop.xlane.xlu0 %3770
    %v3772 = vsel %vm2351, %v3762, 0.0
    %3773 = vadd.xlane.f32.xlu0 %v3772
    %v3774 = vpop.xlane.xlu0 %3773
    %v3775 = vrcp.pop %v3765
    %v3776 = vrcp.pop %v3768
    %v3777 = vrcp.pop %v3771
    %v3778 = vrcp.pop %v3774
    %v3779 = vmul.f32 %v3756, %v3775
    %v3780 = vmul.f32 %v3758, %v3776
    %v3781 = vmul.f32 %v3760, %v3777
    %v3782 = vmul.f32 %v3762, %v3778
    %v3783 = vpack.c.bf16 %v3780, %v3779
    %v3784 = vpack.c.bf16 %v3782, %v3781
    %3785 = vrot.lane.b32.xlu0 %v3510, 64
    %v3786 = vpop.permute.xlu0 %3785
    %3787 = vrot.lane.b32.xlu0 %v3511, 64
    %v3788 = vpop.permute.xlu0 %3787
    %v3792 = vsel %vm2351, %v3783, 0
    %v3795 = vsel %vm2351, %v3784, 0
    %3797 = vmatpush.bf16.msra.mxu0 0
    %3798 = vmatpush.bf16.msra.mxu0 0
    %3799 = vmatpush.bf16.msra.mxu0 0
    %3800 = vmatpush.bf16.msra.mxu0 0
    %3801 = vmatpush.bf16.msra.mxu0 0
    %3802 = vmatpush.bf16.msra.mxu0 0
    %3803 = vmatpush.bf16.msra.mxu0 %v3788
    %3804 = vmatpush.bf16.msra.mxu0 %v3786
    %3805 = vmatmul.bf16.gmra.mxu0 %v3792
    %v3806 = vpop.f32.mrf.mxu0
    %v3807 = vadd.f32 0.0, %v3806
    %v3808 = vpop.f32.mrf.mxu0
    %v3809 = vadd.f32 0.0, %v3808
    %3810 = vmatmul.bf16.gmra.mxu0 %v3795
    %v3811 = vpop.f32.mrf.mxu0
    %v3812 = vadd.f32 0.0, %v3811
    %v3813 = vpop.f32.mrf.mxu0
    %v3814 = vadd.f32 0.0, %v3813
    %3815 = vdwg.mxu0
    %v3816 = vpack.c.bf16 %v3809, %v3807
    %v3817 = vpack.c.bf16 %v3814, %v3812
    %v3818 = vld [vmem:[#allocation7 + $0x1e0] sm:$0xff]
    %v3819 = vld [vmem:[#allocation7 + $0x1e8] sm:$0xf]
    %v3820 = vld [vmem:[#allocation7 + $0x1ec] sm:$0xff]
    %v3821 = vld [vmem:[#allocation7 + $0x1f4] sm:$0xf]
    %v3822 = vld [vmem:[#allocation7 + $0x1f8] sm:$0xff]
    %v3823 = vld [vmem:[#allocation7 + $0x200] sm:$0xf]
    %v3824 = vld [vmem:[#allocation7 + $0x204] sm:$0xff]
    %v3825 = vld [vmem:[#allocation7 + $0x20c] sm:$0xf]
    %v3826 = vld [vmem:[#allocation7 + $0x210] sm:$0xff]
    %v3827 = vld [vmem:[#allocation7 + $0x218] sm:$0xf]
    %v3828 = vld [vmem:[#allocation7 + $0x21c] sm:$0xff]
    %v3829 = vld [vmem:[#allocation7 + $0x224] sm:$0xf]
    %v3830 = vld [vmem:[#allocation7 + $0x228] sm:$0xff]
    %v3831 = vld [vmem:[#allocation7 + $0x230] sm:$0xf]
    %v3832 = vld [vmem:[#allocation7 + $0x234] sm:$0xff]
    %v3833 = vld [vmem:[#allocation7 + $0x23c] sm:$0xf]
    %v3850 = vunpack.c.l.b16 %v3818
    %v3851 = vunpack.c.h.b16 %v3818
    %v3852 = vunpack.c.l.b16 %v3819
    %v3853 = vunpack.c.l.b16 %v3820
    %v3854 = vunpack.c.h.b16 %v3820
    %v3855 = vunpack.c.l.b16 %v3821
    %v3856 = vunpack.c.l.b16 %v3822
    %v3857 = vunpack.c.h.b16 %v3822
    %v3858 = vunpack.c.l.b16 %v3823
    %v3859 = vunpack.c.l.b16 %v3824
    %v3860 = vunpack.c.h.b16 %v3824
    %v3861 = vunpack.c.l.b16 %v3825
    %v3862 = vunpack.c.l.b16 %v3826
    %v3863 = vunpack.c.h.b16 %v3826
    %v3864 = vunpack.c.l.b16 %v3827
    %v3865 = vunpack.c.l.b16 %v3828
    %v3866 = vunpack.c.h.b16 %v3828
    %v3867 = vunpack.c.l.b16 %v3829
    %v3868 = vunpack.c.l.b16 %v3830
    %v3869 = vunpack.c.h.b16 %v3830
    %v3870 = vunpack.c.l.b16 %v3831
    %v3871 = vunpack.c.l.b16 %v3832
    %v3872 = vunpack.c.h.b16 %v3832
    %v3873 = vunpack.c.l.b16 %v3833
    %v3874 = vpack.c.b16 %v3853, %v3850
    %v3875 = vpack.c.b16 %v3854, %v3851
    %v3876 = vpack.c.b16 %v3855, %v3852
    %v3877 = vpack.c.b16 %v3859, %v3856
    %v3878 = vpack.c.b16 %v3860, %v3857
    %v3879 = vpack.c.b16 %v3861, %v3858
    %v3880 = vpack.c.b16 %v3865, %v3862
    %v3881 = vpack.c.b16 %v3866, %v3863
    %v3882 = vpack.c.b16 %v3867, %v3864
    %v3883 = vpack.c.b16 %v3871, %v3868
    %v3884 = vpack.c.b16 %v3872, %v3869
    %v3885 = vpack.c.b16 %v3873, %v3870
    %v3899 = vsel %vm2315, %v3816, 0
    %v3902 = vsel %vm2315, %v3817, 0
    %3904 = vmatpush.bf16.msra.mxu0 0
    %3905 = vmatpush.bf16.msra.mxu0 0
    %3906 = vmatpush.bf16.msra.mxu0 0
    %3907 = vmatpush.bf16.msra.mxu0 0
    %3908 = vmatpush.bf16.msra.mxu0 %v3883
    %3909 = vmatpush.bf16.msra.mxu0 %v3880
    %3910 = vmatpush.bf16.msra.mxu0 %v3877
    %3911 = vmatpush.bf16.msra.mxu0 %v3874
    %3912 = vmatmul.bf16.gmra.mxu0 %v3899
    %v3913 = vpop.f32.mrf.mxu0
    %v3914 = vadd.f32 0.0, %v3913
    %v3915 = vpop.f32.mrf.mxu0
    %v3916 = vadd.f32 0.0, %v3915
    %3917 = vmatmul.bf16.gmra.mxu0 %v3902
    %v3918 = vpop.f32.mrf.mxu0
    %v3919 = vadd.f32 0.0, %v3918
    %v3920 = vpop.f32.mrf.mxu0
    %v3921 = vadd.f32 0.0, %v3920
    %3922 = vdwg.mxu0
    %3923 = vmatpush.bf16.msra.mxu0 0
    %3924 = vmatpush.bf16.msra.mxu0 0
    %3925 = vmatpush.bf16.msra.mxu0 0
    %3926 = vmatpush.bf16.msra.mxu0 0
    %3927 = vmatpush.bf16.msra.mxu0 %v3884
    %3928 = vmatpush.bf16.msra.mxu0 %v3881
    %3929 = vmatpush.bf16.msra.mxu0 %v3878
    %3930 = vmatpush.bf16.msra.mxu0 %v3875
    %3931 = vmatmul.bf16.gmra.mxu0 %v3899
    %v3932 = vpop.f32.mrf.mxu0
    %v3933 = vadd.f32 0.0, %v3932
    %v3934 = vpop.f32.mrf.mxu0
    %v3935 = vadd.f32 0.0, %v3934
    %3936 = vmatmul.bf16.gmra.mxu0 %v3902
    %v3937 = vpop.f32.mrf.mxu0
    %v3938 = vadd.f32 0.0, %v3937
    %v3939 = vpop.f32.mrf.mxu0
    %v3940 = vadd.f32 0.0, %v3939
    %3941 = vdwg.mxu0
    %3942 = vmatpush.bf16.msra.mxu0 0
    %3943 = vmatpush.bf16.msra.mxu0 0
    %3944 = vmatpush.bf16.msra.mxu0 0
    %3945 = vmatpush.bf16.msra.mxu0 0
    %3946 = vmatpush.bf16.msra.mxu0 %v3885
    %3947 = vmatpush.bf16.msra.mxu0 %v3882
    %3948 = vmatpush.bf16.msra.mxu0 %v3879
    %3949 = vmatpush.bf16.msra.mxu0 %v3876
    %3950 = vmatmul.bf16.gmra.mxu0 %v3899
    %v3951 = vpop.f32.mrf.mxu0
    %v3952 = vadd.f32 0.0, %v3951
    %v3953 = vpop.f32.mrf.mxu0
    %v3954 = vadd.f32 0.0, %v3953
    %3955 = vmatmul.bf16.gmra.mxu0 %v3902
    %v3956 = vpop.f32.mrf.mxu0
    %v3957 = vadd.f32 0.0, %v3956
    %v3958 = vpop.f32.mrf.mxu0
    %v3959 = vadd.f32 0.0, %v3958
    %3960 = vdwg.mxu0
    %v3961 = vadd.f32 %v3684, %v3914
    %v3962 = vadd.f32 %v3685, %v3933
    %v3963 = vadd.f32 %v3686, %v3952
    %v3964 = vadd.f32 %v3687, %v3916
    %v3965 = vadd.f32 %v3688, %v3935
    %v3966 = vadd.f32 %v3689, %v3954
    %v3967 = vadd.f32 %v3690, %v3919
    %v3968 = vadd.f32 %v3691, %v3938
    %v3969 = vadd.f32 %v3692, %v3957
    %v3970 = vadd.f32 %v3693, %v3921
    %v3971 = vadd.f32 %v3694, %v3940
    %v3972 = vadd.f32 %v3695, %v3959
    %v3974 = vperm.slane %v2294, 0
    %v3975 = vperm.slane %v2294, 1
    %v3976 = vperm.slane %v2294, 2
    %v3980 = vadd.f32 %v3961, %v3974
    %v3981 = vadd.f32 %v3962, %v3975
    %v3982 = vadd.f32 %v3963, %v3976
    %v3983 = vadd.f32 %v3964, %v3974
    %v3984 = vadd.f32 %v3965, %v3975
    %v3985 = vadd.f32 %v3966, %v3976
    %v3986 = vadd.f32 %v3967, %v3974
    %v3987 = vadd.f32 %v3968, %v3975
    %v3988 = vadd.f32 %v3969, %v3976
    %v3989 = vadd.f32 %v3970, %v3974
    %v3990 = vadd.f32 %v3971, %v3975
    %v3991 = vadd.f32 %v3972, %v3976
    %3992 = vst [vmem:[#allocation10] sm:$0xff] %v3980
    %3993 = vst [vmem:[#allocation10 + $0x8] sm:$0xff] %v3981
    %3994 = vst [vmem:[#allocation10 + $0x10] sm:$0xff] %v3982
    %3995 = vst [vmem:[#allocation10 + $0x18] sm:$0xff] %v3983
    %3996 = vst [vmem:[#allocation10 + $0x20] sm:$0xff] %v3984
    %3997 = vst [vmem:[#allocation10 + $0x28] sm:$0xff] %v3985
    %3998 = vst [vmem:[#allocation10 + $0x30] sm:$0xff] %v3986
    %3999 = vst [vmem:[#allocation10 + $0x38] sm:$0xff] %v3987
    %4000 = vst [vmem:[#allocation10 + $0x40] sm:$0xff] %v3988
    %4001 = vst [vmem:[#allocation10 + $0x48] sm:$0xff] %v3989
    %4002 = vst [vmem:[#allocation10 + $0x50] sm:$0xff] %v3990
    %4003 = vst [vmem:[#allocation10 + $0x58] sm:$0xff] %v3991
    %v4008 = vunpack.c.l.b16 %v2263
    %v4009 = vunpack.c.l.b16 %v2268
    %v4010 = vunpack.c.l.b16 %v2273
    %v4011 = vunpack.c.l.b16 %v2278
    %v4012 = vpack.c.b16 %v4009, %v4008
    %v4013 = vpack.c.b16 %v4011, %v4010
    %v4018 = vunpack.c.h.b16 %v2264
    %v4019 = vunpack.c.h.b16 %v2269
    %v4020 = vunpack.c.h.b16 %v2274
    %v4021 = vunpack.c.h.b16 %v2279
    %v4022 = vpack.c.b16 %v4019, %v4018
    %v4023 = vpack.c.b16 %v4021, %v4020
    %v4025 = vsel %vm2315, %v4012, 0
    %v4028 = vsel %vm2315, %v4013, 0
    %v4031 = vsel %vm2315, %v4022, 0
    %v4034 = vsel %vm2315, %v4023, 0
    %4036 = vmatpush.bf16.xpose.msra.mxu0 0
    %4037 = vmatpush.bf16.xpose.msra.mxu0 0
    %4038 = vmatpush.bf16.xpose.msra.mxu0 0
    %4039 = vmatpush.bf16.xpose.msra.mxu0 0
    %4040 = vmatpush.bf16.xpose.msra.mxu0 0
    %4041 = vmatpush.bf16.xpose.msra.mxu0 0
    %4042 = vmatpush.bf16.xpose.msra.mxu0 %v4034
    %4043 = vmatpush.bf16.xpose.msra.mxu0 %v4031
    %4044 = vmatmul.bf16.gmra.mxu0 %v4025
    %v4045 = vpop.f32.mrf.mxu0
    %v4046 = vadd.f32 0.0, %v4045
    %v4047 = vpop.f32.mrf.mxu0
    %v4048 = vadd.f32 0.0, %v4047
    %4049 = vmatmul.bf16.gmra.mxu0 %v4028
    %v4050 = vpop.f32.mrf.mxu0
    %v4051 = vadd.f32 0.0, %v4050
    %v4052 = vpop.f32.mrf.mxu0
    %v4053 = vadd.f32 0.0, %v4052
    %4054 = vdwg.mxu0
    %v4055 = vsel %vm2290, %v4046, -inf
    %v4056 = vsel %vm2291, %v4048, -inf
    %v4057 = vsel %vm2292, %v4051, -inf
    %v4058 = vsel %vm2293, %v4053, -inf
    %v4059 = vsel %vm2351, %v4055, -inf
    %4060 = vmax.xlane.f32.xlu0 %v4059
    %v4061 = vpop.xlane.xlu0 %4060
    %v4062 = vsel %vm2351, %v4056, -inf
    %4063 = vmax.xlane.f32.xlu0 %v4062
    %v4064 = vpop.xlane.xlu0 %4063
    %v4065 = vsel %vm2351, %v4057, -inf
    %4066 = vmax.xlane.f32.xlu0 %v4065
    %v4067 = vpop.xlane.xlu0 %4066
    %v4068 = vsel %vm2351, %v4058, -inf
    %4069 = vmax.xlane.f32.xlu0 %v4068
    %v4070 = vpop.xlane.xlu0 %4069
    %v4071 = vsub.f32 %v4055, %v4061
    %v4072 = vsub.f32 %v4056, %v4064
    %v4073 = vsub.f32 %v4057, %v4067
    %v4074 = vsub.f32 %v4058, %v4070
    %v4075 = vmul.f32 %v4071, 1.442695
    %v4076 = vpow.pop %v4075
    %v4077 = vmul.f32 %v4072, 1.442695
    %v4078 = vpow.pop %v4077
    %v4079 = vmul.f32 %v4073, 1.442695
    %v4080 = vpow.pop %v4079
    %v4081 = vmul.f32 %v4074, 1.442695
    %v4082 = vpow.pop %v4081
    %v4083 = vsel %vm2351, %v4076, 0.0
    %4084 = vadd.xlane.f32.xlu0 %v4083
    %v4085 = vpop.xlane.xlu0 %4084
    %v4086 = vsel %vm2351, %v4078, 0.0
    %4087 = vadd.xlane.f32.xlu0 %v4086
    %v4088 = vpop.xlane.xlu0 %4087
    %v4089 = vsel %vm2351, %v4080, 0.0
    %4090 = vadd.xlane.f32.xlu0 %v4089
    %v4091 = vpop.xlane.xlu0 %4090
    %v4092 = vsel %vm2351, %v4082, 0.0
    %4093 = vadd.xlane.f32.xlu0 %v4092
    %v4094 = vpop.xlane.xlu0 %4093
    %v4095 = vrcp.pop %v4085
    %v4096 = vrcp.pop %v4088
    %v4097 = vrcp.pop %v4091
    %v4098 = vrcp.pop %v4094
    %v4099 = vmul.f32 %v4076, %v4095
    %v4100 = vmul.f32 %v4078, %v4096
    %v4101 = vmul.f32 %v4080, %v4097
    %v4102 = vmul.f32 %v4082, %v4098
    %v4103 = vpack.c.bf16 %v4100, %v4099
    %v4104 = vpack.c.bf16 %v4102, %v4101
    %v4109 = vunpack.c.l.b16 %v2266
    %v4110 = vunpack.c.l.b16 %v2271
    %v4111 = vunpack.c.l.b16 %v2276
    %v4112 = vunpack.c.l.b16 %v2281
    %v4113 = vpack.c.b16 %v4110, %v4109
    %v4114 = vpack.c.b16 %v4112, %v4111
    %v4118 = vsel %vm2351, %v4103, 0
    %v4121 = vsel %vm2351, %v4104, 0
    %4123 = vmatpush.bf16.msra.mxu0 0
    %4124 = vmatpush.bf16.msra.mxu0 0
    %4125 = vmatpush.bf16.msra.mxu0 0
    %4126 = vmatpush.bf16.msra.mxu0 0
    %4127 = vmatpush.bf16.msra.mxu0 0
    %4128 = vmatpush.bf16.msra.mxu0 0
    %4129 = vmatpush.bf16.msra.mxu0 %v4114
    %4130 = vmatpush.bf16.msra.mxu0 %v4113
    %4131 = vmatmul.bf16.gmra.mxu0 %v4118
    %v4132 = vpop.f32.mrf.mxu0
    %v4133 = vadd.f32 0.0, %v4132
    %v4134 = vpop.f32.mrf.mxu0
    %v4135 = vadd.f32 0.0, %v4134
    %4136 = vmatmul.bf16.gmra.mxu0 %v4121
    %v4137 = vpop.f32.mrf.mxu0
    %v4138 = vadd.f32 0.0, %v4137
    %v4139 = vpop.f32.mrf.mxu0
    %v4140 = vadd.f32 0.0, %v4139
    %4141 = vdwg.mxu0
    %v4142 = vpack.c.bf16 %v4135, %v4133
    %v4143 = vpack.c.bf16 %v4140, %v4138
    %v4144 = vld [vmem:[#allocation7] sm:$0xff]
    %v4145 = vld [vmem:[#allocation7 + $0x8] sm:$0xf]
    %v4146 = vld [vmem:[#allocation7 + $0xc] sm:$0xff]
    %v4147 = vld [vmem:[#allocation7 + $0x14] sm:$0xf]
    %v4148 = vld [vmem:[#allocation7 + $0x18] sm:$0xff]
    %v4149 = vld [vmem:[#allocation7 + $0x20] sm:$0xf]
    %v4150 = vld [vmem:[#allocation7 + $0x24] sm:$0xff]
    %v4151 = vld [vmem:[#allocation7 + $0x2c] sm:$0xf]
    %v4152 = vld [vmem:[#allocation7 + $0x30] sm:$0xff]
    %v4153 = vld [vmem:[#allocation7 + $0x38] sm:$0xf]
    %v4154 = vld [vmem:[#allocation7 + $0x3c] sm:$0xff]
    %v4155 = vld [vmem:[#allocation7 + $0x44] sm:$0xf]
    %v4156 = vld [vmem:[#allocation7 + $0x48] sm:$0xff]
    %v4157 = vld [vmem:[#allocation7 + $0x50] sm:$0xf]
    %v4158 = vld [vmem:[#allocation7 + $0x54] sm:$0xff]
    %v4159 = vld [vmem:[#allocation7 + $0x5c] sm:$0xf]
    %4160 = vrot.lane.b32.xlu0 %v4012, 64
    %v4161 = vpop.permute.xlu0 %4160
    %4162 = vrot.lane.b32.xlu0 %v4013, 64
    %v4163 = vpop.permute.xlu0 %4162
    %4164 = vrot.lane.b32.xlu0 %v4022, 64
    %v4165 = vpop.permute.xlu0 %4164
    %4166 = vrot.lane.b32.xlu0 %v4023, 64
    %v4167 = vpop.permute.xlu0 %4166
    %v4169 = vsel %vm2315, %v4161, 0
    %v4172 = vsel %vm2315, %v4163, 0
    %v4175 = vsel %vm2315, %v4165, 0
    %v4178 = vsel %vm2315, %v4167, 0
    %4180 = vmatpush.bf16.xpose.msra.mxu0 0
    %4181 = vmatpush.bf16.xpose.msra.mxu0 0
    %4182 = vmatpush.bf16.xpose.msra.mxu0 0
    %4183 = vmatpush.bf16.xpose.msra.mxu0 0
    %4184 = vmatpush.bf16.xpose.msra.mxu0 0
    %4185 = vmatpush.bf16.xpose.msra.mxu0 0
    %4186 = vmatpush.bf16.xpose.msra.mxu0 %v4178
    %4187 = vmatpush.bf16.xpose.msra.mxu0 %v4175
    %4188 = vmatmul.bf16.gmra.mxu0 %v4169
    %v4189 = vpop.f32.mrf.mxu0
    %v4190 = vadd.f32 0.0, %v4189
    %v4191 = vpop.f32.mrf.mxu0
    %v4192 = vadd.f32 0.0, %v4191
    %4193 = vmatmul.bf16.gmra.mxu0 %v4172
    %v4194 = vpop.f32.mrf.mxu0
    %v4195 = vadd.f32 0.0, %v4194
    %v4196 = vpop.f32.mrf.mxu0
    %v4197 = vadd.f32 0.0, %v4196
    %4198 = vdwg.mxu0
    %v4199 = vsel %vm2290, %v4190, -inf
    %v4200 = vsel %vm2291, %v4192, -inf
    %v4201 = vsel %vm2292, %v4195, -inf
    %v4202 = vsel %vm2293, %v4197, -inf
    %v4203 = vsel %vm2351, %v4199, -inf
    %4204 = vmax.xlane.f32.xlu0 %v4203
    %v4205 = vpop.xlane.xlu0 %4204
    %v4206 = vsel %vm2351, %v4200, -inf
    %4207 = vmax.xlane.f32.xlu0 %v4206
    %v4208 = vpop.xlane.xlu0 %4207
    %v4209 = vsel %vm2351, %v4201, -inf
    %4210 = vmax.xlane.f32.xlu0 %v4209
    %v4211 = vpop.xlane.xlu0 %4210
    %v4212 = vsel %vm2351, %v4202, -inf
    %4213 = vmax.xlane.f32.xlu0 %v4212
    %v4214 = vpop.xlane.xlu0 %4213
    %v4215 = vsub.f32 %v4199, %v4205
    %v4216 = vsub.f32 %v4200, %v4208
    %v4217 = vsub.f32 %v4201, %v4211
    %v4218 = vsub.f32 %v4202, %v4214
    %v4219 = vmul.f32 %v4215, 1.442695
    %v4220 = vpow.pop %v4219
    %v4221 = vmul.f32 %v4216, 1.442695
    %v4222 = vpow.pop %v4221
    %v4223 = vmul.f32 %v4217, 1.442695
    %v4224 = vpow.pop %v4223
    %v4225 = vmul.f32 %v4218, 1.442695
    %v4226 = vpow.pop %v4225
    %v4227 = vsel %vm2351, %v4220, 0.0
    %4228 = vadd.xlane.f32.xlu0 %v4227
    %v4229 = vpop.xlane.xlu0 %4228
    %v4230 = vsel %vm2351, %v4222, 0.0
    %4231 = vadd.xlane.f32.xlu0 %v4230
    %v4232 = vpop.xlane.xlu0 %4231
    %v4233 = vsel %vm2351, %v4224, 0.0
    %4234 = vadd.xlane.f32.xlu0 %v4233
    %v4235 = vpop.xlane.xlu0 %4234
    %v4236 = vsel %vm2351, %v4226, 0.0
    %4237 = vadd.xlane.f32.xlu0 %v4236
    %v4238 = vpop.xlane.xlu0 %4237
    %v4239 = vrcp.pop %v4229
    %v4240 = vrcp.pop %v4232
    %v4241 = vrcp.pop %v4235
    %v4242 = vrcp.pop %v4238
    %v4243 = vmul.f32 %v4220, %v4239
    %v4244 = vmul.f32 %v4222, %v4240
    %v4245 = vmul.f32 %v4224, %v4241
    %v4246 = vmul.f32 %v4226, %v4242
    %v4247 = vpack.c.bf16 %v4244, %v4243
    %v4248 = vpack.c.bf16 %v4246, %v4245
    %4249 = vrot.lane.b32.xlu0 %v4113, 64
    %v4250 = vpop.permute.xlu0 %4249
    %4251 = vrot.lane.b32.xlu0 %v4114, 64
    %v4252 = vpop.permute.xlu0 %4251
    %v4256 = vsel %vm2351, %v4247, 0
    %v4259 = vsel %vm2351, %v4248, 0
    %4261 = vmatpush.bf16.msra.mxu0 0
    %4262 = vmatpush.bf16.msra.mxu0 0
    %4263 = vmatpush.bf16.msra.mxu0 0
    %4264 = vmatpush.bf16.msra.mxu0 0
    %4265 = vmatpush.bf16.msra.mxu0 0
    %4266 = vmatpush.bf16.msra.mxu0 0
    %4267 = vmatpush.bf16.msra.mxu0 %v4252
    %4268 = vmatpush.bf16.msra.mxu0 %v4250
    %4269 = vmatmul.bf16.gmra.mxu0 %v4256
    %v4270 = vpop.f32.mrf.mxu0
    %v4271 = vadd.f32 0.0, %v4270
    %v4272 = vpop.f32.mrf.mxu0
    %v4273 = vadd.f32 0.0, %v4272
    %4274 = vmatmul.bf16.gmra.mxu0 %v4259
    %v4275 = vpop.f32.mrf.mxu0
    %v4276 = vadd.f32 0.0, %v4275
    %v4277 = vpop.f32.mrf.mxu0
    %v4278 = vadd.f32 0.0, %v4277
    %4279 = vdwg.mxu0
    %v4280 = vpack.c.bf16 %v4273, %v4271
    %v4281 = vpack.c.bf16 %v4278, %v4276
    %v4282 = vld [vmem:[#allocation7 + $0x60] sm:$0xff]
    %v4283 = vld [vmem:[#allocation7 + $0x68] sm:$0xf]
    %v4284 = vld [vmem:[#allocation7 + $0x6c] sm:$0xff]
    %v4285 = vld [vmem:[#allocation7 + $0x74] sm:$0xf]
    %v4286 = vld [vmem:[#allocation7 + $0x78] sm:$0xff]
    %v4287 = vld [vmem:[#allocation7 + $0x80] sm:$0xf]
    %v4288 = vld [vmem:[#allocation7 + $0x84] sm:$0xff]
    %v4289 = vld [vmem:[#allocation7 + $0x8c] sm:$0xf]
    %v4290 = vld [vmem:[#allocation7 + $0x90] sm:$0xff]
    %v4291 = vld [vmem:[#allocation7 + $0x98] sm:$0xf]
    %v4292 = vld [vmem:[#allocation7 + $0x9c] sm:$0xff]
    %v4293 = vld [vmem:[#allocation7 + $0xa4] sm:$0xf]
    %v4294 = vld [vmem:[#allocation7 + $0xa8] sm:$0xff]
    %v4295 = vld [vmem:[#allocation7 + $0xb0] sm:$0xf]
    %v4296 = vld [vmem:[#allocation7 + $0xb4] sm:$0xff]
    %v4297 = vld [vmem:[#allocation7 + $0xbc] sm:$0xf]
    %v4314 = vunpack.c.l.b16 %v4282
    %v4315 = vunpack.c.h.b16 %v4282
    %v4316 = vunpack.c.l.b16 %v4283
    %v4317 = vunpack.c.l.b16 %v4284
    %v4318 = vunpack.c.h.b16 %v4284
    %v4319 = vunpack.c.l.b16 %v4285
    %v4320 = vunpack.c.l.b16 %v4286
    %v4321 = vunpack.c.h.b16 %v4286
    %v4322 = vunpack.c.l.b16 %v4287
    %v4323 = vunpack.c.l.b16 %v4288
    %v4324 = vunpack.c.h.b16 %v4288
    %v4325 = vunpack.c.l.b16 %v4289
    %v4326 = vunpack.c.l.b16 %v4290
    %v4327 = vunpack.c.h.b16 %v4290
    %v4328 = vunpack.c.l.b16 %v4291
    %v4329 = vunpack.c.l.b16 %v4292
    %v4330 = vunpack.c.h.b16 %v4292
    %v4331 = vunpack.c.l.b16 %v4293
    %v4332 = vunpack.c.l.b16 %v4294
    %v4333 = vunpack.c.h.b16 %v4294
    %v4334 = vunpack.c.l.b16 %v4295
    %v4335 = vunpack.c.l.b16 %v4296
    %v4336 = vunpack.c.h.b16 %v4296
    %v4337 = vunpack.c.l.b16 %v4297
    %v4338 = vpack.c.b16 %v4317, %v4314
    %v4339 = vpack.c.b16 %v4318, %v4315
    %v4340 = vpack.c.b16 %v4319, %v4316
    %v4341 = vpack.c.b16 %v4323, %v4320
    %v4342 = vpack.c.b16 %v4324, %v4321
    %v4343 = vpack.c.b16 %v4325, %v4322
    %v4344 = vpack.c.b16 %v4329, %v4326
    %v4345 = vpack.c.b16 %v4330, %v4327
    %v4346 = vpack.c.b16 %v4331, %v4328
    %v4347 = vpack.c.b16 %v4335, %v4332
    %v4348 = vpack.c.b16 %v4336, %v4333
    %v4349 = vpack.c.b16 %v4337, %v4334
    %v4363 = vsel %vm2315, %v4280, 0
    %v4366 = vsel %vm2315, %v4281, 0
    %4368 = vmatpush.bf16.msra.mxu0 0
    %4369 = vmatpush.bf16.msra.mxu0 0
    %4370 = vmatpush.bf16.msra.mxu0 0
    %4371 = vmatpush.bf16.msra.mxu0 0
    %4372 = vmatpush.bf16.msra.mxu0 %v4347
    %4373 = vmatpush.bf16.msra.mxu0 %v4344
    %4374 = vmatpush.bf16.msra.mxu0 %v4341
    %4375 = vmatpush.bf16.msra.mxu0 %v4338
    %4376 = vmatmul.bf16.gmra.mxu0 %v4363
    %v4377 = vpop.f32.mrf.mxu0
    %v4378 = vadd.f32 0.0, %v4377
    %v4379 = vpop.f32.mrf.mxu0
    %v4380 = vadd.f32 0.0, %v4379
    %4381 = vmatmul.bf16.gmra.mxu0 %v4366
    %v4382 = vpop.f32.mrf.mxu0
    %v4383 = vadd.f32 0.0, %v4382
    %v4384 = vpop.f32.mrf.mxu0
    %v4385 = vadd.f32 0.0, %v4384
    %4386 = vdwg.mxu0
    %4387 = vmatpush.bf16.msra.mxu0 0
    %4388 = vmatpush.bf16.msra.mxu0 0
    %4389 = vmatpush.bf16.msra.mxu0 0
    %4390 = vmatpush.bf16.msra.mxu0 0
    %4391 = vmatpush.bf16.msra.mxu0 %v4348
    %4392 = vmatpush.bf16.msra.mxu0 %v4345
    %4393 = vmatpush.bf16.msra.mxu0 %v4342
    %4394 = vmatpush.bf16.msra.mxu0 %v4339
    %4395 = vmatmul.bf16.gmra.mxu0 %v4363
    %v4396 = vpop.f32.mrf.mxu0
    %v4397 = vadd.f32 0.0, %v4396
    %v4398 = vpop.f32.mrf.mxu0
    %v4399 = vadd.f32 0.0, %v4398
    %4400 = vmatmul.bf16.gmra.mxu0 %v4366
    %v4401 = vpop.f32.mrf.mxu0
    %v4402 = vadd.f32 0.0, %v4401
    %v4403 = vpop.f32.mrf.mxu0
    %v4404 = vadd.f32 0.0, %v4403
    %4405 = vdwg.mxu0
    %4406 = vmatpush.bf16.msra.mxu0 0
    %4407 = vmatpush.bf16.msra.mxu0 0
    %4408 = vmatpush.bf16.msra.mxu0 0
    %4409 = vmatpush.bf16.msra.mxu0 0
    %4410 = vmatpush.bf16.msra.mxu0 %v4349
    %4411 = vmatpush.bf16.msra.mxu0 %v4346
    %4412 = vmatpush.bf16.msra.mxu0 %v4343
    %4413 = vmatpush.bf16.msra.mxu0 %v4340
    %4414 = vmatmul.bf16.gmra.mxu0 %v4363
    %v4415 = vpop.f32.mrf.mxu0
    %v4416 = vadd.f32 0.0, %v4415
    %v4417 = vpop.f32.mrf.mxu0
    %v4418 = vadd.f32 0.0, %v4417
    %4419 = vmatmul.bf16.gmra.mxu0 %v4366
    %v4420 = vpop.f32.mrf.mxu0
    %v4421 = vadd.f32 0.0, %v4420
    %v4422 = vpop.f32.mrf.mxu0
    %v4423 = vadd.f32 0.0, %v4422
    %4424 = vdwg.mxu0
    %v4441 = vunpack.c.l.b16 %v4144
    %v4442 = vunpack.c.h.b16 %v4144
    %v4443 = vunpack.c.l.b16 %v4145
    %v4444 = vunpack.c.l.b16 %v4146
    %v4445 = vunpack.c.h.b16 %v4146
    %v4446 = vunpack.c.l.b16 %v4147
    %v4447 = vunpack.c.l.b16 %v4148
    %v4448 = vunpack.c.h.b16 %v4148
    %v4449 = vunpack.c.l.b16 %v4149
    %v4450 = vunpack.c.l.b16 %v4150
    %v4451 = vunpack.c.h.b16 %v4150
    %v4452 = vunpack.c.l.b16 %v4151
    %v4453 = vunpack.c.l.b16 %v4152
    %v4454 = vunpack.c.h.b16 %v4152
    %v4455 = vunpack.c.l.b16 %v4153
    %v4456 = vunpack.c.l.b16 %v4154
    %v4457 = vunpack.c.h.b16 %v4154
    %v4458 = vunpack.c.l.b16 %v4155
    %v4459 = vunpack.c.l.b16 %v4156
    %v4460 = vunpack.c.h.b16 %v4156
    %v4461 = vunpack.c.l.b16 %v4157
    %v4462 = vunpack.c.l.b16 %v4158
    %v4463 = vunpack.c.h.b16 %v4158
    %v4464 = vunpack.c.l.b16 %v4159
    %v4465 = vpack.c.b16 %v4444, %v4441
    %v4466 = vpack.c.b16 %v4445, %v4442
    %v4467 = vpack.c.b16 %v4446, %v4443
    %v4468 = vpack.c.b16 %v4450, %v4447
    %v4469 = vpack.c.b16 %v4451, %v4448
    %v4470 = vpack.c.b16 %v4452, %v4449
    %v4471 = vpack.c.b16 %v4456, %v4453
    %v4472 = vpack.c.b16 %v4457, %v4454
    %v4473 = vpack.c.b16 %v4458, %v4455
    %v4474 = vpack.c.b16 %v4462, %v4459
    %v4475 = vpack.c.b16 %v4463, %v4460
    %v4476 = vpack.c.b16 %v4464, %v4461
    %v4490 = vsel %vm2315, %v4142, 0
    %v4493 = vsel %vm2315, %v4143, 0
    %4495 = vmatpush.bf16.msra.mxu0 0
    %4496 = vmatpush.bf16.msra.mxu0 0
    %4497 = vmatpush.bf16.msra.mxu0 0
    %4498 = vmatpush.bf16.msra.mxu0 0
    %4499 = vmatpush.bf16.msra.mxu0 %v4474
    %4500 = vmatpush.bf16.msra.mxu0 %v4471
    %4501 = vmatpush.bf16.msra.mxu0 %v4468
    %4502 = vmatpush.bf16.msra.mxu0 %v4465
    %4503 = vmatmul.bf16.gmra.mxu0 %v4490
    %v4504 = vpop.f32.mrf.mxu0
    %v4505 = vadd.f32 %v4378, %v4504
    %v4506 = vpop.f32.mrf.mxu0
    %v4507 = vadd.f32 %v4380, %v4506
    %4508 = vmatmul.bf16.gmra.mxu0 %v4493
    %v4509 = vpop.f32.mrf.mxu0
    %v4510 = vadd.f32 %v4383, %v4509
    %v4511 = vpop.f32.mrf.mxu0
    %v4512 = vadd.f32 %v4385, %v4511
    %4513 = vdwg.mxu0
    %4514 = vmatpush.bf16.msra.mxu0 0
    %4515 = vmatpush.bf16.msra.mxu0 0
    %4516 = vmatpush.bf16.msra.mxu0 0
    %4517 = vmatpush.bf16.msra.mxu0 0
    %4518 = vmatpush.bf16.msra.mxu0 %v4475
    %4519 = vmatpush.bf16.msra.mxu0 %v4472
    %4520 = vmatpush.bf16.msra.mxu0 %v4469
    %4521 = vmatpush.bf16.msra.mxu0 %v4466
    %4522 = vmatmul.bf16.gmra.mxu0 %v4490
    %v4523 = vpop.f32.mrf.mxu0
    %v4524 = vadd.f32 %v4397, %v4523
    %v4525 = vpop.f32.mrf.mxu0
    %v4526 = vadd.f32 %v4399, %v4525
    %4527 = vmatmul.bf16.gmra.mxu0 %v4493
    %v4528 = vpop.f32.mrf.mxu0
    %v4529 = vadd.f32 %v4402, %v4528
    %v4530 = vpop.f32.mrf.mxu0
    %v4531 = vadd.f32 %v4404, %v4530
    %4532 = vdwg.mxu0
    %4533 = vmatpush.bf16.msra.mxu0 0
    %4534 = vmatpush.bf16.msra.mxu0 0
    %4535 = vmatpush.bf16.msra.mxu0 0
    %4536 = vmatpush.bf16.msra.mxu0 0
    %4537 = vmatpush.bf16.msra.mxu0 %v4476
    %4538 = vmatpush.bf16.msra.mxu0 %v4473
    %4539 = vmatpush.bf16.msra.mxu0 %v4470
    %4540 = vmatpush.bf16.msra.mxu0 %v4467
    %4541 = vmatmul.bf16.gmra.mxu0 %v4490
    %v4542 = vpop.f32.mrf.mxu0
    %v4543 = vadd.f32 %v4416, %v4542
    %v4544 = vpop.f32.mrf.mxu0
    %v4545 = vadd.f32 %v4418, %v4544
    %4546 = vmatmul.bf16.gmra.mxu0 %v4493
    %v4547 = vpop.f32.mrf.mxu0
    %v4548 = vadd.f32 %v4421, %v4547
    %v4549 = vpop.f32.mrf.mxu0
    %v4550 = vadd.f32 %v4423, %v4549
    %4551 = vdwg.mxu0
    %v4552 = vunpack.c.h.b16 %v2263
    %v4553 = vunpack.c.h.b16 %v2268
    %v4554 = vunpack.c.h.b16 %v2273
    %v4555 = vunpack.c.h.b16 %v2278
    %v4556 = vpack.c.b16 %v4553, %v4552
    %v4557 = vpack.c.b16 %v4555, %v4554
    %v4562 = vunpack.c.l.b16 %v2265
    %v4563 = vunpack.c.l.b16 %v2270
    %v4564 = vunpack.c.l.b16 %v2275
    %v4565 = vunpack.c.l.b16 %v2280
    %v4566 = vpack.c.b16 %v4563, %v4562
    %v4567 = vpack.c.b16 %v4565, %v4564
    %v4569 = vsel %vm2315, %v4556, 0
    %v4572 = vsel %vm2315, %v4557, 0
    %v4575 = vsel %vm2315, %v4566, 0
    %v4578 = vsel %vm2315, %v4567, 0
    %4580 = vmatpush.bf16.xpose.msra.mxu0 0
    %4581 = vmatpush.bf16.xpose.msra.mxu0 0
    %4582 = vmatpush.bf16.xpose.msra.mxu0 0
    %4583 = vmatpush.bf16.xpose.msra.mxu0 0
    %4584 = vmatpush.bf16.xpose.msra.mxu0 0
    %4585 = vmatpush.bf16.xpose.msra.mxu0 0
    %4586 = vmatpush.bf16.xpose.msra.mxu0 %v4578
    %4587 = vmatpush.bf16.xpose.msra.mxu0 %v4575
    %4588 = vmatmul.bf16.gmra.mxu0 %v4569
    %v4589 = vpop.f32.mrf.mxu0
    %v4590 = vadd.f32 0.0, %v4589
    %v4591 = vpop.f32.mrf.mxu0
    %v4592 = vadd.f32 0.0, %v4591
    %4593 = vmatmul.bf16.gmra.mxu0 %v4572
    %v4594 = vpop.f32.mrf.mxu0
    %v4595 = vadd.f32 0.0, %v4594
    %v4596 = vpop.f32.mrf.mxu0
    %v4597 = vadd.f32 0.0, %v4596
    %4598 = vdwg.mxu0
    %v4599 = vsel %vm2290, %v4590, -inf
    %v4600 = vsel %vm2291, %v4592, -inf
    %v4601 = vsel %vm2292, %v4595, -inf
    %v4602 = vsel %vm2293, %v4597, -inf
    %v4603 = vsel %vm2351, %v4599, -inf
    %4604 = vmax.xlane.f32.xlu0 %v4603
    %v4605 = vpop.xlane.xlu0 %4604
    %v4606 = vsel %vm2351, %v4600, -inf
    %4607 = vmax.xlane.f32.xlu0 %v4606
    %v4608 = vpop.xlane.xlu0 %4607
    %v4609 = vsel %vm2351, %v4601, -inf
    %4610 = vmax.xlane.f32.xlu0 %v4609
    %v4611 = vpop.xlane.xlu0 %4610
    %v4612 = vsel %vm2351, %v4602, -inf
    %4613 = vmax.xlane.f32.xlu0 %v4612
    %v4614 = vpop.xlane.xlu0 %4613
    %v4615 = vsub.f32 %v4599, %v4605
    %v4616 = vsub.f32 %v4600, %v4608
    %v4617 = vsub.f32 %v4601, %v4611
    %v4618 = vsub.f32 %v4602, %v4614
    %v4619 = vmul.f32 %v4615, 1.442695
    %v4620 = vpow.pop %v4619
    %v4621 = vmul.f32 %v4616, 1.442695
    %v4622 = vpow.pop %v4621
    %v4623 = vmul.f32 %v4617, 1.442695
    %v4624 = vpow.pop %v4623
    %v4625 = vmul.f32 %v4618, 1.442695
    %v4626 = vpow.pop %v4625
    %v4627 = vsel %vm2351, %v4620, 0.0
    %4628 = vadd.xlane.f32.xlu0 %v4627
    %v4629 = vpop.xlane.xlu0 %4628
    %v4630 = vsel %vm2351, %v4622, 0.0
    %4631 = vadd.xlane.f32.xlu0 %v4630
    %v4632 = vpop.xlane.xlu0 %4631
    %v4633 = vsel %vm2351, %v4624, 0.0
    %4634 = vadd.xlane.f32.xlu0 %v4633
    %v4635 = vpop.xlane.xlu0 %4634
    %v4636 = vsel %vm2351, %v4626, 0.0
    %4637 = vadd.xlane.f32.xlu0 %v4636
    %v4638 = vpop.xlane.xlu0 %4637
    %v4639 = vrcp.pop %v4629
    %v4640 = vrcp.pop %v4632
    %v4641 = vrcp.pop %v4635
    %v4642 = vrcp.pop %v4638
    %v4643 = vmul.f32 %v4620, %v4639
    %v4644 = vmul.f32 %v4622, %v4640
    %v4645 = vmul.f32 %v4624, %v4641
    %v4646 = vmul.f32 %v4626, %v4642
    %v4647 = vpack.c.bf16 %v4644, %v4643
    %v4648 = vpack.c.bf16 %v4646, %v4645
    %v4649 = vunpack.c.h.b16 %v2266
    %v4650 = vunpack.c.h.b16 %v2271
    %v4651 = vunpack.c.h.b16 %v2276
    %v4652 = vunpack.c.h.b16 %v2281
    %v4653 = vpack.c.b16 %v4650, %v4649
    %v4654 = vpack.c.b16 %v4652, %v4651
    %v4658 = vsel %vm2351, %v4647, 0
    %v4661 = vsel %vm2351, %v4648, 0
    %4663 = vmatpush.bf16.msra.mxu0 0
    %4664 = vmatpush.bf16.msra.mxu0 0
    %4665 = vmatpush.bf16.msra.mxu0 0
    %4666 = vmatpush.bf16.msra.mxu0 0
    %4667 = vmatpush.bf16.msra.mxu0 0
    %4668 = vmatpush.bf16.msra.mxu0 0
    %4669 = vmatpush.bf16.msra.mxu0 %v4654
    %4670 = vmatpush.bf16.msra.mxu0 %v4653
    %4671 = vmatmul.bf16.gmra.mxu0 %v4658
    %v4672 = vpop.f32.mrf.mxu0
    %v4673 = vadd.f32 0.0, %v4672
    %v4674 = vpop.f32.mrf.mxu0
    %v4675 = vadd.f32 0.0, %v4674
    %4676 = vmatmul.bf16.gmra.mxu0 %v4661
    %v4677 = vpop.f32.mrf.mxu0
    %v4678 = vadd.f32 0.0, %v4677
    %v4679 = vpop.f32.mrf.mxu0
    %v4680 = vadd.f32 0.0, %v4679
    %4681 = vdwg.mxu0
    %v4682 = vpack.c.bf16 %v4675, %v4673
    %v4683 = vpack.c.bf16 %v4680, %v4678
    %v4684 = vld [vmem:[#allocation7 + $0xc0] sm:$0xff]
    %v4685 = vld [vmem:[#allocation7 + $0xc8] sm:$0xf]
    %v4686 = vld [vmem:[#allocation7 + $0xcc] sm:$0xff]
    %v4687 = vld [vmem:[#allocation7 + $0xd4] sm:$0xf]
    %v4688 = vld [vmem:[#allocation7 + $0xd8] sm:$0xff]
    %v4689 = vld [vmem:[#allocation7 + $0xe0] sm:$0xf]
    %v4690 = vld [vmem:[#allocation7 + $0xe4] sm:$0xff]
    %v4691 = vld [vmem:[#allocation7 + $0xec] sm:$0xf]
    %v4692 = vld [vmem:[#allocation7 + $0xf0] sm:$0xff]
    %v4693 = vld [vmem:[#allocation7 + $0xf8] sm:$0xf]
    %v4694 = vld [vmem:[#allocation7 + $0xfc] sm:$0xff]
    %v4695 = vld [vmem:[#allocation7 + $0x104] sm:$0xf]
    %v4696 = vld [vmem:[#allocation7 + $0x108] sm:$0xff]
    %v4697 = vld [vmem:[#allocation7 + $0x110] sm:$0xf]
    %v4698 = vld [vmem:[#allocation7 + $0x114] sm:$0xff]
    %v4699 = vld [vmem:[#allocation7 + $0x11c] sm:$0xf]
    %v4716 = vunpack.c.l.b16 %v4684
    %v4717 = vunpack.c.h.b16 %v4684
    %v4718 = vunpack.c.l.b16 %v4685
    %v4719 = vunpack.c.l.b16 %v4686
    %v4720 = vunpack.c.h.b16 %v4686
    %v4721 = vunpack.c.l.b16 %v4687
    %v4722 = vunpack.c.l.b16 %v4688
    %v4723 = vunpack.c.h.b16 %v4688
    %v4724 = vunpack.c.l.b16 %v4689
    %v4725 = vunpack.c.l.b16 %v4690
    %v4726 = vunpack.c.h.b16 %v4690
    %v4727 = vunpack.c.l.b16 %v4691
    %v4728 = vunpack.c.l.b16 %v4692
    %v4729 = vunpack.c.h.b16 %v4692
    %v4730 = vunpack.c.l.b16 %v4693
    %v4731 = vunpack.c.l.b16 %v4694
    %v4732 = vunpack.c.h.b16 %v4694
    %v4733 = vunpack.c.l.b16 %v4695
    %v4734 = vunpack.c.l.b16 %v4696
    %v4735 = vunpack.c.h.b16 %v4696
    %v4736 = vunpack.c.l.b16 %v4697
    %v4737 = vunpack.c.l.b16 %v4698
    %v4738 = vunpack.c.h.b16 %v4698
    %v4739 = vunpack.c.l.b16 %v4699
    %v4740 = vpack.c.b16 %v4719, %v4716
    %v4741 = vpack.c.b16 %v4720, %v4717
    %v4742 = vpack.c.b16 %v4721, %v4718
    %v4743 = vpack.c.b16 %v4725, %v4722
    %v4744 = vpack.c.b16 %v4726, %v4723
    %v4745 = vpack.c.b16 %v4727, %v4724
    %v4746 = vpack.c.b16 %v4731, %v4728
    %v4747 = vpack.c.b16 %v4732, %v4729
    %v4748 = vpack.c.b16 %v4733, %v4730
    %v4749 = vpack.c.b16 %v4737, %v4734
    %v4750 = vpack.c.b16 %v4738, %v4735
    %v4751 = vpack.c.b16 %v4739, %v4736
    %v4765 = vsel %vm2315, %v4682, 0
    %v4768 = vsel %vm2315, %v4683, 0
    %4770 = vmatpush.bf16.msra.mxu0 0
    %4771 = vmatpush.bf16.msra.mxu0 0
    %4772 = vmatpush.bf16.msra.mxu0 0
    %4773 = vmatpush.bf16.msra.mxu0 0
    %4774 = vmatpush.bf16.msra.mxu0 %v4749
    %4775 = vmatpush.bf16.msra.mxu0 %v4746
    %4776 = vmatpush.bf16.msra.mxu0 %v4743
    %4777 = vmatpush.bf16.msra.mxu0 %v4740
    %4778 = vmatmul.bf16.gmra.mxu0 %v4765
    %v4779 = vpop.f32.mrf.mxu0
    %v4780 = vadd.f32 0.0, %v4779
    %v4781 = vpop.f32.mrf.mxu0
    %v4782 = vadd.f32 0.0, %v4781
    %4783 = vmatmul.bf16.gmra.mxu0 %v4768
    %v4784 = vpop.f32.mrf.mxu0
    %v4785 = vadd.f32 0.0, %v4784
    %v4786 = vpop.f32.mrf.mxu0
    %v4787 = vadd.f32 0.0, %v4786
    %4788 = vdwg.mxu0
    %4789 = vmatpush.bf16.msra.mxu0 0
    %4790 = vmatpush.bf16.msra.mxu0 0
    %4791 = vmatpush.bf16.msra.mxu0 0
    %4792 = vmatpush.bf16.msra.mxu0 0
    %4793 = vmatpush.bf16.msra.mxu0 %v4750
    %4794 = vmatpush.bf16.msra.mxu0 %v4747
    %4795 = vmatpush.bf16.msra.mxu0 %v4744
    %4796 = vmatpush.bf16.msra.mxu0 %v4741
    %4797 = vmatmul.bf16.gmra.mxu0 %v4765
    %v4798 = vpop.f32.mrf.mxu0
    %v4799 = vadd.f32 0.0, %v4798
    %v4800 = vpop.f32.mrf.mxu0
    %v4801 = vadd.f32 0.0, %v4800
    %4802 = vmatmul.bf16.gmra.mxu0 %v4768
    %v4803 = vpop.f32.mrf.mxu0
    %v4804 = vadd.f32 0.0, %v4803
    %v4805 = vpop.f32.mrf.mxu0
    %v4806 = vadd.f32 0.0, %v4805
    %4807 = vdwg.mxu0
    %4808 = vmatpush.bf16.msra.mxu0 0
    %4809 = vmatpush.bf16.msra.mxu0 0
    %4810 = vmatpush.bf16.msra.mxu0 0
    %4811 = vmatpush.bf16.msra.mxu0 0
    %4812 = vmatpush.bf16.msra.mxu0 %v4751
    %4813 = vmatpush.bf16.msra.mxu0 %v4748
    %4814 = vmatpush.bf16.msra.mxu0 %v4745
    %4815 = vmatpush.bf16.msra.mxu0 %v4742
    %4816 = vmatmul.bf16.gmra.mxu0 %v4765
    %v4817 = vpop.f32.mrf.mxu0
    %v4818 = vadd.f32 0.0, %v4817
    %v4819 = vpop.f32.mrf.mxu0
    %v4820 = vadd.f32 0.0, %v4819
    %4821 = vmatmul.bf16.gmra.mxu0 %v4768
    %v4822 = vpop.f32.mrf.mxu0
    %v4823 = vadd.f32 0.0, %v4822
    %v4824 = vpop.f32.mrf.mxu0
    %v4825 = vadd.f32 0.0, %v4824
    %4826 = vdwg.mxu0
    %v4827 = vadd.f32 %v4505, %v4780
    %v4828 = vadd.f32 %v4524, %v4799
    %v4829 = vadd.f32 %v4543, %v4818
    %v4830 = vadd.f32 %v4507, %v4782
    %v4831 = vadd.f32 %v4526, %v4801
    %v4832 = vadd.f32 %v4545, %v4820
    %v4833 = vadd.f32 %v4510, %v4785
    %v4834 = vadd.f32 %v4529, %v4804
    %v4835 = vadd.f32 %v4548, %v4823
    %v4836 = vadd.f32 %v4512, %v4787
    %v4837 = vadd.f32 %v4531, %v4806
    %v4838 = vadd.f32 %v4550, %v4825
    %4839 = vrot.lane.b32.xlu0 %v4556, 64
    %v4840 = vpop.permute.xlu0 %4839
    %4841 = vrot.lane.b32.xlu0 %v4557, 64
    %v4842 = vpop.permute.xlu0 %4841
    %4843 = vrot.lane.b32.xlu0 %v4566, 64
    %v4844 = vpop.permute.xlu0 %4843
    %4845 = vrot.lane.b32.xlu0 %v4567, 64
    %v4846 = vpop.permute.xlu0 %4845
    %v4848 = vsel %vm2315, %v4840, 0
    %v4851 = vsel %vm2315, %v4842, 0
    %v4854 = vsel %vm2315, %v4844, 0
    %v4857 = vsel %vm2315, %v4846, 0
    %4859 = vmatpush.bf16.xpose.msra.mxu0 0
    %4860 = vmatpush.bf16.xpose.msra.mxu0 0
    %4861 = vmatpush.bf16.xpose.msra.mxu0 0
    %4862 = vmatpush.bf16.xpose.msra.mxu0 0
    %4863 = vmatpush.bf16.xpose.msra.mxu0 0
    %4864 = vmatpush.bf16.xpose.msra.mxu0 0
    %4865 = vmatpush.bf16.xpose.msra.mxu0 %v4857
    %4866 = vmatpush.bf16.xpose.msra.mxu0 %v4854
    %4867 = vmatmul.bf16.gmra.mxu0 %v4848
    %v4868 = vpop.f32.mrf.mxu0
    %v4869 = vadd.f32 0.0, %v4868
    %v4870 = vpop.f32.mrf.mxu0
    %v4871 = vadd.f32 0.0, %v4870
    %4872 = vmatmul.bf16.gmra.mxu0 %v4851
    %v4873 = vpop.f32.mrf.mxu0
    %v4874 = vadd.f32 0.0, %v4873
    %v4875 = vpop.f32.mrf.mxu0
    %v4876 = vadd.f32 0.0, %v4875
    %4877 = vdwg.mxu0
    %v4878 = vsel %vm2290, %v4869, -inf
    %v4879 = vsel %vm2291, %v4871, -inf
    %v4880 = vsel %vm2292, %v4874, -inf
    %v4881 = vsel %vm2293, %v4876, -inf
    %v4882 = vsel %vm2351, %v4878, -inf
    %4883 = vmax.xlane.f32.xlu0 %v4882
    %v4884 = vpop.xlane.xlu0 %4883
    %v4885 = vsel %vm2351, %v4879, -inf
    %4886 = vmax.xlane.f32.xlu0 %v4885
    %v4887 = vpop.xlane.xlu0 %4886
    %v4888 = vsel %vm2351, %v4880, -inf
    %4889 = vmax.xlane.f32.xlu0 %v4888
    %v4890 = vpop.xlane.xlu0 %4889
    %v4891 = vsel %vm2351, %v4881, -inf
    %4892 = vmax.xlane.f32.xlu0 %v4891
    %v4893 = vpop.xlane.xlu0 %4892
    %v4894 = vsub.f32 %v4878, %v4884
    %v4895 = vsub.f32 %v4879, %v4887
    %v4896 = vsub.f32 %v4880, %v4890
    %v4897 = vsub.f32 %v4881, %v4893
    %v4898 = vmul.f32 %v4894, 1.442695
    %v4899 = vpow.pop %v4898
    %v4900 = vmul.f32 %v4895, 1.442695
    %v4901 = vpow.pop %v4900
    %v4902 = vmul.f32 %v4896, 1.442695
    %v4903 = vpow.pop %v4902
    %v4904 = vmul.f32 %v4897, 1.442695
    %v4905 = vpow.pop %v4904
    %v4906 = vsel %vm2351, %v4899, 0.0
    %4907 = vadd.xlane.f32.xlu0 %v4906
    %v4908 = vpop.xlane.xlu0 %4907
    %v4909 = vsel %vm2351, %v4901, 0.0
    %4910 = vadd.xlane.f32.xlu0 %v4909
    %v4911 = vpop.xlane.xlu0 %4910
    %v4912 = vsel %vm2351, %v4903, 0.0
    %4913 = vadd.xlane.f32.xlu0 %v4912
    %v4914 = vpop.xlane.xlu0 %4913
    %v4915 = vsel %vm2351, %v4905, 0.0
    %4916 = vadd.xlane.f32.xlu0 %v4915
    %v4917 = vpop.xlane.xlu0 %4916
    %v4918 = vrcp.pop %v4908
    %v4919 = vrcp.pop %v4911
    %v4920 = vrcp.pop %v4914
    %v4921 = vrcp.pop %v4917
    %v4922 = vmul.f32 %v4899, %v4918
    %v4923 = vmul.f32 %v4901, %v4919
    %v4924 = vmul.f32 %v4903, %v4920
    %v4925 = vmul.f32 %v4905, %v4921
    %v4926 = vpack.c.bf16 %v4923, %v4922
    %v4927 = vpack.c.bf16 %v4925, %v4924
    %4928 = vrot.lane.b32.xlu0 %v4653, 64
    %v4929 = vpop.permute.xlu0 %4928
    %4930 = vrot.lane.b32.xlu0 %v4654, 64
    %v4931 = vpop.permute.xlu0 %4930
    %v4935 = vsel %vm2351, %v4926, 0
    %v4938 = vsel %vm2351, %v4927, 0
    %4940 = vmatpush.bf16.msra.mxu0 0
    %4941 = vmatpush.bf16.msra.mxu0 0
    %4942 = vmatpush.bf16.msra.mxu0 0
    %4943 = vmatpush.bf16.msra.mxu0 0
    %4944 = vmatpush.bf16.msra.mxu0 0
    %4945 = vmatpush.bf16.msra.mxu0 0
    %4946 = vmatpush.bf16.msra.mxu0 %v4931
    %4947 = vmatpush.bf16.msra.mxu0 %v4929
    %4948 = vmatmul.bf16.gmra.mxu0 %v4935
    %v4949 = vpop.f32.mrf.mxu0
    %v4950 = vadd.f32 0.0, %v4949
    %v4951 = vpop.f32.mrf.mxu0
    %v4952 = vadd.f32 0.0, %v4951
    %4953 = vmatmul.bf16.gmra.mxu0 %v4938
    %v4954 = vpop.f32.mrf.mxu0
    %v4955 = vadd.f32 0.0, %v4954
    %v4956 = vpop.f32.mrf.mxu0
    %v4957 = vadd.f32 0.0, %v4956
    %4958 = vdwg.mxu0
    %v4959 = vpack.c.bf16 %v4952, %v4950
    %v4960 = vpack.c.bf16 %v4957, %v4955
    %v4961 = vld [vmem:[#allocation7 + $0x120] sm:$0xff]
    %v4962 = vld [vmem:[#allocation7 + $0x128] sm:$0xf]
    %v4963 = vld [vmem:[#allocation7 + $0x12c] sm:$0xff]
    %v4964 = vld [vmem:[#allocation7 + $0x134] sm:$0xf]
    %v4965 = vld [vmem:[#allocation7 + $0x138] sm:$0xff]
    %v4966 = vld [vmem:[#allocation7 + $0x140] sm:$0xf]
    %v4967 = vld [vmem:[#allocation7 + $0x144] sm:$0xff]
    %v4968 = vld [vmem:[#allocation7 + $0x14c] sm:$0xf]
    %v4969 = vld [vmem:[#allocation7 + $0x150] sm:$0xff]
    %v4970 = vld [vmem:[#allocation7 + $0x158] sm:$0xf]
    %v4971 = vld [vmem:[#allocation7 + $0x15c] sm:$0xff]
    %v4972 = vld [vmem:[#allocation7 + $0x164] sm:$0xf]
    %v4973 = vld [vmem:[#allocation7 + $0x168] sm:$0xff]
    %v4974 = vld [vmem:[#allocation7 + $0x170] sm:$0xf]
    %v4975 = vld [vmem:[#allocation7 + $0x174] sm:$0xff]
    %v4976 = vld [vmem:[#allocation7 + $0x17c] sm:$0xf]
    %v4993 = vunpack.c.l.b16 %v4961
    %v4994 = vunpack.c.h.b16 %v4961
    %v4995 = vunpack.c.l.b16 %v4962
    %v4996 = vunpack.c.l.b16 %v4963
    %v4997 = vunpack.c.h.b16 %v4963
    %v4998 = vunpack.c.l.b16 %v4964
    %v4999 = vunpack.c.l.b16 %v4965
    %v5000 = vunpack.c.h.b16 %v4965
    %v5001 = vunpack.c.l.b16 %v4966
    %v5002 = vunpack.c.l.b16 %v4967
    %v5003 = vunpack.c.h.b16 %v4967
    %v5004 = vunpack.c.l.b16 %v4968
    %v5005 = vunpack.c.l.b16 %v4969
    %v5006 = vunpack.c.h.b16 %v4969
    %v5007 = vunpack.c.l.b16 %v4970
    %v5008 = vunpack.c.l.b16 %v4971
    %v5009 = vunpack.c.h.b16 %v4971
    %v5010 = vunpack.c.l.b16 %v4972
    %v5011 = vunpack.c.l.b16 %v4973
    %v5012 = vunpack.c.h.b16 %v4973
    %v5013 = vunpack.c.l.b16 %v4974
    %v5014 = vunpack.c.l.b16 %v4975
    %v5015 = vunpack.c.h.b16 %v4975
    %v5016 = vunpack.c.l.b16 %v4976
    %v5017 = vpack.c.b16 %v4996, %v4993
    %v5018 = vpack.c.b16 %v4997, %v4994
    %v5019 = vpack.c.b16 %v4998, %v4995
    %v5020 = vpack.c.b16 %v5002, %v4999
    %v5021 = vpack.c.b16 %v5003, %v5000
    %v5022 = vpack.c.b16 %v5004, %v5001
    %v5023 = vpack.c.b16 %v5008, %v5005
    %v5024 = vpack.c.b16 %v5009, %v5006
    %v5025 = vpack.c.b16 %v5010, %v5007
    %v5026 = vpack.c.b16 %v5014, %v5011
    %v5027 = vpack.c.b16 %v5015, %v5012
    %v5028 = vpack.c.b16 %v5016, %v5013
    %v5042 = vsel %vm2315, %v4959, 0
    %v5045 = vsel %vm2315, %v4960, 0
    %5047 = vmatpush.bf16.msra.mxu0 0
    %5048 = vmatpush.bf16.msra.mxu0 0
    %5049 = vmatpush.bf16.msra.mxu0 0
    %5050 = vmatpush.bf16.msra.mxu0 0
    %5051 = vmatpush.bf16.msra.mxu0 %v5026
    %5052 = vmatpush.bf16.msra.mxu0 %v5023
    %5053 = vmatpush.bf16.msra.mxu0 %v5020
    %5054 = vmatpush.bf16.msra.mxu0 %v5017
    %5055 = vmatmul.bf16.gmra.mxu0 %v5042
    %v5056 = vpop.f32.mrf.mxu0
    %v5057 = vadd.f32 0.0, %v5056
    %v5058 = vpop.f32.mrf.mxu0
    %v5059 = vadd.f32 0.0, %v5058
    %5060 = vmatmul.bf16.gmra.mxu0 %v5045
    %v5061 = vpop.f32.mrf.mxu0
    %v5062 = vadd.f32 0.0, %v5061
    %v5063 = vpop.f32.mrf.mxu0
    %v5064 = vadd.f32 0.0, %v5063
    %5065 = vdwg.mxu0
    %5066 = vmatpush.bf16.msra.mxu0 0
    %5067 = vmatpush.bf16.msra.mxu0 0
    %5068 = vmatpush.bf16.msra.mxu0 0
    %5069 = vmatpush.bf16.msra.mxu0 0
    %5070 = vmatpush.bf16.msra.mxu0 %v5027
    %5071 = vmatpush.bf16.msra.mxu0 %v5024
    %5072 = vmatpush.bf16.msra.mxu0 %v5021
    %5073 = vmatpush.bf16.msra.mxu0 %v5018
    %5074 = vmatmul.bf16.gmra.mxu0 %v5042
    %v5075 = vpop.f32.mrf.mxu0
    %v5076 = vadd.f32 0.0, %v5075
    %v5077 = vpop.f32.mrf.mxu0
    %v5078 = vadd.f32 0.0, %v5077
    %5079 = vmatmul.bf16.gmra.mxu0 %v5045
    %v5080 = vpop.f32.mrf.mxu0
    %v5081 = vadd.f32 0.0, %v5080
    %v5082 = vpop.f32.mrf.mxu0
    %v5083 = vadd.f32 0.0, %v5082
    %5084 = vdwg.mxu0
    %5085 = vmatpush.bf16.msra.mxu0 0
    %5086 = vmatpush.bf16.msra.mxu0 0
    %5087 = vmatpush.bf16.msra.mxu0 0
    %5088 = vmatpush.bf16.msra.mxu0 0
    %5089 = vmatpush.bf16.msra.mxu0 %v5028
    %5090 = vmatpush.bf16.msra.mxu0 %v5025
    %5091 = vmatpush.bf16.msra.mxu0 %v5022
    %5092 = vmatpush.bf16.msra.mxu0 %v5019
    %5093 = vmatmul.bf16.gmra.mxu0 %v5042
    %v5094 = vpop.f32.mrf.mxu0
    %v5095 = vadd.f32 0.0, %v5094
    %v5096 = vpop.f32.mrf.mxu0
    %v5097 = vadd.f32 0.0, %v5096
    %5098 = vmatmul.bf16.gmra.mxu0 %v5045
    %v5099 = vpop.f32.mrf.mxu0
    %v5100 = vadd.f32 0.0, %v5099
    %v5101 = vpop.f32.mrf.mxu0
    %v5102 = vadd.f32 0.0, %v5101
    %5103 = vdwg.mxu0
    %v5104 = vadd.f32 %v4827, %v5057
    %v5105 = vadd.f32 %v4828, %v5076
    %v5106 = vadd.f32 %v4829, %v5095
    %v5107 = vadd.f32 %v4830, %v5059
    %v5108 = vadd.f32 %v4831, %v5078
    %v5109 = vadd.f32 %v4832, %v5097
    %v5110 = vadd.f32 %v4833, %v5062
    %v5111 = vadd.f32 %v4834, %v5081
    %v5112 = vadd.f32 %v4835, %v5100
    %v5113 = vadd.f32 %v4836, %v5064
    %v5114 = vadd.f32 %v4837, %v5083
    %v5115 = vadd.f32 %v4838, %v5102
    %v5116 = vunpack.c.l.b16 %v2264
    %v5117 = vunpack.c.l.b16 %v2269
    %v5118 = vunpack.c.l.b16 %v2274
    %v5119 = vunpack.c.l.b16 %v2279
    %v5120 = vpack.c.b16 %v5117, %v5116
    %v5121 = vpack.c.b16 %v5119, %v5118
    %v5122 = vunpack.c.h.b16 %v2265
    %v5123 = vunpack.c.h.b16 %v2270
    %v5124 = vunpack.c.h.b16 %v2275
    %v5125 = vunpack.c.h.b16 %v2280
    %v5126 = vpack.c.b16 %v5123, %v5122
    %v5127 = vpack.c.b16 %v5125, %v5124
    %v5129 = vsel %vm2315, %v5120, 0
    %v5132 = vsel %vm2315, %v5121, 0
    %v5135 = vsel %vm2315, %v5126, 0
    %v5138 = vsel %vm2315, %v5127, 0
    %5140 = vmatpush.bf16.xpose.msra.mxu0 0
    %5141 = vmatpush.bf16.xpose.msra.mxu0 0
    %5142 = vmatpush.bf16.xpose.msra.mxu0 0
    %5143 = vmatpush.bf16.xpose.msra.mxu0 0
    %5144 = vmatpush.bf16.xpose.msra.mxu0 0
    %5145 = vmatpush.bf16.xpose.msra.mxu0 0
    %5146 = vmatpush.bf16.xpose.msra.mxu0 %v5138
    %5147 = vmatpush.bf16.xpose.msra.mxu0 %v5135
    %5148 = vmatmul.bf16.gmra.mxu0 %v5129
    %v5149 = vpop.f32.mrf.mxu0
    %v5150 = vadd.f32 0.0, %v5149
    %v5151 = vpop.f32.mrf.mxu0
    %v5152 = vadd.f32 0.0, %v5151
    %5153 = vmatmul.bf16.gmra.mxu0 %v5132
    %v5154 = vpop.f32.mrf.mxu0
    %v5155 = vadd.f32 0.0, %v5154
    %v5156 = vpop.f32.mrf.mxu0
    %v5157 = vadd.f32 0.0, %v5156
    %5158 = vdwg.mxu0
    %v5159 = vsel %vm2290, %v5150, -inf
    %v5160 = vsel %vm2291, %v5152, -inf
    %v5161 = vsel %vm2292, %v5155, -inf
    %v5162 = vsel %vm2293, %v5157, -inf
    %v5163 = vsel %vm2351, %v5159, -inf
    %5164 = vmax.xlane.f32.xlu0 %v5163
    %v5165 = vpop.xlane.xlu0 %5164
    %v5166 = vsel %vm2351, %v5160, -inf
    %5167 = vmax.xlane.f32.xlu0 %v5166
    %v5168 = vpop.xlane.xlu0 %5167
    %v5169 = vsel %vm2351, %v5161, -inf
    %5170 = vmax.xlane.f32.xlu0 %v5169
    %v5171 = vpop.xlane.xlu0 %5170
    %v5172 = vsel %vm2351, %v5162, -inf
    %5173 = vmax.xlane.f32.xlu0 %v5172
    %v5174 = vpop.xlane.xlu0 %5173
    %v5175 = vsub.f32 %v5159, %v5165
    %v5176 = vsub.f32 %v5160, %v5168
    %v5177 = vsub.f32 %v5161, %v5171
    %v5178 = vsub.f32 %v5162, %v5174
    %v5179 = vmul.f32 %v5175, 1.442695
    %v5180 = vpow.pop %v5179
    %v5181 = vmul.f32 %v5176, 1.442695
    %v5182 = vpow.pop %v5181
    %v5183 = vmul.f32 %v5177, 1.442695
    %v5184 = vpow.pop %v5183
    %v5185 = vmul.f32 %v5178, 1.442695
    %v5186 = vpow.pop %v5185
    %v5187 = vsel %vm2351, %v5180, 0.0
    %5188 = vadd.xlane.f32.xlu0 %v5187
    %v5189 = vpop.xlane.xlu0 %5188
    %v5190 = vsel %vm2351, %v5182, 0.0
    %5191 = vadd.xlane.f32.xlu0 %v5190
    %v5192 = vpop.xlane.xlu0 %5191
    %v5193 = vsel %vm2351, %v5184, 0.0
    %5194 = vadd.xlane.f32.xlu0 %v5193
    %v5195 = vpop.xlane.xlu0 %5194
    %v5196 = vsel %vm2351, %v5186, 0.0
    %5197 = vadd.xlane.f32.xlu0 %v5196
    %v5198 = vpop.xlane.xlu0 %5197
    %v5199 = vrcp.pop %v5189
    %v5200 = vrcp.pop %v5192
    %v5201 = vrcp.pop %v5195
    %v5202 = vrcp.pop %v5198
    %v5203 = vmul.f32 %v5180, %v5199
    %v5204 = vmul.f32 %v5182, %v5200
    %v5205 = vmul.f32 %v5184, %v5201
    %v5206 = vmul.f32 %v5186, %v5202
    %v5207 = vpack.c.bf16 %v5204, %v5203
    %v5208 = vpack.c.bf16 %v5206, %v5205
    %v5213 = vunpack.c.l.b16 %v2267
    %v5214 = vunpack.c.l.b16 %v2272
    %v5215 = vunpack.c.l.b16 %v2277
    %v5216 = vunpack.c.l.b16 %v2282
    %v5217 = vpack.c.b16 %v5214, %v5213
    %v5218 = vpack.c.b16 %v5216, %v5215
    %v5222 = vsel %vm2351, %v5207, 0
    %v5225 = vsel %vm2351, %v5208, 0
    %5227 = vmatpush.bf16.msra.mxu0 0
    %5228 = vmatpush.bf16.msra.mxu0 0
    %5229 = vmatpush.bf16.msra.mxu0 0
    %5230 = vmatpush.bf16.msra.mxu0 0
    %5231 = vmatpush.bf16.msra.mxu0 0
    %5232 = vmatpush.bf16.msra.mxu0 0
    %5233 = vmatpush.bf16.msra.mxu0 %v5218
    %5234 = vmatpush.bf16.msra.mxu0 %v5217
    %5235 = vmatmul.bf16.gmra.mxu0 %v5222
    %v5236 = vpop.f32.mrf.mxu0
    %v5237 = vadd.f32 0.0, %v5236
    %v5238 = vpop.f32.mrf.mxu0
    %v5239 = vadd.f32 0.0, %v5238
    %5240 = vmatmul.bf16.gmra.mxu0 %v5225
    %v5241 = vpop.f32.mrf.mxu0
    %v5242 = vadd.f32 0.0, %v5241
    %v5243 = vpop.f32.mrf.mxu0
    %v5244 = vadd.f32 0.0, %v5243
    %5245 = vdwg.mxu0
    %v5246 = vpack.c.bf16 %v5239, %v5237
    %v5247 = vpack.c.bf16 %v5244, %v5242
    %v5248 = vld [vmem:[#allocation7 + $0x180] sm:$0xff]
    %v5249 = vld [vmem:[#allocation7 + $0x188] sm:$0xf]
    %v5250 = vld [vmem:[#allocation7 + $0x18c] sm:$0xff]
    %v5251 = vld [vmem:[#allocation7 + $0x194] sm:$0xf]
    %v5252 = vld [vmem:[#allocation7 + $0x198] sm:$0xff]
    %v5253 = vld [vmem:[#allocation7 + $0x1a0] sm:$0xf]
    %v5254 = vld [vmem:[#allocation7 + $0x1a4] sm:$0xff]
    %v5255 = vld [vmem:[#allocation7 + $0x1ac] sm:$0xf]
    %v5256 = vld [vmem:[#allocation7 + $0x1b0] sm:$0xff]
    %v5257 = vld [vmem:[#allocation7 + $0x1b8] sm:$0xf]
    %v5258 = vld [vmem:[#allocation7 + $0x1bc] sm:$0xff]
    %v5259 = vld [vmem:[#allocation7 + $0x1c4] sm:$0xf]
    %v5260 = vld [vmem:[#allocation7 + $0x1c8] sm:$0xff]
    %v5261 = vld [vmem:[#allocation7 + $0x1d0] sm:$0xf]
    %v5262 = vld [vmem:[#allocation7 + $0x1d4] sm:$0xff]
    %v5263 = vld [vmem:[#allocation7 + $0x1dc] sm:$0xf]
    %v5280 = vunpack.c.l.b16 %v5248
    %v5281 = vunpack.c.h.b16 %v5248
    %v5282 = vunpack.c.l.b16 %v5249
    %v5283 = vunpack.c.l.b16 %v5250
    %v5284 = vunpack.c.h.b16 %v5250
    %v5285 = vunpack.c.l.b16 %v5251
    %v5286 = vunpack.c.l.b16 %v5252
    %v5287 = vunpack.c.h.b16 %v5252
    %v5288 = vunpack.c.l.b16 %v5253
    %v5289 = vunpack.c.l.b16 %v5254
    %v5290 = vunpack.c.h.b16 %v5254
    %v5291 = vunpack.c.l.b16 %v5255
    %v5292 = vunpack.c.l.b16 %v5256
    %v5293 = vunpack.c.h.b16 %v5256
    %v5294 = vunpack.c.l.b16 %v5257
    %v5295 = vunpack.c.l.b16 %v5258
    %v5296 = vunpack.c.h.b16 %v5258
    %v5297 = vunpack.c.l.b16 %v5259
    %v5298 = vunpack.c.l.b16 %v5260
    %v5299 = vunpack.c.h.b16 %v5260
    %v5300 = vunpack.c.l.b16 %v5261
    %v5301 = vunpack.c.l.b16 %v5262
    %v5302 = vunpack.c.h.b16 %v5262
    %v5303 = vunpack.c.l.b16 %v5263
    %v5304 = vpack.c.b16 %v5283, %v5280
    %v5305 = vpack.c.b16 %v5284, %v5281
    %v5306 = vpack.c.b16 %v5285, %v5282
    %v5307 = vpack.c.b16 %v5289, %v5286
    %v5308 = vpack.c.b16 %v5290, %v5287
    %v5309 = vpack.c.b16 %v5291, %v5288
    %v5310 = vpack.c.b16 %v5295, %v5292
    %v5311 = vpack.c.b16 %v5296, %v5293
    %v5312 = vpack.c.b16 %v5297, %v5294
    %v5313 = vpack.c.b16 %v5301, %v5298
    %v5314 = vpack.c.b16 %v5302, %v5299
    %v5315 = vpack.c.b16 %v5303, %v5300
    %v5329 = vsel %vm2315, %v5246, 0
    %v5332 = vsel %vm2315, %v5247, 0
    %5334 = vmatpush.bf16.msra.mxu0 0
    %5335 = vmatpush.bf16.msra.mxu0 0
    %5336 = vmatpush.bf16.msra.mxu0 0
    %5337 = vmatpush.bf16.msra.mxu0 0
    %5338 = vmatpush.bf16.msra.mxu0 %v5313
    %5339 = vmatpush.bf16.msra.mxu0 %v5310
    %5340 = vmatpush.bf16.msra.mxu0 %v5307
    %5341 = vmatpush.bf16.msra.mxu0 %v5304
    %5342 = vmatmul.bf16.gmra.mxu0 %v5329
    %v5343 = vpop.f32.mrf.mxu0
    %v5344 = vadd.f32 0.0, %v5343
    %v5345 = vpop.f32.mrf.mxu0
    %v5346 = vadd.f32 0.0, %v5345
    %5347 = vmatmul.bf16.gmra.mxu0 %v5332
    %v5348 = vpop.f32.mrf.mxu0
    %v5349 = vadd.f32 0.0, %v5348
    %v5350 = vpop.f32.mrf.mxu0
    %v5351 = vadd.f32 0.0, %v5350
    %5352 = vdwg.mxu0
    %5353 = vmatpush.bf16.msra.mxu0 0
    %5354 = vmatpush.bf16.msra.mxu0 0
    %5355 = vmatpush.bf16.msra.mxu0 0
    %5356 = vmatpush.bf16.msra.mxu0 0
    %5357 = vmatpush.bf16.msra.mxu0 %v5314
    %5358 = vmatpush.bf16.msra.mxu0 %v5311
    %5359 = vmatpush.bf16.msra.mxu0 %v5308
    %5360 = vmatpush.bf16.msra.mxu0 %v5305
    %5361 = vmatmul.bf16.gmra.mxu0 %v5329
    %v5362 = vpop.f32.mrf.mxu0
    %v5363 = vadd.f32 0.0, %v5362
    %v5364 = vpop.f32.mrf.mxu0
    %v5365 = vadd.f32 0.0, %v5364
    %5366 = vmatmul.bf16.gmra.mxu0 %v5332
    %v5367 = vpop.f32.mrf.mxu0
    %v5368 = vadd.f32 0.0, %v5367
    %v5369 = vpop.f32.mrf.mxu0
    %v5370 = vadd.f32 0.0, %v5369
    %5371 = vdwg.mxu0
    %5372 = vmatpush.bf16.msra.mxu0 0
    %5373 = vmatpush.bf16.msra.mxu0 0
    %5374 = vmatpush.bf16.msra.mxu0 0
    %5375 = vmatpush.bf16.msra.mxu0 0
    %5376 = vmatpush.bf16.msra.mxu0 %v5315
    %5377 = vmatpush.bf16.msra.mxu0 %v5312
    %5378 = vmatpush.bf16.msra.mxu0 %v5309
    %5379 = vmatpush.bf16.msra.mxu0 %v5306
    %5380 = vmatmul.bf16.gmra.mxu0 %v5329
    %v5381 = vpop.f32.mrf.mxu0
    %v5382 = vadd.f32 0.0, %v5381
    %v5383 = vpop.f32.mrf.mxu0
    %v5384 = vadd.f32 0.0, %v5383
    %5385 = vmatmul.bf16.gmra.mxu0 %v5332
    %v5386 = vpop.f32.mrf.mxu0
    %v5387 = vadd.f32 0.0, %v5386
    %v5388 = vpop.f32.mrf.mxu0
    %v5389 = vadd.f32 0.0, %v5388
    %5390 = vdwg.mxu0
    %v5391 = vadd.f32 %v5104, %v5344
    %v5392 = vadd.f32 %v5105, %v5363
    %v5393 = vadd.f32 %v5106, %v5382
    %v5394 = vadd.f32 %v5107, %v5346
    %v5395 = vadd.f32 %v5108, %v5365
    %v5396 = vadd.f32 %v5109, %v5384
    %v5397 = vadd.f32 %v5110, %v5349
    %v5398 = vadd.f32 %v5111, %v5368
    %v5399 = vadd.f32 %v5112, %v5387
    %v5400 = vadd.f32 %v5113, %v5351
    %v5401 = vadd.f32 %v5114, %v5370
    %v5402 = vadd.f32 %v5115, %v5389
    %5403 = vrot.lane.b32.xlu0 %v5120, 64
    %v5404 = vpop.permute.xlu0 %5403
    %5405 = vrot.lane.b32.xlu0 %v5121, 64
    %v5406 = vpop.permute.xlu0 %5405
    %5407 = vrot.lane.b32.xlu0 %v5126, 64
    %v5408 = vpop.permute.xlu0 %5407
    %5409 = vrot.lane.b32.xlu0 %v5127, 64
    %v5410 = vpop.permute.xlu0 %5409
    %v5412 = vsel %vm2315, %v5404, 0
    %v5415 = vsel %vm2315, %v5406, 0
    %v5418 = vsel %vm2315, %v5408, 0
    %v5421 = vsel %vm2315, %v5410, 0
    %5423 = vmatpush.bf16.xpose.msra.mxu0 0
    %5424 = vmatpush.bf16.xpose.msra.mxu0 0
    %5425 = vmatpush.bf16.xpose.msra.mxu0 0
    %5426 = vmatpush.bf16.xpose.msra.mxu0 0
    %5427 = vmatpush.bf16.xpose.msra.mxu0 0
    %5428 = vmatpush.bf16.xpose.msra.mxu0 0
    %5429 = vmatpush.bf16.xpose.msra.mxu0 %v5421
    %5430 = vmatpush.bf16.xpose.msra.mxu0 %v5418
    %5431 = vmatmul.bf16.gmra.mxu0 %v5412
    %v5432 = vpop.f32.mrf.mxu0
    %v5433 = vadd.f32 0.0, %v5432
    %v5434 = vpop.f32.mrf.mxu0
    %v5435 = vadd.f32 0.0, %v5434
    %5436 = vmatmul.bf16.gmra.mxu0 %v5415
    %v5437 = vpop.f32.mrf.mxu0
    %v5438 = vadd.f32 0.0, %v5437
    %v5439 = vpop.f32.mrf.mxu0
    %v5440 = vadd.f32 0.0, %v5439
    %5441 = vdwg.mxu0
    %v5442 = vsel %vm2290, %v5433, -inf
    %v5443 = vsel %vm2291, %v5435, -inf
    %v5444 = vsel %vm2292, %v5438, -inf
    %v5445 = vsel %vm2293, %v5440, -inf
    %v5446 = vsel %vm2351, %v5442, -inf
    %5447 = vmax.xlane.f32.xlu0 %v5446
    %v5448 = vpop.xlane.xlu0 %5447
    %v5449 = vsel %vm2351, %v5443, -inf
    %5450 = vmax.xlane.f32.xlu0 %v5449
    %v5451 = vpop.xlane.xlu0 %5450
    %v5452 = vsel %vm2351, %v5444, -inf
    %5453 = vmax.xlane.f32.xlu0 %v5452
    %v5454 = vpop.xlane.xlu0 %5453
    %v5455 = vsel %vm2351, %v5445, -inf
    %5456 = vmax.xlane.f32.xlu0 %v5455
    %v5457 = vpop.xlane.xlu0 %5456
    %v5458 = vsub.f32 %v5442, %v5448
    %v5459 = vsub.f32 %v5443, %v5451
    %v5460 = vsub.f32 %v5444, %v5454
    %v5461 = vsub.f32 %v5445, %v5457
    %v5462 = vmul.f32 %v5458, 1.442695
    %v5463 = vpow.pop %v5462
    %v5464 = vmul.f32 %v5459, 1.442695
    %v5465 = vpow.pop %v5464
    %v5466 = vmul.f32 %v5460, 1.442695
    %v5467 = vpow.pop %v5466
    %v5468 = vmul.f32 %v5461, 1.442695
    %v5469 = vpow.pop %v5468
    %v5470 = vsel %vm2351, %v5463, 0.0
    %5471 = vadd.xlane.f32.xlu0 %v5470
    %v5472 = vpop.xlane.xlu0 %5471
    %v5473 = vsel %vm2351, %v5465, 0.0
    %5474 = vadd.xlane.f32.xlu0 %v5473
    %v5475 = vpop.xlane.xlu0 %5474
    %v5476 = vsel %vm2351, %v5467, 0.0
    %5477 = vadd.xlane.f32.xlu0 %v5476
    %v5478 = vpop.xlane.xlu0 %5477
    %v5479 = vsel %vm2351, %v5469, 0.0
    %5480 = vadd.xlane.f32.xlu0 %v5479
    %v5481 = vpop.xlane.xlu0 %5480
    %v5482 = vrcp.pop %v5472
    %v5483 = vrcp.pop %v5475
    %v5484 = vrcp.pop %v5478
    %v5485 = vrcp.pop %v5481
    %v5486 = vmul.f32 %v5463, %v5482
    %v5487 = vmul.f32 %v5465, %v5483
    %v5488 = vmul.f32 %v5467, %v5484
    %v5489 = vmul.f32 %v5469, %v5485
    %v5490 = vpack.c.bf16 %v5487, %v5486
    %v5491 = vpack.c.bf16 %v5489, %v5488
    %5492 = vrot.lane.b32.xlu0 %v5217, 64
    %v5493 = vpop.permute.xlu0 %5492
    %5494 = vrot.lane.b32.xlu0 %v5218, 64
    %v5495 = vpop.permute.xlu0 %5494
    %v5499 = vsel %vm2351, %v5490, 0
    %v5502 = vsel %vm2351, %v5491, 0
    %5504 = vmatpush.bf16.msra.mxu0 0
    %5505 = vmatpush.bf16.msra.mxu0 0
    %5506 = vmatpush.bf16.msra.mxu0 0
    %5507 = vmatpush.bf16.msra.mxu0 0
    %5508 = vmatpush.bf16.msra.mxu0 0
    %5509 = vmatpush.bf16.msra.mxu0 0
    %5510 = vmatpush.bf16.msra.mxu0 %v5495
    %5511 = vmatpush.bf16.msra.mxu0 %v5493
    %5512 = vmatmul.bf16.gmra.mxu0 %v5499
    %v5513 = vpop.f32.mrf.mxu0
    %v5514 = vadd.f32 0.0, %v5513
    %v5515 = vpop.f32.mrf.mxu0
    %v5516 = vadd.f32 0.0, %v5515
    %5517 = vmatmul.bf16.gmra.mxu0 %v5502
    %v5518 = vpop.f32.mrf.mxu0
    %v5519 = vadd.f32 0.0, %v5518
    %v5520 = vpop.f32.mrf.mxu0
    %v5521 = vadd.f32 0.0, %v5520
    %5522 = vdwg.mxu0
    %v5523 = vpack.c.bf16 %v5516, %v5514
    %v5524 = vpack.c.bf16 %v5521, %v5519
    %v5525 = vld [vmem:[#allocation7 + $0x1e0] sm:$0xff]
    %v5526 = vld [vmem:[#allocation7 + $0x1e8] sm:$0xf]
    %v5527 = vld [vmem:[#allocation7 + $0x1ec] sm:$0xff]
    %v5528 = vld [vmem:[#allocation7 + $0x1f4] sm:$0xf]
    %v5529 = vld [vmem:[#allocation7 + $0x1f8] sm:$0xff]
    %v5530 = vld [vmem:[#allocation7 + $0x200] sm:$0xf]
    %v5531 = vld [vmem:[#allocation7 + $0x204] sm:$0xff]
    %v5532 = vld [vmem:[#allocation7 + $0x20c] sm:$0xf]
    %v5533 = vld [vmem:[#allocation7 + $0x210] sm:$0xff]
    %v5534 = vld [vmem:[#allocation7 + $0x218] sm:$0xf]
    %v5535 = vld [vmem:[#allocation7 + $0x21c] sm:$0xff]
    %v5536 = vld [vmem:[#allocation7 + $0x224] sm:$0xf]
    %v5537 = vld [vmem:[#allocation7 + $0x228] sm:$0xff]
    %v5538 = vld [vmem:[#allocation7 + $0x230] sm:$0xf]
    %v5539 = vld [vmem:[#allocation7 + $0x234] sm:$0xff]
    %v5540 = vld [vmem:[#allocation7 + $0x23c] sm:$0xf]
    %v5557 = vunpack.c.l.b16 %v5525
    %v5558 = vunpack.c.h.b16 %v5525
    %v5559 = vunpack.c.l.b16 %v5526
    %v5560 = vunpack.c.l.b16 %v5527
    %v5561 = vunpack.c.h.b16 %v5527
    %v5562 = vunpack.c.l.b16 %v5528
    %v5563 = vunpack.c.l.b16 %v5529
    %v5564 = vunpack.c.h.b16 %v5529
    %v5565 = vunpack.c.l.b16 %v5530
    %v5566 = vunpack.c.l.b16 %v5531
    %v5567 = vunpack.c.h.b16 %v5531
    %v5568 = vunpack.c.l.b16 %v5532
    %v5569 = vunpack.c.l.b16 %v5533
    %v5570 = vunpack.c.h.b16 %v5533
    %v5571 = vunpack.c.l.b16 %v5534
    %v5572 = vunpack.c.l.b16 %v5535
    %v5573 = vunpack.c.h.b16 %v5535
    %v5574 = vunpack.c.l.b16 %v5536
    %v5575 = vunpack.c.l.b16 %v5537
    %v5576 = vunpack.c.h.b16 %v5537
    %v5577 = vunpack.c.l.b16 %v5538
    %v5578 = vunpack.c.l.b16 %v5539
    %v5579 = vunpack.c.h.b16 %v5539
    %v5580 = vunpack.c.l.b16 %v5540
    %v5581 = vpack.c.b16 %v5560, %v5557
    %v5582 = vpack.c.b16 %v5561, %v5558
    %v5583 = vpack.c.b16 %v5562, %v5559
    %v5584 = vpack.c.b16 %v5566, %v5563
    %v5585 = vpack.c.b16 %v5567, %v5564
    %v5586 = vpack.c.b16 %v5568, %v5565
    %v5587 = vpack.c.b16 %v5572, %v5569
    %v5588 = vpack.c.b16 %v5573, %v5570
    %v5589 = vpack.c.b16 %v5574, %v5571
    %v5590 = vpack.c.b16 %v5578, %v5575
    %v5591 = vpack.c.b16 %v5579, %v5576
    %v5592 = vpack.c.b16 %v5580, %v5577
    %v5606 = vsel %vm2315, %v5523, 0
    %v5609 = vsel %vm2315, %v5524, 0
    %5611 = vmatpush.bf16.msra.mxu0 0
    %5612 = vmatpush.bf16.msra.mxu0 0
    %5613 = vmatpush.bf16.msra.mxu0 0
    %5614 = vmatpush.bf16.msra.mxu0 0
    %5615 = vmatpush.bf16.msra.mxu0 %v5590
    %5616 = vmatpush.bf16.msra.mxu0 %v5587
    %5617 = vmatpush.bf16.msra.mxu0 %v5584
    %5618 = vmatpush.bf16.msra.mxu0 %v5581
    %5619 = vmatmul.bf16.gmra.mxu0 %v5606
    %v5620 = vpop.f32.mrf.mxu0
    %v5621 = vadd.f32 0.0, %v5620
    %v5622 = vpop.f32.mrf.mxu0
    %v5623 = vadd.f32 0.0, %v5622
    %5624 = vmatmul.bf16.gmra.mxu0 %v5609
    %v5625 = vpop.f32.mrf.mxu0
    %v5626 = vadd.f32 0.0, %v5625
    %v5627 = vpop.f32.mrf.mxu0
    %v5628 = vadd.f32 0.0, %v5627
    %5629 = vdwg.mxu0
    %5630 = vmatpush.bf16.msra.mxu0 0
    %5631 = vmatpush.bf16.msra.mxu0 0
    %5632 = vmatpush.bf16.msra.mxu0 0
    %5633 = vmatpush.bf16.msra.mxu0 0
    %5634 = vmatpush.bf16.msra.mxu0 %v5591
    %5635 = vmatpush.bf16.msra.mxu0 %v5588
    %5636 = vmatpush.bf16.msra.mxu0 %v5585
    %5637 = vmatpush.bf16.msra.mxu0 %v5582
    %5638 = vmatmul.bf16.gmra.mxu0 %v5606
    %v5639 = vpop.f32.mrf.mxu0
    %v5640 = vadd.f32 0.0, %v5639
    %v5641 = vpop.f32.mrf.mxu0
    %v5642 = vadd.f32 0.0, %v5641
    %5643 = vmatmul.bf16.gmra.mxu0 %v5609
    %v5644 = vpop.f32.mrf.mxu0
    %v5645 = vadd.f32 0.0, %v5644
    %v5646 = vpop.f32.mrf.mxu0
    %v5647 = vadd.f32 0.0, %v5646
    %5648 = vdwg.mxu0
    %5649 = vmatpush.bf16.msra.mxu0 0
    %5650 = vmatpush.bf16.msra.mxu0 0
    %5651 = vmatpush.bf16.msra.mxu0 0
    %5652 = vmatpush.bf16.msra.mxu0 0
    %5653 = vmatpush.bf16.msra.mxu0 %v5592
    %5654 = vmatpush.bf16.msra.mxu0 %v5589
    %5655 = vmatpush.bf16.msra.mxu0 %v5586
    %5656 = vmatpush.bf16.msra.mxu0 %v5583
    %5657 = vmatmul.bf16.gmra.mxu0 %v5606
    %v5658 = vpop.f32.mrf.mxu0
    %v5659 = vadd.f32 0.0, %v5658
    %v5660 = vpop.f32.mrf.mxu0
    %v5661 = vadd.f32 0.0, %v5660
    %5662 = vmatmul.bf16.gmra.mxu0 %v5609
    %v5663 = vpop.f32.mrf.mxu0
    %v5664 = vadd.f32 0.0, %v5663
    %v5665 = vpop.f32.mrf.mxu0
    %v5666 = vadd.f32 0.0, %v5665
    %5667 = vdwg.mxu0
    %v5668 = vadd.f32 %v5391, %v5621
    %v5669 = vadd.f32 %v5392, %v5640
    %v5670 = vadd.f32 %v5393, %v5659
    %v5671 = vadd.f32 %v5394, %v5623
    %v5672 = vadd.f32 %v5395, %v5642
    %v5673 = vadd.f32 %v5396, %v5661
    %v5674 = vadd.f32 %v5397, %v5626
    %v5675 = vadd.f32 %v5398, %v5645
    %v5676 = vadd.f32 %v5399, %v5664
    %v5677 = vadd.f32 %v5400, %v5628
    %v5678 = vadd.f32 %v5401, %v5647
    %v5679 = vadd.f32 %v5402, %v5666
    %v5680 = vadd.f32 %v5668, %v3974
    %v5681 = vadd.f32 %v5669, %v3975
    %v5682 = vadd.f32 %v5670, %v3976
    %v5683 = vadd.f32 %v5671, %v3974
    %v5684 = vadd.f32 %v5672, %v3975
    %v5685 = vadd.f32 %v5673, %v3976
    %v5686 = vadd.f32 %v5674, %v3974
    %v5687 = vadd.f32 %v5675, %v3975
    %v5688 = vadd.f32 %v5676, %v3976
    %v5689 = vadd.f32 %v5677, %v3974
    %v5690 = vadd.f32 %v5678, %v3975
    %v5691 = vadd.f32 %v5679, %v3976
    %s5692 = scalar_lea.vmem [#allocation10], 96
    %5693 = vst [vmem:[%s5692] sm:$0xff] %v5680
    %5694 = vst [vmem:[%s5692 + $0x8] sm:$0xff] %v5681
    %5695 = vst [vmem:[%s5692 + $0x10] sm:$0xff] %v5682
    %5696 = vst [vmem:[%s5692 + $0x18] sm:$0xff] %v5683
    %5697 = vst [vmem:[%s5692 + $0x20] sm:$0xff] %v5684
    %5698 = vst [vmem:[%s5692 + $0x28] sm:$0xff] %v5685
    %5699 = vst [vmem:[%s5692 + $0x30] sm:$0xff] %v5686
    %5700 = vst [vmem:[%s5692 + $0x38] sm:$0xff] %v5687
    %5701 = vst [vmem:[%s5692 + $0x40] sm:$0xff] %v5688
    %5702 = vst [vmem:[%s5692 + $0x48] sm:$0xff] %v5689
    %5703 = vst [vmem:[%s5692 + $0x50] sm:$0xff] %v5690
    %5704 = vst [vmem:[%s5692 + $0x58] sm:$0xff] %v5691
    // Predicated region
    $region34: #{tpu_custom_call.1} parent=1 // pred_check
      _
    $region35: #{tpu_custom_call.1} parent=1 // pred_check_branch
      %5706 = sbr.rel (0) target = $region37
    $region36: #{tpu_custom_call.1} parent=1 // pred_region
      %5708 = vsyncadd [#allocation4], 0
      %s5709 = sshll.u32 [#allocation10], 4
      %s5710 = int_to_ptr.vmem [resolvable:$true] %s5709
      %s5711 = sshll.u32 %s4, 4
      %s5712 = int_to_ptr.hbm [resolvable:$true] %s5711
      %5717 = dma.vmem_to_hbm [thread:$0]  %s5710, 3072, %s5712, [#allocation4], 384, 384, 24
    $region37: #{tpu_custom_call.1} parent=1 // pred_fallthru
      _
    // Predicated region
    $region38: #{tpu_custom_call.1} parent=1 // pred_check
      _
    $region39: #{tpu_custom_call.1} parent=1 // pred_check_branch
      %5719 = sbr.rel (0) target = $region41
    $region40: #{tpu_custom_call.1} parent=1 // pred_region
      %5721 = dma.done [#allocation4], 3072
    $region41: #{tpu_custom_call.1} parent=1 // pred_fallthru
      _
    %5722 = vsyncpa [#allocation3], 1
    %5723 = vsyncpa [#allocation6], 1
    %5724 = vsyncpa [#allocation9], 1
    %5725 = vsyncpa [#allocation4], 1

</llo_original>
